<compile_context>
chip_gen: v7x
topology: tpu7x:2x2x1
jax: 0.10.0
libtpu: 0.0.40
codegen_flags: <defaults>
</compile_context>

<pallas_src>
import functools

import jax
import jax.numpy as jnp
from jax.experimental import pallas as pl
from jax.experimental.pallas import tpu as pltpu

# Fixed perception filters (divided by 8 like the classic NCA sobel kernels).
SOBEL_X = ((-1.0, 0.0, 1.0), (-2.0, 0.0, 2.0), (-1.0, 0.0, 1.0))
SOBEL_Y = ((-1.0, -2.0, -1.0), (0.0, 0.0, 0.0), (1.0, 2.0, 1.0))


def _ca_kernel(x_ref, w1_ref, w2_ref, gate_ref, out_ref, rhs_ref, *,
               n_steps, n_lanes, C, Wp):
    """One grid step = one block of folded batch elements.

    x_ref / gate_ref / out_ref : (1, C, NW)  strip-coordinate state / step gate.
    w1_ref : (Hd+1, 9C+1) folded perception+bias first-layer weight.
    w2_ref : (C, Hd+1)    second-layer weight with b2 in the last column.
    rhs_ref: (9C+1, NW)   VMEM scratch for the im2col RHS (ones row = bias).
    """
    K9 = 9 * C

    # Zero the scratch once per block: the per-tap edge columns (top/bottom halo
    # reads) and any never-written lanes must stay exactly 0 across all steps.
    rhs_ref[...] = jnp.zeros((K9 + 1, n_lanes), jnp.float32)
    # Constant "ones" contraction row -> b1 (and the b2 carrier row) fold into
    # the matmuls; written once, never touched by the per-step tap stores.
    rhs_ref[K9:K9 + 1, :] = jnp.ones((1, n_lanes), jnp.float32)

    w1 = w1_ref[...]          # (Hd+1, 9C+1), loaded once
    w2 = w2_ref[...]          # (C, Hd+1)
    gate = gate_ref[0]        # (C, NW): steps[b] on live lanes, -1 elsewhere
    state = x_ref[0]          # (C, NW): carried in registers across the loop

    # 3x3 tap offsets in strip coordinates (dy-major, matching w1 stacking).
    offs = [(dy - 1) * Wp + (dx - 1) for dy in range(3) for dx in range(3)]

    for i in range(1, n_steps):
        # Stage the im2col RHS: 9 lane-shifted copies of the state stacked on
        # sublanes.  Out-of-range lanes fall on the pre-zeroed edge columns,
        # which exactly represent the zero top/bottom halo rows.
        for t, o in enumerate(offs):
            r0 = t * C
            if o >= 0:
                rhs_ref[r0:r0 + C, 0:n_lanes - o] = state[:, o:n_lanes]
            else:
                rhs_ref[r0:r0 + C, -o:n_lanes] = state[:, 0:n_lanes + o]

        # Single K=9C+1 matmul (perception + first linear + b1), ReLU, then the
        # second linear with b2 folded in via the constant-one hidden row.
        hid = jnp.maximum(
            jnp.dot(w1, rhs_ref[...], preferred_element_type=jnp.float32), 0.0)
        upd = jnp.dot(w2, hid, preferred_element_type=jnp.float32)   # (C, NW)

        # torch loop gating: iteration 1 uses steps>0, later ones steps>=i-1.
        thresh = float(max(1, i - 1))
        state = state + jnp.where(gate >= thresh, upd, 0.0)

    # Single aligned, lane-dense store of the whole block.
    out_ref[0] = state


def cellular_automata_forward(state_nchw, steps, w1, b1, w2, b2, *,
                              n_steps, block_batch=None):
    """state_nchw: (B, C, H, W) f32; steps: (B,) int; w1: (4, C, Hd);
    b1: (1, Hd); w2: (Hd, C); b2: (1, C). Returns (B, C, H, W)."""
    B, C, H, W = state_nchw.shape
    Hd = w1.shape[-1]
    Wp = W + 2
    L = H * Wp                                  # strip length per batch element
    MAXOFF = Wp + 1                             # largest |tap offset|
    SEG = ((L + MAXOFF + 127) // 128) * 128     # per-batch lane segment (>=L+19)

    if block_batch is None:
        # Keep >=2 parallel grid blocks when B >= 2 (both v7x TCs busy) while
        # folding batches to amortize grid overhead on single-TC v5e/v6e.
        block_batch = max(1, (B + 1) // 2)
    Bt = block_batch
    G = (B + Bt - 1) // Bt                      # grid size
    BPAD = G * Bt
    NW = Bt * SEG                               # lane width per block (mult of 128)

    # ---- Fold perception + biases into two augmented weight matrices. ----
    taps = []
    for dy in range(3):
        for dx in range(3):
            wt = (SOBEL_X[dy][dx] / 8.0) * w1[2] + (SOBEL_Y[dy][dx] / 8.0) * w1[3]
            if dy == 1 and dx == 1:
                wt = wt + w1[0] + w1[1]          # state path + identity perception
            taps.append(wt.T)                    # (Hd, C)
    K9 = 9 * C
    w1_taps = jnp.concatenate(taps, axis=1)                          # (Hd, 9C)
    w1_top = jnp.concatenate([w1_taps, b1.reshape(Hd, 1)], axis=1)   # (Hd, 9C+1)
    ones_row = jnp.zeros((1, K9 + 1), jnp.float32).at[0, K9].set(1.0)
    w1_aug = jnp.concatenate([w1_top, ones_row], axis=0).astype(jnp.float32)
    w2_aug = jnp.concatenate([w2.T, b2.reshape(C, 1)], axis=1).astype(jnp.float32)

    # ---- Strip-coordinate state layout (lane-dense, zero gaps/halos). ----
    xs = jnp.pad(state_nchw.astype(jnp.float32),
                 ((0, 0), (0, 0), (0, 0), (0, 2)))           # (B, C, H, Wp)
    xs = xs.reshape(B, C, L)
    xs = jnp.pad(xs, ((0, BPAD - B), (0, 0), (0, SEG - L)))  # (BPAD, C, SEG)
    xfold = xs.reshape(G, Bt, C, SEG).transpose(0, 2, 1, 3).reshape(G, C, NW)

    # Gate: steps[b] on live interior lanes, -1 on halo/gap/padded-batch lanes
    # (those are therefore never updated and stay exactly zero).
    lane = jnp.arange(SEG, dtype=jnp.int32)
    live = (lane < L) & ((lane % Wp) < W)                    # (SEG,)
    steps_f = jnp.pad(steps.astype(jnp.float32), (0, BPAD - B),
                      constant_values=-1.0)
    gate = jnp.where(live[None, None, :], steps_f[:, None, None], -1.0)
    gate = jnp.broadcast_to(gate, (BPAD, C, SEG))
    gfold = gate.reshape(G, Bt, C, SEG).transpose(0, 2, 1, 3).reshape(G, C, NW)

    kernel = functools.partial(_ca_kernel, n_steps=n_steps, n_lanes=NW,
                               C=C, Wp=Wp)
    out = pl.pallas_call(
        kernel,
        out_shape=jax.ShapeDtypeStruct((G, C, NW), jnp.float32),
        grid=(G,),
        in_specs=[
            pl.BlockSpec((1, C, NW), lambda g: (g, 0, 0)),          # state block
            pl.BlockSpec((Hd + 1, K9 + 1), lambda g: (0, 0)),       # W1 (folded)
            pl.BlockSpec((C, Hd + 1), lambda g: (0, 0)),            # W2 (+ b2)
            pl.BlockSpec((1, C, NW), lambda g: (g, 0, 0)),          # step gate
        ],
        out_specs=pl.BlockSpec((1, C, NW), lambda g: (g, 0, 0)),
        scratch_shapes=[pltpu.VMEM((K9 + 1, NW), jnp.float32)],     # im2col RHS
        input_output_aliases={0: 0},                                # in-place state
        compiler_params=pltpu.CompilerParams(
            dimension_semantics=("parallel",)),
    )(xfold, w1_aug, w2_aug, gfold)

    # ---- Unfold back to (B, C, H, W). ----
    out = out.reshape(G, C, Bt, SEG).transpose(0, 2, 1, 3).reshape(BPAD, C, SEG)
    out = out[:B, :, :L].reshape(B, C, H, Wp)[:, :, :, :W]
    return out


def ca_reference(state_nchw, steps, params, n_steps):
    """Pure-JAX reference mirroring the torch module semantics."""
    w1, b1, w2, b2 = params
    B, C, H, W = state_nchw.shape
    state = jnp.transpose(state_nchw, (0, 2, 3, 1)).astype(jnp.float32)
    for i in range(1, n_steps):
        p = jnp.pad(state, ((0, 0), (1, 1), (1, 1), (0, 0)))
        sx = jnp.zeros_like(state)
        sy = jnp.zeros_like(state)
        for dy in range(3):
            for dx in range(3):
                sh = p[:, dy:dy + H, dx:dx + W, :]
                sx = sx + (SOBEL_X[dy][dx] / 8.0) * sh
                sy = sy + (SOBEL_Y[dy][dx] / 8.0) * sh
        pre = (jnp.einsum('bhwc,cd->bhwd', state, w1[0])
               + jnp.einsum('bhwc,cd->bhwd', state, w1[1])
               + jnp.einsum('bhwc,cd->bhwd', sx, w1[2])
               + jnp.einsum('bhwc,cd->bhwd', sy, w1[3]) + b1)
        hid = jnp.maximum(pre, 0.0)
        upd = jnp.einsum('bhwd,dc->bhwc', hid, w2) + b2
        if i == 1:
            not_done = steps > 0
        else:
            not_done = steps >= (i - 1)
        m = not_done[:, None, None, None].astype(jnp.float32)
        state = state + upd * m
    return jnp.transpose(state, (0, 3, 1, 2))


if __name__ == "__main__":
    B, C, H, W, Hd = 2, 4, 16, 16, 32
    max_steps, min_steps = 8, 2

    key = jax.random.PRNGKey(0)
    k_state, k_w1, k_b1, k_w2, k_b2, k_steps = jax.random.split(key, 6)
    state = jax.random.normal(k_state, (B, C, H, W), jnp.float32)
    w1 = 0.1 * jax.random.normal(k_w1, (4, C, Hd), jnp.float32)
    b1 = 0.1 * jax.random.normal(k_b1, (1, Hd), jnp.float32)
    w2 = 0.1 * jax.random.normal(k_w2, (Hd, C), jnp.float32)
    b2 = 0.1 * jax.random.normal(k_b2, (1, C), jnp.float32)
    # deterministic stand-in for torch.randint(min_steps, n_steps, (B,))
    steps = jax.random.randint(k_steps, (B,), min_steps, max_steps)

    fwd = jax.jit(functools.partial(cellular_automata_forward, n_steps=max_steps))
    out = jax.block_until_ready(fwd(state, steps, w1, b1, w2, b2))

    ref = ca_reference(state, steps, (w1, b1, w2, b2), max_steps)
    assert out.shape == state.shape
    assert bool(jnp.all(jnp.isfinite(out)))
    err = float(jnp.max(jnp.abs(out - ref)))
    assert err < 1e-2, f"mismatch vs reference: {err}"
    print("KERNEL_OK")
</pallas_src>

<mosaic_0001>
module attributes {stable_mosaic.version = 11 : i64} {
  func.func @_ca_kernel(%arg0: i32, %arg1: memref<1x4x384xf32, #tpu.memory_space<vmem>>, %arg2: memref<33x37xf32, #tpu.memory_space<vmem>>, %arg3: memref<4x33xf32, #tpu.memory_space<vmem>>, %arg4: memref<1x4x384xf32, #tpu.memory_space<vmem>>, %arg5: memref<1x4x384xf32, #tpu.memory_space<vmem>>, %arg6: memref<37x384xf32, #tpu.memory_space<vmem>>) attributes {dimension_semantics = [#tpu.dimension_semantics<parallel>], iteration_bounds = array<i64: 2>, scalar_prefetch = 0 : i64, scratch_operands = 1 : i64, tpu.core_type = #tpu.core_type<tc>, window_params = [{transform_indices = @transform_0, window_bounds = array<i64: 1, 4, 384>}, {pipeline_mode = #tpu.pipeline_mode<synchronous>, transform_indices = @transform_1, window_bounds = array<i64: 33, 37>}, {pipeline_mode = #tpu.pipeline_mode<synchronous>, transform_indices = @transform_2, window_bounds = array<i64: 4, 33>}, {transform_indices = @transform_3, window_bounds = array<i64: 1, 4, 384>}, {transform_indices = @transform_4, window_bounds = array<i64: 1, 4, 384>}]} {
    %cst = arith.constant 0.000000e+00 : f32
    %0 = vector.broadcast %cst : f32 to vector<37x384xf32>
    %c0 = arith.constant 0 : index
    %c0_0 = arith.constant 0 : index
    %1 = vector.load %arg6[%c0, %c0_0] : memref<37x384xf32, #tpu.memory_space<vmem>>, vector<37x384xf32>
    tpu.vector_store %arg6[%c0, %c0_0], %0 {strides = array<i32>} : memref<37x384xf32, #tpu.memory_space<vmem>>, vector<37x384xf32>,
    %cst_1 = arith.constant 1.000000e+00 : f32
    %2 = vector.broadcast %cst_1 : f32 to vector<1x384xf32>
    %c36 = arith.constant 36 : index
    %c0_2 = arith.constant 0 : index
    %3 = vector.load %arg6[%c36, %c0_2] : memref<37x384xf32, #tpu.memory_space<vmem>>, vector<1x384xf32>
    tpu.vector_store %arg6[%c36, %c0_2], %2 {strides = array<i32>} : memref<37x384xf32, #tpu.memory_space<vmem>>, vector<1x384xf32>,
    %c0_3 = arith.constant 0 : index
    %c0_4 = arith.constant 0 : index
    %4 = vector.load %arg2[%c0_3, %c0_4] : memref<33x37xf32, #tpu.memory_space<vmem>>, vector<33x37xf32>
    %c0_5 = arith.constant 0 : index
    %c0_6 = arith.constant 0 : index
    %5 = vector.load %arg3[%c0_5, %c0_6] : memref<4x33xf32, #tpu.memory_space<vmem>>, vector<4x33xf32>
    %c0_7 = arith.constant 0 : index
    %c0_8 = arith.constant 0 : index
    %c0_9 = arith.constant 0 : index
    %6 = vector.load %arg4[%c0_7, %c0_8, %c0_9] : memref<1x4x384xf32, #tpu.memory_space<vmem>>, vector<1x4x384xf32>
    %7 = vector.shape_cast %6 : vector<1x4x384xf32> to vector<4x384xf32>
    %c0_10 = arith.constant 0 : index
    %c0_11 = arith.constant 0 : index
    %c0_12 = arith.constant 0 : index
    %8 = vector.load %arg1[%c0_10, %c0_11, %c0_12] : memref<1x4x384xf32, #tpu.memory_space<vmem>>, vector<1x4x384xf32>
    %9 = vector.shape_cast %8 : vector<1x4x384xf32> to vector<4x384xf32>
    %10 = vector.extract_strided_slice %9 {offsets = [0, 0], sizes = [4, 365], strides = [1, 1]} : vector<4x384xf32> to vector<4x365xf32>
    %c0_13 = arith.constant 0 : index
    %c19 = arith.constant 19 : index
    %11 = vector.load %arg6[%c0_13, %c19] : memref<37x384xf32, #tpu.memory_space<vmem>>, vector<4x365xf32>
    tpu.vector_store %arg6[%c0_13, %c19], %10 {strides = array<i32>} : memref<37x384xf32, #tpu.memory_space<vmem>>, vector<4x365xf32>,
    %12 = vector.extract_strided_slice %9 {offsets = [0, 0], sizes = [4, 366], strides = [1, 1]} : vector<4x384xf32> to vector<4x366xf32>
    %c4 = arith.constant 4 : index
    %c18 = arith.constant 18 : index
    %13 = vector.load %arg6[%c4, %c18] : memref<37x384xf32, #tpu.memory_space<vmem>>, vector<4x366xf32>
    tpu.vector_store %arg6[%c4, %c18], %12 {strides = array<i32>} : memref<37x384xf32, #tpu.memory_space<vmem>>, vector<4x366xf32>,
    %14 = vector.extract_strided_slice %9 {offsets = [0, 0], sizes = [4, 367], strides = [1, 1]} : vector<4x384xf32> to vector<4x367xf32>
    %c8 = arith.constant 8 : index
    %c17 = arith.constant 17 : index
    %15 = vector.load %arg6[%c8, %c17] : memref<37x384xf32, #tpu.memory_space<vmem>>, vector<4x367xf32>
    tpu.vector_store %arg6[%c8, %c17], %14 {strides = array<i32>} : memref<37x384xf32, #tpu.memory_space<vmem>>, vector<4x367xf32>,
    %16 = vector.extract_strided_slice %9 {offsets = [0, 0], sizes = [4, 383], strides = [1, 1]} : vector<4x384xf32> to vector<4x383xf32>
    %c12 = arith.constant 12 : index
    %c1 = arith.constant 1 : index
    %17 = vector.load %arg6[%c12, %c1] : memref<37x384xf32, #tpu.memory_space<vmem>>, vector<4x383xf32>
    tpu.vector_store %arg6[%c12, %c1], %16 {strides = array<i32>} : memref<37x384xf32, #tpu.memory_space<vmem>>, vector<4x383xf32>,
    %c16 = arith.constant 16 : index
    %c0_14 = arith.constant 0 : index
    %18 = vector.load %arg6[%c16, %c0_14] : memref<37x384xf32, #tpu.memory_space<vmem>>, vector<4x384xf32>
    tpu.vector_store %arg6[%c16, %c0_14], %9 {strides = array<i32>} : memref<37x384xf32, #tpu.memory_space<vmem>>, vector<4x384xf32>,
    %19 = vector.extract_strided_slice %9 {offsets = [0, 1], sizes = [4, 383], strides = [1, 1]} : vector<4x384xf32> to vector<4x383xf32>
    %c20 = arith.constant 20 : index
    %c0_15 = arith.constant 0 : index
    %20 = vector.load %arg6[%c20, %c0_15] : memref<37x384xf32, #tpu.memory_space<vmem>>, vector<4x383xf32>
    tpu.vector_store %arg6[%c20, %c0_15], %19 {strides = array<i32>} : memref<37x384xf32, #tpu.memory_space<vmem>>, vector<4x383xf32>,
    %21 = vector.extract_strided_slice %9 {offsets = [0, 17], sizes = [4, 367], strides = [1, 1]} : vector<4x384xf32> to vector<4x367xf32>
    %c24 = arith.constant 24 : index
    %c0_16 = arith.constant 0 : index
    %22 = vector.load %arg6[%c24, %c0_16] : memref<37x384xf32, #tpu.memory_space<vmem>>, vector<4x367xf32>
    tpu.vector_store %arg6[%c24, %c0_16], %21 {strides = array<i32>} : memref<37x384xf32, #tpu.memory_space<vmem>>, vector<4x367xf32>,
    %23 = vector.extract_strided_slice %9 {offsets = [0, 18], sizes = [4, 366], strides = [1, 1]} : vector<4x384xf32> to vector<4x366xf32>
    %c28 = arith.constant 28 : index
    %c0_17 = arith.constant 0 : index
    %24 = vector.load %arg6[%c28, %c0_17] : memref<37x384xf32, #tpu.memory_space<vmem>>, vector<4x366xf32>
    tpu.vector_store %arg6[%c28, %c0_17], %23 {strides = array<i32>} : memref<37x384xf32, #tpu.memory_space<vmem>>, vector<4x366xf32>,
    %25 = vector.extract_strided_slice %9 {offsets = [0, 19], sizes = [4, 365], strides = [1, 1]} : vector<4x384xf32> to vector<4x365xf32>
    %c32 = arith.constant 32 : index
    %c0_18 = arith.constant 0 : index
    %26 = vector.load %arg6[%c32, %c0_18] : memref<37x384xf32, #tpu.memory_space<vmem>>, vector<4x365xf32>
    tpu.vector_store %arg6[%c32, %c0_18], %25 {strides = array<i32>} : memref<37x384xf32, #tpu.memory_space<vmem>>, vector<4x365xf32>,
    %c0_19 = arith.constant 0 : index
    %c0_20 = arith.constant 0 : index
    %27 = vector.load %arg6[%c0_19, %c0_20] : memref<37x384xf32, #tpu.memory_space<vmem>>, vector<37x384xf32>
    %cst_21 = arith.constant dense<0.000000e+00> : vector<33x384xf32>
    %28 = tpu.matmul %4, %27, %cst_21 {dimension_numbers = #tpu.dot_dimension_numbers<[1], [0], [0], [1], [0, 0, 1, 1], [], []>} : vector<33x37xf32>, vector<37x384xf32>, vector<33x384xf32> -> vector<33x384xf32>
    %cst_22 = arith.constant 0.000000e+00 : f32
    %29 = vector.broadcast %cst_22 : f32 to vector<33x384xf32>
    %30 = arith.maximumf %28, %29 : vector<33x384xf32>
    %cst_23 = arith.constant dense<0.000000e+00> : vector<4x384xf32>
    %31 = tpu.matmul %5, %30, %cst_23 {dimension_numbers = #tpu.dot_dimension_numbers<[1], [0], [0], [1], [0, 0, 1, 1], [], []>} : vector<4x33xf32>, vector<33x384xf32>, vector<4x384xf32> -> vector<4x384xf32>
    %cst_24 = arith.constant 1.000000e+00 : f32
    %32 = vector.broadcast %cst_24 : f32 to vector<4x384xf32>
    %33 = arith.cmpf oge, %7, %32 : vector<4x384xf32>
    %cst_25 = arith.constant 0.000000e+00 : f32
    %34 = vector.broadcast %cst_25 : f32 to vector<4x384xf32>
    %35 = arith.select %33, %31, %34 : vector<4x384xi1>, vector<4x384xf32>
    %36 = arith.addf %9, %35 : vector<4x384xf32>
    %37 = vector.extract_strided_slice %36 {offsets = [0, 0], sizes = [4, 365], strides = [1, 1]} : vector<4x384xf32> to vector<4x365xf32>
    %c0_26 = arith.constant 0 : index
    %c19_27 = arith.constant 19 : index
    %38 = vector.load %arg6[%c0_26, %c19_27] : memref<37x384xf32, #tpu.memory_space<vmem>>, vector<4x365xf32>
    tpu.vector_store %arg6[%c0_26, %c19_27], %37 {strides = array<i32>} : memref<37x384xf32, #tpu.memory_space<vmem>>, vector<4x365xf32>,
    %39 = vector.extract_strided_slice %36 {offsets = [0, 0], sizes = [4, 366], strides = [1, 1]} : vector<4x384xf32> to vector<4x366xf32>
    %c4_28 = arith.constant 4 : index
    %c18_29 = arith.constant 18 : index
    %40 = vector.load %arg6[%c4_28, %c18_29] : memref<37x384xf32, #tpu.memory_space<vmem>>, vector<4x366xf32>
    tpu.vector_store %arg6[%c4_28, %c18_29], %39 {strides = array<i32>} : memref<37x384xf32, #tpu.memory_space<vmem>>, vector<4x366xf32>,
    %41 = vector.extract_strided_slice %36 {offsets = [0, 0], sizes = [4, 367], strides = [1, 1]} : vector<4x384xf32> to vector<4x367xf32>
    %c8_30 = arith.constant 8 : index
    %c17_31 = arith.constant 17 : index
    %42 = vector.load %arg6[%c8_30, %c17_31] : memref<37x384xf32, #tpu.memory_space<vmem>>, vector<4x367xf32>
    tpu.vector_store %arg6[%c8_30, %c17_31], %41 {strides = array<i32>} : memref<37x384xf32, #tpu.memory_space<vmem>>, vector<4x367xf32>,
    %43 = vector.extract_strided_slice %36 {offsets = [0, 0], sizes = [4, 383], strides = [1, 1]} : vector<4x384xf32> to vector<4x383xf32>
    %c12_32 = arith.constant 12 : index
    %c1_33 = arith.constant 1 : index
    %44 = vector.load %arg6[%c12_32, %c1_33] : memref<37x384xf32, #tpu.memory_space<vmem>>, vector<4x383xf32>
    tpu.vector_store %arg6[%c12_32, %c1_33], %43 {strides = array<i32>} : memref<37x384xf32, #tpu.memory_space<vmem>>, vector<4x383xf32>,
    %c16_34 = arith.constant 16 : index
    %c0_35 = arith.constant 0 : index
    %45 = vector.load %arg6[%c16_34, %c0_35] : memref<37x384xf32, #tpu.memory_space<vmem>>, vector<4x384xf32>
    tpu.vector_store %arg6[%c16_34, %c0_35], %36 {strides = array<i32>} : memref<37x384xf32, #tpu.memory_space<vmem>>, vector<4x384xf32>,
    %46 = vector.extract_strided_slice %36 {offsets = [0, 1], sizes = [4, 383], strides = [1, 1]} : vector<4x384xf32> to vector<4x383xf32>
    %c20_36 = arith.constant 20 : index
    %c0_37 = arith.constant 0 : index
    %47 = vector.load %arg6[%c20_36, %c0_37] : memref<37x384xf32, #tpu.memory_space<vmem>>, vector<4x383xf32>
    tpu.vector_store %arg6[%c20_36, %c0_37], %46 {strides = array<i32>} : memref<37x384xf32, #tpu.memory_space<vmem>>, vector<4x383xf32>,
    %48 = vector.extract_strided_slice %36 {offsets = [0, 17], sizes = [4, 367], strides = [1, 1]} : vector<4x384xf32> to vector<4x367xf32>
    %c24_38 = arith.constant 24 : index
    %c0_39 = arith.constant 0 : index
    %49 = vector.load %arg6[%c24_38, %c0_39] : memref<37x384xf32, #tpu.memory_space<vmem>>, vector<4x367xf32>
    tpu.vector_store %arg6[%c24_38, %c0_39], %48 {strides = array<i32>} : memref<37x384xf32, #tpu.memory_space<vmem>>, vector<4x367xf32>,
    %50 = vector.extract_strided_slice %36 {offsets = [0, 18], sizes = [4, 366], strides = [1, 1]} : vector<4x384xf32> to vector<4x366xf32>
    %c28_40 = arith.constant 28 : index
    %c0_41 = arith.constant 0 : index
    %51 = vector.load %arg6[%c28_40, %c0_41] : memref<37x384xf32, #tpu.memory_space<vmem>>, vector<4x366xf32>
    tpu.vector_store %arg6[%c28_40, %c0_41], %50 {strides = array<i32>} : memref<37x384xf32, #tpu.memory_space<vmem>>, vector<4x366xf32>,
    %52 = vector.extract_strided_slice %36 {offsets = [0, 19], sizes = [4, 365], strides = [1, 1]} : vector<4x384xf32> to vector<4x365xf32>
    %c32_42 = arith.constant 32 : index
    %c0_43 = arith.constant 0 : index
    %53 = vector.load %arg6[%c32_42, %c0_43] : memref<37x384xf32, #tpu.memory_space<vmem>>, vector<4x365xf32>
    tpu.vector_store %arg6[%c32_42, %c0_43], %52 {strides = array<i32>} : memref<37x384xf32, #tpu.memory_space<vmem>>, vector<4x365xf32>,
    %c0_44 = arith.constant 0 : index
    %c0_45 = arith.constant 0 : index
    %54 = vector.load %arg6[%c0_44, %c0_45] : memref<37x384xf32, #tpu.memory_space<vmem>>, vector<37x384xf32>
    %cst_46 = arith.constant dense<0.000000e+00> : vector<33x384xf32>
    %55 = tpu.matmul %4, %54, %cst_46 {dimension_numbers = #tpu.dot_dimension_numbers<[1], [0], [0], [1], [0, 0, 1, 1], [], []>} : vector<33x37xf32>, vector<37x384xf32>, vector<33x384xf32> -> vector<33x384xf32>
    %cst_47 = arith.constant 0.000000e+00 : f32
    %56 = vector.broadcast %cst_47 : f32 to vector<33x384xf32>
    %57 = arith.maximumf %55, %56 : vector<33x384xf32>
    %cst_48 = arith.constant dense<0.000000e+00> : vector<4x384xf32>
    %58 = tpu.matmul %5, %57, %cst_48 {dimension_numbers = #tpu.dot_dimension_numbers<[1], [0], [0], [1], [0, 0, 1, 1], [], []>} : vector<4x33xf32>, vector<33x384xf32>, vector<4x384xf32> -> vector<4x384xf32>
    %cst_49 = arith.constant 1.000000e+00 : f32
    %59 = vector.broadcast %cst_49 : f32 to vector<4x384xf32>
    %60 = arith.cmpf oge, %7, %59 : vector<4x384xf32>
    %cst_50 = arith.constant 0.000000e+00 : f32
    %61 = vector.broadcast %cst_50 : f32 to vector<4x384xf32>
    %62 = arith.select %60, %58, %61 : vector<4x384xi1>, vector<4x384xf32>
    %63 = arith.addf %36, %62 : vector<4x384xf32>
    %64 = vector.extract_strided_slice %63 {offsets = [0, 0], sizes = [4, 365], strides = [1, 1]} : vector<4x384xf32> to vector<4x365xf32>
    %c0_51 = arith.constant 0 : index
    %c19_52 = arith.constant 19 : index
    %65 = vector.load %arg6[%c0_51, %c19_52] : memref<37x384xf32, #tpu.memory_space<vmem>>, vector<4x365xf32>
    tpu.vector_store %arg6[%c0_51, %c19_52], %64 {strides = array<i32>} : memref<37x384xf32, #tpu.memory_space<vmem>>, vector<4x365xf32>,
    %66 = vector.extract_strided_slice %63 {offsets = [0, 0], sizes = [4, 366], strides = [1, 1]} : vector<4x384xf32> to vector<4x366xf32>
    %c4_53 = arith.constant 4 : index
    %c18_54 = arith.constant 18 : index
    %67 = vector.load %arg6[%c4_53, %c18_54] : memref<37x384xf32, #tpu.memory_space<vmem>>, vector<4x366xf32>
    tpu.vector_store %arg6[%c4_53, %c18_54], %66 {strides = array<i32>} : memref<37x384xf32, #tpu.memory_space<vmem>>, vector<4x366xf32>,
    %68 = vector.extract_strided_slice %63 {offsets = [0, 0], sizes = [4, 367], strides = [1, 1]} : vector<4x384xf32> to vector<4x367xf32>
    %c8_55 = arith.constant 8 : index
    %c17_56 = arith.constant 17 : index
    %69 = vector.load %arg6[%c8_55, %c17_56] : memref<37x384xf32, #tpu.memory_space<vmem>>, vector<4x367xf32>
    tpu.vector_store %arg6[%c8_55, %c17_56], %68 {strides = array<i32>} : memref<37x384xf32, #tpu.memory_space<vmem>>, vector<4x367xf32>,
    %70 = vector.extract_strided_slice %63 {offsets = [0, 0], sizes = [4, 383], strides = [1, 1]} : vector<4x384xf32> to vector<4x383xf32>
    %c12_57 = arith.constant 12 : index
    %c1_58 = arith.constant 1 : index
    %71 = vector.load %arg6[%c12_57, %c1_58] : memref<37x384xf32, #tpu.memory_space<vmem>>, vector<4x383xf32>
    tpu.vector_store %arg6[%c12_57, %c1_58], %70 {strides = array<i32>} : memref<37x384xf32, #tpu.memory_space<vmem>>, vector<4x383xf32>,
    %c16_59 = arith.constant 16 : index
    %c0_60 = arith.constant 0 : index
    %72 = vector.load %arg6[%c16_59, %c0_60] : memref<37x384xf32, #tpu.memory_space<vmem>>, vector<4x384xf32>
    tpu.vector_store %arg6[%c16_59, %c0_60], %63 {strides = array<i32>} : memref<37x384xf32, #tpu.memory_space<vmem>>, vector<4x384xf32>,
    %73 = vector.extract_strided_slice %63 {offsets = [0, 1], sizes = [4, 383], strides = [1, 1]} : vector<4x384xf32> to vector<4x383xf32>
    %c20_61 = arith.constant 20 : index
    %c0_62 = arith.constant 0 : index
    %74 = vector.load %arg6[%c20_61, %c0_62] : memref<37x384xf32, #tpu.memory_space<vmem>>, vector<4x383xf32>
    tpu.vector_store %arg6[%c20_61, %c0_62], %73 {strides = array<i32>} : memref<37x384xf32, #tpu.memory_space<vmem>>, vector<4x383xf32>,
    %75 = vector.extract_strided_slice %63 {offsets = [0, 17], sizes = [4, 367], strides = [1, 1]} : vector<4x384xf32> to vector<4x367xf32>
    %c24_63 = arith.constant 24 : index
    %c0_64 = arith.constant 0 : index
    %76 = vector.load %arg6[%c24_63, %c0_64] : memref<37x384xf32, #tpu.memory_space<vmem>>, vector<4x367xf32>
    tpu.vector_store %arg6[%c24_63, %c0_64], %75 {strides = array<i32>} : memref<37x384xf32, #tpu.memory_space<vmem>>, vector<4x367xf32>,
    %77 = vector.extract_strided_slice %63 {offsets = [0, 18], sizes = [4, 366], strides = [1, 1]} : vector<4x384xf32> to vector<4x366xf32>
    %c28_65 = arith.constant 28 : index
    %c0_66 = arith.constant 0 : index
    %78 = vector.load %arg6[%c28_65, %c0_66] : memref<37x384xf32, #tpu.memory_space<vmem>>, vector<4x366xf32>
    tpu.vector_store %arg6[%c28_65, %c0_66], %77 {strides = array<i32>} : memref<37x384xf32, #tpu.memory_space<vmem>>, vector<4x366xf32>,
    %79 = vector.extract_strided_slice %63 {offsets = [0, 19], sizes = [4, 365], strides = [1, 1]} : vector<4x384xf32> to vector<4x365xf32>
    %c32_67 = arith.constant 32 : index
    %c0_68 = arith.constant 0 : index
    %80 = vector.load %arg6[%c32_67, %c0_68] : memref<37x384xf32, #tpu.memory_space<vmem>>, vector<4x365xf32>
    tpu.vector_store %arg6[%c32_67, %c0_68], %79 {strides = array<i32>} : memref<37x384xf32, #tpu.memory_space<vmem>>, vector<4x365xf32>,
    %c0_69 = arith.constant 0 : index
    %c0_70 = arith.constant 0 : index
    %81 = vector.load %arg6[%c0_69, %c0_70] : memref<37x384xf32, #tpu.memory_space<vmem>>, vector<37x384xf32>
    %cst_71 = arith.constant dense<0.000000e+00> : vector<33x384xf32>
    %82 = tpu.matmul %4, %81, %cst_71 {dimension_numbers = #tpu.dot_dimension_numbers<[1], [0], [0], [1], [0, 0, 1, 1], [], []>} : vector<33x37xf32>, vector<37x384xf32>, vector<33x384xf32> -> vector<33x384xf32>
    %cst_72 = arith.constant 0.000000e+00 : f32
    %83 = vector.broadcast %cst_72 : f32 to vector<33x384xf32>
    %84 = arith.maximumf %82, %83 : vector<33x384xf32>
    %cst_73 = arith.constant dense<0.000000e+00> : vector<4x384xf32>
    %85 = tpu.matmul %5, %84, %cst_73 {dimension_numbers = #tpu.dot_dimension_numbers<[1], [0], [0], [1], [0, 0, 1, 1], [], []>} : vector<4x33xf32>, vector<33x384xf32>, vector<4x384xf32> -> vector<4x384xf32>
    %cst_74 = arith.constant 2.000000e+00 : f32
    %86 = vector.broadcast %cst_74 : f32 to vector<4x384xf32>
    %87 = arith.cmpf oge, %7, %86 : vector<4x384xf32>
    %cst_75 = arith.constant 0.000000e+00 : f32
    %88 = vector.broadcast %cst_75 : f32 to vector<4x384xf32>
    %89 = arith.select %87, %85, %88 : vector<4x384xi1>, vector<4x384xf32>
    %90 = arith.addf %63, %89 : vector<4x384xf32>
    %91 = vector.extract_strided_slice %90 {offsets = [0, 0], sizes = [4, 365], strides = [1, 1]} : vector<4x384xf32> to vector<4x365xf32>
    %c0_76 = arith.constant 0 : index
    %c19_77 = arith.constant 19 : index
    %92 = vector.load %arg6[%c0_76, %c19_77] : memref<37x384xf32, #tpu.memory_space<vmem>>, vector<4x365xf32>
    tpu.vector_store %arg6[%c0_76, %c19_77], %91 {strides = array<i32>} : memref<37x384xf32, #tpu.memory_space<vmem>>, vector<4x365xf32>,
    %93 = vector.extract_strided_slice %90 {offsets = [0, 0], sizes = [4, 366], strides = [1, 1]} : vector<4x384xf32> to vector<4x366xf32>
    %c4_78 = arith.constant 4 : index
    %c18_79 = arith.constant 18 : index
    %94 = vector.load %arg6[%c4_78, %c18_79] : memref<37x384xf32, #tpu.memory_space<vmem>>, vector<4x366xf32>
    tpu.vector_store %arg6[%c4_78, %c18_79], %93 {strides = array<i32>} : memref<37x384xf32, #tpu.memory_space<vmem>>, vector<4x366xf32>,
    %95 = vector.extract_strided_slice %90 {offsets = [0, 0], sizes = [4, 367], strides = [1, 1]} : vector<4x384xf32> to vector<4x367xf32>
    %c8_80 = arith.constant 8 : index
    %c17_81 = arith.constant 17 : index
    %96 = vector.load %arg6[%c8_80, %c17_81] : memref<37x384xf32, #tpu.memory_space<vmem>>, vector<4x367xf32>
    tpu.vector_store %arg6[%c8_80, %c17_81], %95 {strides = array<i32>} : memref<37x384xf32, #tpu.memory_space<vmem>>, vector<4x367xf32>,
    %97 = vector.extract_strided_slice %90 {offsets = [0, 0], sizes = [4, 383], strides = [1, 1]} : vector<4x384xf32> to vector<4x383xf32>
    %c12_82 = arith.constant 12 : index
    %c1_83 = arith.constant 1 : index
    %98 = vector.load %arg6[%c12_82, %c1_83] : memref<37x384xf32, #tpu.memory_space<vmem>>, vector<4x383xf32>
    tpu.vector_store %arg6[%c12_82, %c1_83], %97 {strides = array<i32>} : memref<37x384xf32, #tpu.memory_space<vmem>>, vector<4x383xf32>,
    %c16_84 = arith.constant 16 : index
    %c0_85 = arith.constant 0 : index
    %99 = vector.load %arg6[%c16_84, %c0_85] : memref<37x384xf32, #tpu.memory_space<vmem>>, vector<4x384xf32>
    tpu.vector_store %arg6[%c16_84, %c0_85], %90 {strides = array<i32>} : memref<37x384xf32, #tpu.memory_space<vmem>>, vector<4x384xf32>,
    %100 = vector.extract_strided_slice %90 {offsets = [0, 1], sizes = [4, 383], strides = [1, 1]} : vector<4x384xf32> to vector<4x383xf32>
    %c20_86 = arith.constant 20 : index
    %c0_87 = arith.constant 0 : index
    %101 = vector.load %arg6[%c20_86, %c0_87] : memref<37x384xf32, #tpu.memory_space<vmem>>, vector<4x383xf32>
    tpu.vector_store %arg6[%c20_86, %c0_87], %100 {strides = array<i32>} : memref<37x384xf32, #tpu.memory_space<vmem>>, vector<4x383xf32>,
    %102 = vector.extract_strided_slice %90 {offsets = [0, 17], sizes = [4, 367], strides = [1, 1]} : vector<4x384xf32> to vector<4x367xf32>
    %c24_88 = arith.constant 24 : index
    %c0_89 = arith.constant 0 : index
    %103 = vector.load %arg6[%c24_88, %c0_89] : memref<37x384xf32, #tpu.memory_space<vmem>>, vector<4x367xf32>
    tpu.vector_store %arg6[%c24_88, %c0_89], %102 {strides = array<i32>} : memref<37x384xf32, #tpu.memory_space<vmem>>, vector<4x367xf32>,
    %104 = vector.extract_strided_slice %90 {offsets = [0, 18], sizes = [4, 366], strides = [1, 1]} : vector<4x384xf32> to vector<4x366xf32>
    %c28_90 = arith.constant 28 : index
    %c0_91 = arith.constant 0 : index
    %105 = vector.load %arg6[%c28_90, %c0_91] : memref<37x384xf32, #tpu.memory_space<vmem>>, vector<4x366xf32>
    tpu.vector_store %arg6[%c28_90, %c0_91], %104 {strides = array<i32>} : memref<37x384xf32, #tpu.memory_space<vmem>>, vector<4x366xf32>,
    %106 = vector.extract_strided_slice %90 {offsets = [0, 19], sizes = [4, 365], strides = [1, 1]} : vector<4x384xf32> to vector<4x365xf32>
    %c32_92 = arith.constant 32 : index
    %c0_93 = arith.constant 0 : index
    %107 = vector.load %arg6[%c32_92, %c0_93] : memref<37x384xf32, #tpu.memory_space<vmem>>, vector<4x365xf32>
    tpu.vector_store %arg6[%c32_92, %c0_93], %106 {strides = array<i32>} : memref<37x384xf32, #tpu.memory_space<vmem>>, vector<4x365xf32>,
    %c0_94 = arith.constant 0 : index
    %c0_95 = arith.constant 0 : index
    %108 = vector.load %arg6[%c0_94, %c0_95] : memref<37x384xf32, #tpu.memory_space<vmem>>, vector<37x384xf32>
    %cst_96 = arith.constant dense<0.000000e+00> : vector<33x384xf32>
    %109 = tpu.matmul %4, %108, %cst_96 {dimension_numbers = #tpu.dot_dimension_numbers<[1], [0], [0], [1], [0, 0, 1, 1], [], []>} : vector<33x37xf32>, vector<37x384xf32>, vector<33x384xf32> -> vector<33x384xf32>
    %cst_97 = arith.constant 0.000000e+00 : f32
    %110 = vector.broadcast %cst_97 : f32 to vector<33x384xf32>
    %111 = arith.maximumf %109, %110 : vector<33x384xf32>
    %cst_98 = arith.constant dense<0.000000e+00> : vector<4x384xf32>
    %112 = tpu.matmul %5, %111, %cst_98 {dimension_numbers = #tpu.dot_dimension_numbers<[1], [0], [0], [1], [0, 0, 1, 1], [], []>} : vector<4x33xf32>, vector<33x384xf32>, vector<4x384xf32> -> vector<4x384xf32>
    %cst_99 = arith.constant 3.000000e+00 : f32
    %113 = vector.broadcast %cst_99 : f32 to vector<4x384xf32>
    %114 = arith.cmpf oge, %7, %113 : vector<4x384xf32>
    %cst_100 = arith.constant 0.000000e+00 : f32
    %115 = vector.broadcast %cst_100 : f32 to vector<4x384xf32>
    %116 = arith.select %114, %112, %115 : vector<4x384xi1>, vector<4x384xf32>
    %117 = arith.addf %90, %116 : vector<4x384xf32>
    %118 = vector.extract_strided_slice %117 {offsets = [0, 0], sizes = [4, 365], strides = [1, 1]} : vector<4x384xf32> to vector<4x365xf32>
    %c0_101 = arith.constant 0 : index
    %c19_102 = arith.constant 19 : index
    %119 = vector.load %arg6[%c0_101, %c19_102] : memref<37x384xf32, #tpu.memory_space<vmem>>, vector<4x365xf32>
    tpu.vector_store %arg6[%c0_101, %c19_102], %118 {strides = array<i32>} : memref<37x384xf32, #tpu.memory_space<vmem>>, vector<4x365xf32>,
    %120 = vector.extract_strided_slice %117 {offsets = [0, 0], sizes = [4, 366], strides = [1, 1]} : vector<4x384xf32> to vector<4x366xf32>
    %c4_103 = arith.constant 4 : index
    %c18_104 = arith.constant 18 : index
    %121 = vector.load %arg6[%c4_103, %c18_104] : memref<37x384xf32, #tpu.memory_space<vmem>>, vector<4x366xf32>
    tpu.vector_store %arg6[%c4_103, %c18_104], %120 {strides = array<i32>} : memref<37x384xf32, #tpu.memory_space<vmem>>, vector<4x366xf32>,
    %122 = vector.extract_strided_slice %117 {offsets = [0, 0], sizes = [4, 367], strides = [1, 1]} : vector<4x384xf32> to vector<4x367xf32>
    %c8_105 = arith.constant 8 : index
    %c17_106 = arith.constant 17 : index
    %123 = vector.load %arg6[%c8_105, %c17_106] : memref<37x384xf32, #tpu.memory_space<vmem>>, vector<4x367xf32>
    tpu.vector_store %arg6[%c8_105, %c17_106], %122 {strides = array<i32>} : memref<37x384xf32, #tpu.memory_space<vmem>>, vector<4x367xf32>,
    %124 = vector.extract_strided_slice %117 {offsets = [0, 0], sizes = [4, 383], strides = [1, 1]} : vector<4x384xf32> to vector<4x383xf32>
    %c12_107 = arith.constant 12 : index
    %c1_108 = arith.constant 1 : index
    %125 = vector.load %arg6[%c12_107, %c1_108] : memref<37x384xf32, #tpu.memory_space<vmem>>, vector<4x383xf32>
    tpu.vector_store %arg6[%c12_107, %c1_108], %124 {strides = array<i32>} : memref<37x384xf32, #tpu.memory_space<vmem>>, vector<4x383xf32>,
    %c16_109 = arith.constant 16 : index
    %c0_110 = arith.constant 0 : index
    %126 = vector.load %arg6[%c16_109, %c0_110] : memref<37x384xf32, #tpu.memory_space<vmem>>, vector<4x384xf32>
    tpu.vector_store %arg6[%c16_109, %c0_110], %117 {strides = array<i32>} : memref<37x384xf32, #tpu.memory_space<vmem>>, vector<4x384xf32>,
    %127 = vector.extract_strided_slice %117 {offsets = [0, 1], sizes = [4, 383], strides = [1, 1]} : vector<4x384xf32> to vector<4x383xf32>
    %c20_111 = arith.constant 20 : index
    %c0_112 = arith.constant 0 : index
    %128 = vector.load %arg6[%c20_111, %c0_112] : memref<37x384xf32, #tpu.memory_space<vmem>>, vector<4x383xf32>
    tpu.vector_store %arg6[%c20_111, %c0_112], %127 {strides = array<i32>} : memref<37x384xf32, #tpu.memory_space<vmem>>, vector<4x383xf32>,
    %129 = vector.extract_strided_slice %117 {offsets = [0, 17], sizes = [4, 367], strides = [1, 1]} : vector<4x384xf32> to vector<4x367xf32>
    %c24_113 = arith.constant 24 : index
    %c0_114 = arith.constant 0 : index
    %130 = vector.load %arg6[%c24_113, %c0_114] : memref<37x384xf32, #tpu.memory_space<vmem>>, vector<4x367xf32>
    tpu.vector_store %arg6[%c24_113, %c0_114], %129 {strides = array<i32>} : memref<37x384xf32, #tpu.memory_space<vmem>>, vector<4x367xf32>,
    %131 = vector.extract_strided_slice %117 {offsets = [0, 18], sizes = [4, 366], strides = [1, 1]} : vector<4x384xf32> to vector<4x366xf32>
    %c28_115 = arith.constant 28 : index
    %c0_116 = arith.constant 0 : index
    %132 = vector.load %arg6[%c28_115, %c0_116] : memref<37x384xf32, #tpu.memory_space<vmem>>, vector<4x366xf32>
    tpu.vector_store %arg6[%c28_115, %c0_116], %131 {strides = array<i32>} : memref<37x384xf32, #tpu.memory_space<vmem>>, vector<4x366xf32>,
    %133 = vector.extract_strided_slice %117 {offsets = [0, 19], sizes = [4, 365], strides = [1, 1]} : vector<4x384xf32> to vector<4x365xf32>
    %c32_117 = arith.constant 32 : index
    %c0_118 = arith.constant 0 : index
    %134 = vector.load %arg6[%c32_117, %c0_118] : memref<37x384xf32, #tpu.memory_space<vmem>>, vector<4x365xf32>
    tpu.vector_store %arg6[%c32_117, %c0_118], %133 {strides = array<i32>} : memref<37x384xf32, #tpu.memory_space<vmem>>, vector<4x365xf32>,
    %c0_119 = arith.constant 0 : index
    %c0_120 = arith.constant 0 : index
    %135 = vector.load %arg6[%c0_119, %c0_120] : memref<37x384xf32, #tpu.memory_space<vmem>>, vector<37x384xf32>
    %cst_121 = arith.constant dense<0.000000e+00> : vector<33x384xf32>
    %136 = tpu.matmul %4, %135, %cst_121 {dimension_numbers = #tpu.dot_dimension_numbers<[1], [0], [0], [1], [0, 0, 1, 1], [], []>} : vector<33x37xf32>, vector<37x384xf32>, vector<33x384xf32> -> vector<33x384xf32>
    %cst_122 = arith.constant 0.000000e+00 : f32
    %137 = vector.broadcast %cst_122 : f32 to vector<33x384xf32>
    %138 = arith.maximumf %136, %137 : vector<33x384xf32>
    %cst_123 = arith.constant dense<0.000000e+00> : vector<4x384xf32>
    %139 = tpu.matmul %5, %138, %cst_123 {dimension_numbers = #tpu.dot_dimension_numbers<[1], [0], [0], [1], [0, 0, 1, 1], [], []>} : vector<4x33xf32>, vector<33x384xf32>, vector<4x384xf32> -> vector<4x384xf32>
    %cst_124 = arith.constant 4.000000e+00 : f32
    %140 = vector.broadcast %cst_124 : f32 to vector<4x384xf32>
    %141 = arith.cmpf oge, %7, %140 : vector<4x384xf32>
    %cst_125 = arith.constant 0.000000e+00 : f32
    %142 = vector.broadcast %cst_125 : f32 to vector<4x384xf32>
    %143 = arith.select %141, %139, %142 : vector<4x384xi1>, vector<4x384xf32>
    %144 = arith.addf %117, %143 : vector<4x384xf32>
    %145 = vector.extract_strided_slice %144 {offsets = [0, 0], sizes = [4, 365], strides = [1, 1]} : vector<4x384xf32> to vector<4x365xf32>
    %c0_126 = arith.constant 0 : index
    %c19_127 = arith.constant 19 : index
    %146 = vector.load %arg6[%c0_126, %c19_127] : memref<37x384xf32, #tpu.memory_space<vmem>>, vector<4x365xf32>
    tpu.vector_store %arg6[%c0_126, %c19_127], %145 {strides = array<i32>} : memref<37x384xf32, #tpu.memory_space<vmem>>, vector<4x365xf32>,
    %147 = vector.extract_strided_slice %144 {offsets = [0, 0], sizes = [4, 366], strides = [1, 1]} : vector<4x384xf32> to vector<4x366xf32>
    %c4_128 = arith.constant 4 : index
    %c18_129 = arith.constant 18 : index
    %148 = vector.load %arg6[%c4_128, %c18_129] : memref<37x384xf32, #tpu.memory_space<vmem>>, vector<4x366xf32>
    tpu.vector_store %arg6[%c4_128, %c18_129], %147 {strides = array<i32>} : memref<37x384xf32, #tpu.memory_space<vmem>>, vector<4x366xf32>,
    %149 = vector.extract_strided_slice %144 {offsets = [0, 0], sizes = [4, 367], strides = [1, 1]} : vector<4x384xf32> to vector<4x367xf32>
    %c8_130 = arith.constant 8 : index
    %c17_131 = arith.constant 17 : index
    %150 = vector.load %arg6[%c8_130, %c17_131] : memref<37x384xf32, #tpu.memory_space<vmem>>, vector<4x367xf32>
    tpu.vector_store %arg6[%c8_130, %c17_131], %149 {strides = array<i32>} : memref<37x384xf32, #tpu.memory_space<vmem>>, vector<4x367xf32>,
    %151 = vector.extract_strided_slice %144 {offsets = [0, 0], sizes = [4, 383], strides = [1, 1]} : vector<4x384xf32> to vector<4x383xf32>
    %c12_132 = arith.constant 12 : index
    %c1_133 = arith.constant 1 : index
    %152 = vector.load %arg6[%c12_132, %c1_133] : memref<37x384xf32, #tpu.memory_space<vmem>>, vector<4x383xf32>
    tpu.vector_store %arg6[%c12_132, %c1_133], %151 {strides = array<i32>} : memref<37x384xf32, #tpu.memory_space<vmem>>, vector<4x383xf32>,
    %c16_134 = arith.constant 16 : index
    %c0_135 = arith.constant 0 : index
    %153 = vector.load %arg6[%c16_134, %c0_135] : memref<37x384xf32, #tpu.memory_space<vmem>>, vector<4x384xf32>
    tpu.vector_store %arg6[%c16_134, %c0_135], %144 {strides = array<i32>} : memref<37x384xf32, #tpu.memory_space<vmem>>, vector<4x384xf32>,
    %154 = vector.extract_strided_slice %144 {offsets = [0, 1], sizes = [4, 383], strides = [1, 1]} : vector<4x384xf32> to vector<4x383xf32>
    %c20_136 = arith.constant 20 : index
    %c0_137 = arith.constant 0 : index
    %155 = vector.load %arg6[%c20_136, %c0_137] : memref<37x384xf32, #tpu.memory_space<vmem>>, vector<4x383xf32>
    tpu.vector_store %arg6[%c20_136, %c0_137], %154 {strides = array<i32>} : memref<37x384xf32, #tpu.memory_space<vmem>>, vector<4x383xf32>,
    %156 = vector.extract_strided_slice %144 {offsets = [0, 17], sizes = [4, 367], strides = [1, 1]} : vector<4x384xf32> to vector<4x367xf32>
    %c24_138 = arith.constant 24 : index
    %c0_139 = arith.constant 0 : index
    %157 = vector.load %arg6[%c24_138, %c0_139] : memref<37x384xf32, #tpu.memory_space<vmem>>, vector<4x367xf32>
    tpu.vector_store %arg6[%c24_138, %c0_139], %156 {strides = array<i32>} : memref<37x384xf32, #tpu.memory_space<vmem>>, vector<4x367xf32>,
    %158 = vector.extract_strided_slice %144 {offsets = [0, 18], sizes = [4, 366], strides = [1, 1]} : vector<4x384xf32> to vector<4x366xf32>
    %c28_140 = arith.constant 28 : index
    %c0_141 = arith.constant 0 : index
    %159 = vector.load %arg6[%c28_140, %c0_141] : memref<37x384xf32, #tpu.memory_space<vmem>>, vector<4x366xf32>
    tpu.vector_store %arg6[%c28_140, %c0_141], %158 {strides = array<i32>} : memref<37x384xf32, #tpu.memory_space<vmem>>, vector<4x366xf32>,
    %160 = vector.extract_strided_slice %144 {offsets = [0, 19], sizes = [4, 365], strides = [1, 1]} : vector<4x384xf32> to vector<4x365xf32>
    %c32_142 = arith.constant 32 : index
    %c0_143 = arith.constant 0 : index
    %161 = vector.load %arg6[%c32_142, %c0_143] : memref<37x384xf32, #tpu.memory_space<vmem>>, vector<4x365xf32>
    tpu.vector_store %arg6[%c32_142, %c0_143], %160 {strides = array<i32>} : memref<37x384xf32, #tpu.memory_space<vmem>>, vector<4x365xf32>,
    %c0_144 = arith.constant 0 : index
    %c0_145 = arith.constant 0 : index
    %162 = vector.load %arg6[%c0_144, %c0_145] : memref<37x384xf32, #tpu.memory_space<vmem>>, vector<37x384xf32>
    %cst_146 = arith.constant dense<0.000000e+00> : vector<33x384xf32>
    %163 = tpu.matmul %4, %162, %cst_146 {dimension_numbers = #tpu.dot_dimension_numbers<[1], [0], [0], [1], [0, 0, 1, 1], [], []>} : vector<33x37xf32>, vector<37x384xf32>, vector<33x384xf32> -> vector<33x384xf32>
    %cst_147 = arith.constant 0.000000e+00 : f32
    %164 = vector.broadcast %cst_147 : f32 to vector<33x384xf32>
    %165 = arith.maximumf %163, %164 : vector<33x384xf32>
    %cst_148 = arith.constant dense<0.000000e+00> : vector<4x384xf32>
    %166 = tpu.matmul %5, %165, %cst_148 {dimension_numbers = #tpu.dot_dimension_numbers<[1], [0], [0], [1], [0, 0, 1, 1], [], []>} : vector<4x33xf32>, vector<33x384xf32>, vector<4x384xf32> -> vector<4x384xf32>
    %cst_149 = arith.constant 5.000000e+00 : f32
    %167 = vector.broadcast %cst_149 : f32 to vector<4x384xf32>
    %168 = arith.cmpf oge, %7, %167 : vector<4x384xf32>
    %cst_150 = arith.constant 0.000000e+00 : f32
    %169 = vector.broadcast %cst_150 : f32 to vector<4x384xf32>
    %170 = arith.select %168, %166, %169 : vector<4x384xi1>, vector<4x384xf32>
    %171 = arith.addf %144, %170 : vector<4x384xf32>
    %172 = vector.extract_strided_slice %171 {offsets = [0, 0], sizes = [4, 365], strides = [1, 1]} : vector<4x384xf32> to vector<4x365xf32>
    %c0_151 = arith.constant 0 : index
    %c19_152 = arith.constant 19 : index
    %173 = vector.load %arg6[%c0_151, %c19_152] : memref<37x384xf32, #tpu.memory_space<vmem>>, vector<4x365xf32>
    tpu.vector_store %arg6[%c0_151, %c19_152], %172 {strides = array<i32>} : memref<37x384xf32, #tpu.memory_space<vmem>>, vector<4x365xf32>,
    %174 = vector.extract_strided_slice %171 {offsets = [0, 0], sizes = [4, 366], strides = [1, 1]} : vector<4x384xf32> to vector<4x366xf32>
    %c4_153 = arith.constant 4 : index
    %c18_154 = arith.constant 18 : index
    %175 = vector.load %arg6[%c4_153, %c18_154] : memref<37x384xf32, #tpu.memory_space<vmem>>, vector<4x366xf32>
    tpu.vector_store %arg6[%c4_153, %c18_154], %174 {strides = array<i32>} : memref<37x384xf32, #tpu.memory_space<vmem>>, vector<4x366xf32>,
    %176 = vector.extract_strided_slice %171 {offsets = [0, 0], sizes = [4, 367], strides = [1, 1]} : vector<4x384xf32> to vector<4x367xf32>
    %c8_155 = arith.constant 8 : index
    %c17_156 = arith.constant 17 : index
    %177 = vector.load %arg6[%c8_155, %c17_156] : memref<37x384xf32, #tpu.memory_space<vmem>>, vector<4x367xf32>
    tpu.vector_store %arg6[%c8_155, %c17_156], %176 {strides = array<i32>} : memref<37x384xf32, #tpu.memory_space<vmem>>, vector<4x367xf32>,
    %178 = vector.extract_strided_slice %171 {offsets = [0, 0], sizes = [4, 383], strides = [1, 1]} : vector<4x384xf32> to vector<4x383xf32>
    %c12_157 = arith.constant 12 : index
    %c1_158 = arith.constant 1 : index
    %179 = vector.load %arg6[%c12_157, %c1_158] : memref<37x384xf32, #tpu.memory_space<vmem>>, vector<4x383xf32>
    tpu.vector_store %arg6[%c12_157, %c1_158], %178 {strides = array<i32>} : memref<37x384xf32, #tpu.memory_space<vmem>>, vector<4x383xf32>,
    %c16_159 = arith.constant 16 : index
    %c0_160 = arith.constant 0 : index
    %180 = vector.load %arg6[%c16_159, %c0_160] : memref<37x384xf32, #tpu.memory_space<vmem>>, vector<4x384xf32>
    tpu.vector_store %arg6[%c16_159, %c0_160], %171 {strides = array<i32>} : memref<37x384xf32, #tpu.memory_space<vmem>>, vector<4x384xf32>,
    %181 = vector.extract_strided_slice %171 {offsets = [0, 1], sizes = [4, 383], strides = [1, 1]} : vector<4x384xf32> to vector<4x383xf32>
    %c20_161 = arith.constant 20 : index
    %c0_162 = arith.constant 0 : index
    %182 = vector.load %arg6[%c20_161, %c0_162] : memref<37x384xf32, #tpu.memory_space<vmem>>, vector<4x383xf32>
    tpu.vector_store %arg6[%c20_161, %c0_162], %181 {strides = array<i32>} : memref<37x384xf32, #tpu.memory_space<vmem>>, vector<4x383xf32>,
    %183 = vector.extract_strided_slice %171 {offsets = [0, 17], sizes = [4, 367], strides = [1, 1]} : vector<4x384xf32> to vector<4x367xf32>
    %c24_163 = arith.constant 24 : index
    %c0_164 = arith.constant 0 : index
    %184 = vector.load %arg6[%c24_163, %c0_164] : memref<37x384xf32, #tpu.memory_space<vmem>>, vector<4x367xf32>
    tpu.vector_store %arg6[%c24_163, %c0_164], %183 {strides = array<i32>} : memref<37x384xf32, #tpu.memory_space<vmem>>, vector<4x367xf32>,
    %185 = vector.extract_strided_slice %171 {offsets = [0, 18], sizes = [4, 366], strides = [1, 1]} : vector<4x384xf32> to vector<4x366xf32>
    %c28_165 = arith.constant 28 : index
    %c0_166 = arith.constant 0 : index
    %186 = vector.load %arg6[%c28_165, %c0_166] : memref<37x384xf32, #tpu.memory_space<vmem>>, vector<4x366xf32>
    tpu.vector_store %arg6[%c28_165, %c0_166], %185 {strides = array<i32>} : memref<37x384xf32, #tpu.memory_space<vmem>>, vector<4x366xf32>,
    %187 = vector.extract_strided_slice %171 {offsets = [0, 19], sizes = [4, 365], strides = [1, 1]} : vector<4x384xf32> to vector<4x365xf32>
    %c32_167 = arith.constant 32 : index
    %c0_168 = arith.constant 0 : index
    %188 = vector.load %arg6[%c32_167, %c0_168] : memref<37x384xf32, #tpu.memory_space<vmem>>, vector<4x365xf32>
    tpu.vector_store %arg6[%c32_167, %c0_168], %187 {strides = array<i32>} : memref<37x384xf32, #tpu.memory_space<vmem>>, vector<4x365xf32>,
    %c0_169 = arith.constant 0 : index
    %c0_170 = arith.constant 0 : index
    %189 = vector.load %arg6[%c0_169, %c0_170] : memref<37x384xf32, #tpu.memory_space<vmem>>, vector<37x384xf32>
    %cst_171 = arith.constant dense<0.000000e+00> : vector<33x384xf32>
    %190 = tpu.matmul %4, %189, %cst_171 {dimension_numbers = #tpu.dot_dimension_numbers<[1], [0], [0], [1], [0, 0, 1, 1], [], []>} : vector<33x37xf32>, vector<37x384xf32>, vector<33x384xf32> -> vector<33x384xf32>
    %cst_172 = arith.constant 0.000000e+00 : f32
    %191 = vector.broadcast %cst_172 : f32 to vector<33x384xf32>
    %192 = arith.maximumf %190, %191 : vector<33x384xf32>
    %cst_173 = arith.constant dense<0.000000e+00> : vector<4x384xf32>
    %193 = tpu.matmul %5, %192, %cst_173 {dimension_numbers = #tpu.dot_dimension_numbers<[1], [0], [0], [1], [0, 0, 1, 1], [], []>} : vector<4x33xf32>, vector<33x384xf32>, vector<4x384xf32> -> vector<4x384xf32>
    %cst_174 = arith.constant 6.000000e+00 : f32
    %194 = vector.broadcast %cst_174 : f32 to vector<4x384xf32>
    %195 = arith.cmpf oge, %7, %194 : vector<4x384xf32>
    %cst_175 = arith.constant 0.000000e+00 : f32
    %196 = vector.broadcast %cst_175 : f32 to vector<4x384xf32>
    %197 = arith.select %195, %193, %196 : vector<4x384xi1>, vector<4x384xf32>
    %198 = arith.addf %171, %197 : vector<4x384xf32>
    %c0_176 = arith.constant 0 : index
    %c0_177 = arith.constant 0 : index
    %c0_178 = arith.constant 0 : index
    %199 = vector.load %arg5[%c0_176, %c0_177, %c0_178] : memref<1x4x384xf32, #tpu.memory_space<vmem>>, vector<1x4x384xf32>
    %200 = vector.shape_cast %199 : vector<1x4x384xf32> to vector<4x384xf32>
    %201 = vector.shape_cast %198 : vector<4x384xf32> to vector<1x4x384xf32>
    tpu.vector_store %arg5[%c0_176, %c0_177, %c0_178], %201 {strides = array<i32>} : memref<1x4x384xf32, #tpu.memory_space<vmem>>, vector<1x4x384xf32>,
    return
  }
  func.func @transform_0(%arg0: i32) -> (i32, i32, i32) {
    %c0_i32 = arith.constant 0 : i32
    %c0_i32_0 = arith.constant 0 : i32
    %c0_i32_1 = arith.constant 0 : i32
    return %arg0, %c0_i32, %c0_i32_0 : i32, i32, i32
  }
  func.func @transform_1(%arg0: i32) -> (i32, i32) {
    %c0_i32 = arith.constant 0 : i32
    %c0_i32_0 = arith.constant 0 : i32
    %c0_i32_1 = arith.constant 0 : i32
    return %c0_i32, %c0_i32_0 : i32, i32
  }
  func.func @transform_2(%arg0: i32) -> (i32, i32) {
    %c0_i32 = arith.constant 0 : i32
    %c0_i32_0 = arith.constant 0 : i32
    %c0_i32_1 = arith.constant 0 : i32
    return %c0_i32, %c0_i32_0 : i32, i32
  }
  func.func @transform_3(%arg0: i32) -> (i32, i32, i32) {
    %c0_i32 = arith.constant 0 : i32
    %c0_i32_0 = arith.constant 0 : i32
    %c0_i32_1 = arith.constant 0 : i32
    return %arg0, %c0_i32, %c0_i32_0 : i32, i32, i32
  }
  func.func @transform_4(%arg0: i32) -> (i32, i32, i32) {
    %c0_i32 = arith.constant 0 : i32
    %c0_i32_0 = arith.constant 0 : i32
    %c0_i32_1 = arith.constant 0 : i32
    return %arg0, %c0_i32, %c0_i32_0 : i32, i32, i32
  }
}

</mosaic_0001>

<llo_original>
// kernel: cellular_automata_forward.1
$region0: #{cellular_automata_forward.1}
  #allocation0 [shape = 'u32[]', space=smem, size = 0x4, offset = 0x4, fixed_abs, tag = 'smem constant byte address 0x4 - core index']
  #allocation1 [shape = 'u32[144,128]{1,0:T(1,128)}', space=vmem, size = 0x12000, scoped, tag = 'internal scratch']
  #allocation2 [shape = 'f32[37,384]{1,0:T(8,128)}', space=vmem, size = 0xf000, scoped, tag = 'scratch operand']
  %s0 = inlined_call_operand.vmem [shape: f32[2,4,384], index: 0, kind: input, shape index: {}, may-alias: {0,4}]
  %s1 = inlined_call_operand.vmem [shape: f32[33,37], index: 1, kind: input, shape index: {}]
  %s2 = inlined_call_operand.vmem [shape: f32[4,33], index: 2, kind: input, shape index: {}]
  %s3 = inlined_call_operand.vmem [shape: f32[2,4,384], index: 3, kind: input, shape index: {}]
  %s4 = inlined_call_operand.vmem [shape: f32[2,4,384], index: 4, kind: output, shape index: {}, may-alias: {0,4}]
  %s5 = sld [smem:[#allocation0]]
  $region49: #{cellular_automata_forward.1} parent=0
    _
  %s7 = ssub.s32 1, %s5
  %s8 = scalar_select 0, %s7, %s5
  loop: start=0, step=1, limit=4
  $region2: #{cellular_automata_forward.1} parent=0 // loop_pre_header
    _
  $region3: #{cellular_automata_forward.1} parent=0 // loop_header
    %s10 = sphi 0, %s14
    %p11 = scmp.ge.s32.totalorder %s10, 4
    %s20 = sphi 0, %s22
    %s23 = sphi 0, %s20
    %s24 = sphi 0, %s23
    %s40 = sphi 0, %s24
    %s44 = sphi 0, %s44
    %s46 = sphi 0, %s44
    %s47 = sphi 0, %s46
    %s61 = sphi 0, %s47
    %s65 = sphi 0, %s65
    %s67 = sphi 0, %s65
    %s68 = sphi 0, %s67
    %s82 = sphi 0, %s68
    %s88 = sphi 0, %s90
    %s91 = sphi 0, %s88
    %s92 = sphi 0, %s91
    %s108 = sphi 0, %s92
    %s114 = sphi 0, %s116
    %s117 = sphi 0, %s114
    %s118 = sphi 0, %s117
    %s134 = sphi 0, %s118
  $region4: #{cellular_automata_forward.1} parent=0 // loop_header_branch
    %13 = sbr.rel (%p11) target = $region8
  $region5: #{cellular_automata_forward.1} parent=0 // loop_body
    %s15 = ssub.s32 %s10, 1
    %s16 = ssub.s32 %s10, 2
    %s17 = sadd.s32 %s10, 1
    %s18 = ssub.s32 %s10, %s17
    %p19 = scmp.eq.s32.totalorder %s18, 0
    %s21 = sadd.s32 %s20, 1
    %s22 = scalar_select %p19, %s20, %s21
    %p25 = pneg %p19
    %p26 = scmp.eq.s32.totalorder %s10, 1
    %p27 = por %p25, %p26
    %p28 = scmp.ne.s32.totalorder %s20, %s23
    %p29 = scmp.eq.s32.totalorder %s10, 0
    %p30 = por %p28, %p29
    %p31 = scmp.ne.s32.totalorder %s20, %s23
    %p32 = scmp.eq.s32.totalorder %s15, 1
    %p33 = por %p31, %p32
    %p34 = scmp.ne.s32.totalorder %s23, %s24
    %p35 = scmp.eq.s32.totalorder %s15, 0
    %p36 = por %p34, %p35
    %p37 = scmp.ne.s32.totalorder %s23, %s24
    %p38 = scmp.eq.s32.totalorder %s16, 1
    %p39 = por %p37, %p38
    %p41 = scmp.ne.s32.totalorder %s24, %s40
    %p42 = scmp.eq.s32.totalorder %s16, 0
    %p43 = por %p41, %p42
    %s45 = sadd.s32 %s44, 1
    %p48 = scmp.eq.s32.totalorder %s10, 1
    %p49 = scmp.ne.s32.totalorder %s44, %s46
    %p50 = scmp.eq.s32.totalorder %s10, 0
    %p51 = por %p49, %p50
    %p52 = scmp.ne.s32.totalorder %s44, %s46
    %p53 = scmp.eq.s32.totalorder %s15, 1
    %p54 = por %p52, %p53
    %p55 = scmp.ne.s32.totalorder %s46, %s47
    %p56 = scmp.eq.s32.totalorder %s15, 0
    %p57 = por %p55, %p56
    %p58 = scmp.ne.s32.totalorder %s46, %s47
    %p59 = scmp.eq.s32.totalorder %s16, 1
    %p60 = por %p58, %p59
    %p62 = scmp.ne.s32.totalorder %s47, %s61
    %p63 = scmp.eq.s32.totalorder %s16, 0
    %p64 = por %p62, %p63
    %s66 = sadd.s32 %s65, 1
    %p69 = scmp.eq.s32.totalorder %s10, 1
    %p70 = scmp.ne.s32.totalorder %s65, %s67
    %p71 = scmp.eq.s32.totalorder %s10, 0
    %p72 = por %p70, %p71
    %p73 = scmp.ne.s32.totalorder %s65, %s67
    %p74 = scmp.eq.s32.totalorder %s15, 1
    %p75 = por %p73, %p74
    %p76 = scmp.ne.s32.totalorder %s67, %s68
    %p77 = scmp.eq.s32.totalorder %s15, 0
    %p78 = por %p76, %p77
    %p79 = scmp.ne.s32.totalorder %s67, %s68
    %p80 = scmp.eq.s32.totalorder %s16, 1
    %p81 = por %p79, %p80
    %p83 = scmp.ne.s32.totalorder %s68, %s82
    %p84 = scmp.eq.s32.totalorder %s16, 0
    %p85 = por %p83, %p84
    %s86 = ssub.s32 %s10, %s17
    %p87 = scmp.eq.s32.totalorder %s86, 0
    %s89 = sadd.s32 %s88, 1
    %s90 = scalar_select %p87, %s88, %s89
    %p93 = pneg %p87
    %p94 = scmp.eq.s32.totalorder %s10, 1
    %p95 = por %p93, %p94
    %p96 = scmp.ne.s32.totalorder %s88, %s91
    %p97 = scmp.eq.s32.totalorder %s10, 0
    %p98 = por %p96, %p97
    %p99 = scmp.ne.s32.totalorder %s88, %s91
    %p100 = scmp.eq.s32.totalorder %s15, 1
    %p101 = por %p99, %p100
    %p102 = scmp.ne.s32.totalorder %s91, %s92
    %p103 = scmp.eq.s32.totalorder %s15, 0
    %p104 = por %p102, %p103
    %p105 = scmp.ne.s32.totalorder %s91, %s92
    %p106 = scmp.eq.s32.totalorder %s16, 1
    %p107 = por %p105, %p106
    %p109 = scmp.ne.s32.totalorder %s92, %s108
    %p110 = scmp.eq.s32.totalorder %s16, 0
    %p111 = por %p109, %p110
    %s112 = ssub.s32 %s10, %s17
    %p113 = scmp.eq.s32.totalorder %s112, 0
    %s115 = sadd.s32 %s114, 1
    %s116 = scalar_select %p113, %s114, %s115
    %p119 = pneg %p113
    %p120 = scmp.eq.s32.totalorder %s10, 1
    %p121 = por %p119, %p120
    %p122 = scmp.ne.s32.totalorder %s114, %s117
    %p123 = scmp.eq.s32.totalorder %s10, 0
    %p124 = por %p122, %p123
    %p125 = scmp.ne.s32.totalorder %s114, %s117
    %p126 = scmp.eq.s32.totalorder %s15, 1
    %p127 = por %p125, %p126
    %p128 = scmp.ne.s32.totalorder %s117, %s118
    %p129 = scmp.eq.s32.totalorder %s15, 0
    %p130 = por %p128, %p129
    %p131 = scmp.ne.s32.totalorder %s117, %s118
    %p132 = scmp.eq.s32.totalorder %s16, 1
    %p133 = por %p131, %p132
    %p135 = scmp.ne.s32.totalorder %s118, %s134
    %p136 = scmp.eq.s32.totalorder %s16, 0
    %p137 = por %p135, %p136
    %p138 = scmp.le.s32.totalorder 1, %s10
    %p139 = scmp.lt.s32.totalorder %s10, 3
    %p140 = pnand %p138, %p139
    %p141 = pneg %p140
    // Predicated region
    $region9: #{cellular_automata_forward.1} parent=5 // pred_check
      _
    $region10: #{cellular_automata_forward.1} parent=5 // pred_check_branch
      %143 = sbr.rel (%p140) target = $region12
    $region11: #{cellular_automata_forward.1} parent=5 // pred_region
      %s144 = ssub.s32 %s10, 1
      // Predicated region
      $region13: #{cellular_automata_forward.1} parent=11 // pred_check
        %p145 = pneg %p57
      $region14: #{cellular_automata_forward.1} parent=11 // pred_check_branch
        %147 = sbr.rel (%p145) target = $region16
      $region15: #{cellular_automata_forward.1} parent=11 // pred_region
        _
      $region16: #{cellular_automata_forward.1} parent=11 // pred_fallthru
        _
      // Predicated region
      $region17: #{cellular_automata_forward.1} parent=11 // pred_check
        %p148 = pneg %p78
      $region18: #{cellular_automata_forward.1} parent=11 // pred_check_branch
        %150 = sbr.rel (%p148) target = $region20
      $region19: #{cellular_automata_forward.1} parent=11 // pred_region
        _
      $region20: #{cellular_automata_forward.1} parent=11 // pred_fallthru
        _
    $region12: #{cellular_automata_forward.1} parent=5 // pred_fallthru
      _
    %p151 = scmp.lt.s32.totalorder %s10, 2
    // Predicated region
    $region21: #{cellular_automata_forward.1} parent=5 // pred_check
      %p152 = pneg %p151
    $region22: #{cellular_automata_forward.1} parent=5 // pred_check_branch
      %154 = sbr.rel (%p152) target = $region24
    $region23: #{cellular_automata_forward.1} parent=5 // pred_region
      // Predicated region
      $region25: #{cellular_automata_forward.1} parent=23 // pred_check
        %p155 = pneg %p30
      $region26: #{cellular_automata_forward.1} parent=23 // pred_check_branch
        %157 = sbr.rel (%p155) target = $region28
      $region27: #{cellular_automata_forward.1} parent=23 // pred_region
        %p158 = scmp.lt.s32.totalorder %s10, 1
        %s159 = scalar_select %p158, %s10, 1
        %s160 = smul.addr %s159, 3
        %s161 = smul.addr %s160, 4
        %s162 = scalar_lea.vmem %s0, %s161
      $region28: #{cellular_automata_forward.1} parent=23 // pred_fallthru
        _
      // Predicated region
      $region29: #{cellular_automata_forward.1} parent=23 // pred_check
        %p163 = pneg %p98
      $region30: #{cellular_automata_forward.1} parent=23 // pred_check_branch
        %165 = sbr.rel (%p163) target = $region32
      $region31: #{cellular_automata_forward.1} parent=23 // pred_region
        %p166 = scmp.lt.s32.totalorder %s10, 1
        %s167 = scalar_select %p166, %s10, 1
        %s168 = smul.addr %s167, 3
        %s169 = smul.addr %s168, 4
        %s170 = scalar_lea.vmem %s3, %s169
      $region32: #{cellular_automata_forward.1} parent=23 // pred_fallthru
        _
    $region24: #{cellular_automata_forward.1} parent=5 // pred_fallthru
      _
    %p171 = scmp.le.s32.totalorder 1, %s10
    %p172 = scmp.lt.s32.totalorder %s10, 3
    %p173 = pnand %p171, %p172
    %p174 = pneg %p173
    // Predicated region
    $region33: #{cellular_automata_forward.1} parent=5 // pred_check
      _
    $region34: #{cellular_automata_forward.1} parent=5 // pred_check_branch
      %176 = sbr.rel (%p173) target = $region36
    $region35: #{cellular_automata_forward.1} parent=5 // pred_region
      %s177 = ssub.s32 %s10, 1
      %p178 = scmp.lt.s32.totalorder %s15, 1
      %s179 = scalar_select %p178, %s15, 1
      %s180 = smul.addr %s179, 3
      %s181 = smul.addr %s180, 4
      %s182 = scalar_lea.vmem %s0, %s181
      %p183 = pneg %p36
      %p184 = pneg %p33
      %p185 = pneg %p57
      %p186 = pneg %p54
      %p187 = pneg %p78
      %p188 = pneg %p75
      %p189 = scmp.lt.s32.totalorder %s15, 1
      %s190 = scalar_select %p189, %s15, 1
      %s191 = smul.addr %s190, 3
      %s192 = smul.addr %s191, 4
      %s193 = scalar_lea.vmem %s3, %s192
      %p194 = pneg %p104
      %p195 = pneg %p101
      %p196 = pneg %p130
      %p197 = pneg %p127
      %p198 = scmp.lt.s32.totalorder %s15, 1
      %s199 = scalar_select %p198, %s15, 1
      %s200 = smul.addr %s199, 3
      %s201 = smul.addr %s200, 4
      %s202 = scalar_lea.vmem %s4, %s201
      %p203 = scmp.lt.s32.totalorder %s15, 1
      %s204 = scalar_select %p203, %s15, 1
      %s205 = smul.addr %s204, 3
      %s206 = smul.addr %s205, 4
      %s207 = scalar_lea.vmem %s0, %s206
      %p208 = scmp.lt.s32.totalorder %s15, 1
      %s209 = scalar_select %p208, %s15, 1
      %s210 = smul.addr %s209, 3
      %s211 = smul.addr %s210, 4
      %s212 = scalar_lea.vmem %s3, %s211
      %p213 = scmp.lt.s32.totalorder %s15, 1
      %s214 = scalar_select %p213, %s15, 1
      %s215 = smul.addr %s214, 3
      %s216 = smul.addr %s215, 4
      %s217 = scalar_lea.vmem %s4, %s216
      %218 = vst [vmem:[#allocation2] sm:$0xff] 0.0
      %219 = vst [vmem:[#allocation2 + $0x8] sm:$0xff] 0.0
      %220 = vst [vmem:[#allocation2 + $0x10] sm:$0xff] 0.0
      %221 = vst [vmem:[#allocation2 + $0x18] sm:$0xff] 0.0
      %222 = vst [vmem:[#allocation2 + $0x20] sm:$0xff] 0.0
      %223 = vst [vmem:[#allocation2 + $0x28] sm:$0xff] 0.0
      %224 = vst [vmem:[#allocation2 + $0x30] sm:$0xff] 0.0
      %225 = vst [vmem:[#allocation2 + $0x38] sm:$0xff] 0.0
      %226 = vst [vmem:[#allocation2 + $0x40] sm:$0xff] 0.0
      %227 = vst [vmem:[#allocation2 + $0x48] sm:$0xff] 0.0
      %228 = vst [vmem:[#allocation2 + $0x50] sm:$0xff] 0.0
      %229 = vst [vmem:[#allocation2 + $0x58] sm:$0xff] 0.0
      %230 = vst [vmem:[#allocation2 + $0x60] sm:$0x1f] 0.0
      %231 = vst [vmem:[#allocation2 + $0x68] sm:$0x1f] 0.0
      %232 = vst [vmem:[#allocation2 + $0x70] sm:$0x1f] 0.0
      %v233 = vlaneseq
      %vm234 = vcmp.ge.s32.totalorder %v233, 0
      %vm235 = vcmp.lt.s32.totalorder %v233, 384
      %vm236 = vmand %vm234, %vm235
      %s237 = scalar_lea.vmem [#allocation2], 100
      %238 = vst.msk [vmem:[%s237] ss:$8 sm:$0x7] %vm236, 1.0
      %239 = vst.msk [vmem:[%s237] ss:$8 sm:$0x0] %vm236, 1.0
      %v240 = vld [vmem:[%s1] sm:$0xff]
      %v241 = vld [vmem:[%s1 + $0x8] sm:$0xff]
      %v242 = vld [vmem:[%s1 + $0x10] sm:$0xff]
      %v243 = vld [vmem:[%s1 + $0x18] sm:$0xff]
      %v244 = vld [vmem:[%s1 + $0x20] sm:$0x1]
      %v245 = vld [vmem:[%s2] sm:$0xf]
      %v246 = vld [vmem:[%s212] sm:$0xff]
      %v247 = vld [vmem:[%s212 + $0x8] sm:$0xf]
      %v248 = vld [vmem:[%s207] sm:$0xff]
      %v249 = vld [vmem:[%s207 + $0x8] sm:$0xf]
      %v252 = vcombine.high %v248, %v248
      %253 = vrot.lane.b32.xlu0 %v248, 19
      %v254 = vpop.permute.xlu0 %253
      %255 = vrot.lane.b32.xlu0 %v252, 19
      %v256 = vpop.permute.xlu0 %255
      %257 = vrot.lane.b32.xlu0 %v249, 19
      %v258 = vpop.permute.xlu0 %257
      %vm259 = vcmask 154624
      %v260 = vsel %vm259, %v254, %v256
      %v261 = vsel %vm259, %v256, %v258
      %vm265 = vcmask 1043608
      %266 = vst.msk [vmem:[#allocation2] sm:$0xf] %vm265, %v254
      %267 = vst [vmem:[#allocation2 + $0x8] sm:$0xf] %v260
      %268 = vst [vmem:[#allocation2 + $0x10] sm:$0xf] %v261
      %v269 = vcombine.low %v248, %v248
      %v270 = vcombine.low %v249, %v249
      %271 = vrot.lane.b32.xlu0 %v269, 18
      %v272 = vpop.permute.xlu0 %271
      %273 = vrot.lane.b32.xlu0 %v248, 18
      %v274 = vpop.permute.xlu0 %273
      %275 = vrot.lane.b32.xlu0 %v270, 18
      %v276 = vpop.permute.xlu0 %275
      %vm277 = vcmask 146432
      %v278 = vsel %vm277, %v272, %v274
      %v279 = vsel %vm277, %v274, %v276
      %vm283 = vcmask 1047700
      %284 = vst.msk [vmem:[#allocation2] sm:$0xf0] %vm283, %v272
      %285 = vst [vmem:[#allocation2 + $0x8] sm:$0xf0] %v278
      %286 = vst [vmem:[#allocation2 + $0x10] sm:$0xf0] %v279
      %287 = vrot.lane.b32.xlu0 %v248, 17
      %v288 = vpop.permute.xlu0 %287
      %289 = vrot.lane.b32.xlu0 %v252, 17
      %v290 = vpop.permute.xlu0 %289
      %291 = vrot.lane.b32.xlu0 %v249, 17
      %v292 = vpop.permute.xlu0 %291
      %vm293 = vcmask 138240
      %v294 = vsel %vm293, %v288, %v290
      %v295 = vsel %vm293, %v290, %v292
      %vm299 = vcmask 1043592
      %300 = vst.msk [vmem:[#allocation2 + $0x18] sm:$0xf] %vm299, %v288
      %301 = vst [vmem:[#allocation2 + $0x20] sm:$0xf] %v294
      %302 = vst [vmem:[#allocation2 + $0x28] sm:$0xf] %v295
      %303 = vrot.lane.b32.xlu0 %v269, 1
      %v304 = vpop.permute.xlu0 %303
      %305 = vrot.lane.b32.xlu0 %v248, 1
      %v306 = vpop.permute.xlu0 %305
      %307 = vrot.lane.b32.xlu0 %v270, 1
      %v308 = vpop.permute.xlu0 %307
      %vm309 = vcmask 7168
      %v310 = vsel %vm309, %v304, %v306
      %v311 = vsel %vm309, %v306, %v308
      %vm315 = vcmask 1047564
      %316 = vst.msk [vmem:[#allocation2 + $0x18] sm:$0xf0] %vm315, %v304
      %317 = vst [vmem:[#allocation2 + $0x20] sm:$0xf0] %v310
      %318 = vst [vmem:[#allocation2 + $0x28] sm:$0xf0] %v311
      %320 = vst [vmem:[#allocation2 + $0x30] sm:$0xf] %v248
      %321 = vst [vmem:[#allocation2 + $0x38] sm:$0xf] %v252
      %322 = vst [vmem:[#allocation2 + $0x40] sm:$0xf] %v249
      %323 = vrot.lane.b32.xlu0 %v269, 127
      %v324 = vpop.permute.xlu0 %323
      %325 = vrot.lane.b32.xlu0 %v248, 127
      %v326 = vpop.permute.xlu0 %325
      %327 = vrot.lane.b32.xlu0 %v270, 127
      %v328 = vpop.permute.xlu0 %327
      %vm329 = vcmask 1039360
      %v330 = vsel %vm329, %v324, %v326
      %v331 = vsel %vm329, %v326, %v328
      %335 = vst [vmem:[#allocation2 + $0x30] sm:$0xf0] %v330
      %336 = vst [vmem:[#allocation2 + $0x38] sm:$0xf0] %v331
      %vm337 = vcmask 1039364
      %338 = vst.msk [vmem:[#allocation2 + $0x40] sm:$0xf0] %vm337, %v328
      %339 = vrot.lane.b32.xlu0 %v248, 111
      %v340 = vpop.permute.xlu0 %339
      %341 = vrot.lane.b32.xlu0 %v252, 111
      %v342 = vpop.permute.xlu0 %341
      %343 = vrot.lane.b32.xlu0 %v249, 111
      %v344 = vpop.permute.xlu0 %343
      %vm345 = vcmask 908288
      %v346 = vsel %vm345, %v340, %v342
      %v347 = vsel %vm345, %v342, %v344
      %351 = vst [vmem:[#allocation2 + $0x48] sm:$0xf] %v346
      %352 = vst [vmem:[#allocation2 + $0x50] sm:$0xf] %v347
      %vm353 = vcmask 904192
      %354 = vst.msk [vmem:[#allocation2 + $0x58] sm:$0xf] %vm353, %v344
      %355 = vrot.lane.b32.xlu0 %v269, 110
      %v356 = vpop.permute.xlu0 %355
      %357 = vrot.lane.b32.xlu0 %v248, 110
      %v358 = vpop.permute.xlu0 %357
      %359 = vrot.lane.b32.xlu0 %v270, 110
      %v360 = vpop.permute.xlu0 %359
      %vm361 = vcmask 900096
      %v362 = vsel %vm361, %v356, %v358
      %v363 = vsel %vm361, %v358, %v360
      %367 = vst [vmem:[#allocation2 + $0x48] sm:$0xf0] %v362
      %368 = vst [vmem:[#allocation2 + $0x50] sm:$0xf0] %v363
      %vm369 = vcmask 900100
      %370 = vst.msk [vmem:[#allocation2 + $0x58] sm:$0xf0] %vm369, %v360
      %371 = vrot.lane.b32.xlu0 %v248, 109
      %v372 = vpop.permute.xlu0 %371
      %373 = vrot.lane.b32.xlu0 %v252, 109
      %v374 = vpop.permute.xlu0 %373
      %375 = vrot.lane.b32.xlu0 %v249, 109
      %v376 = vpop.permute.xlu0 %375
      %vm377 = vcmask 891904
      %v378 = vsel %vm377, %v372, %v374
      %v379 = vsel %vm377, %v374, %v376
      %383 = vst [vmem:[#allocation2 + $0x60] sm:$0xf] %v378
      %384 = vst [vmem:[#allocation2 + $0x68] sm:$0xf] %v379
      %vm385 = vcmask 887808
      %386 = vst.msk [vmem:[#allocation2 + $0x70] sm:$0xf] %vm385, %v376
      %v387 = vld [vmem:[#allocation2] sm:$0xff]
      %v388 = vld [vmem:[#allocation2 + $0x8] sm:$0xff]
      %v389 = vld [vmem:[#allocation2 + $0x10] sm:$0xff]
      %v390 = vld [vmem:[#allocation2 + $0x18] sm:$0xff]
      %v391 = vld [vmem:[#allocation2 + $0x20] sm:$0xff]
      %v392 = vld [vmem:[#allocation2 + $0x28] sm:$0xff]
      %v393 = vld [vmem:[#allocation2 + $0x30] sm:$0xff]
      %v394 = vld [vmem:[#allocation2 + $0x38] sm:$0xff]
      %v395 = vld [vmem:[#allocation2 + $0x40] sm:$0xff]
      %v396 = vld [vmem:[#allocation2 + $0x48] sm:$0xff]
      %v397 = vld [vmem:[#allocation2 + $0x50] sm:$0xff]
      %v398 = vld [vmem:[#allocation2 + $0x58] sm:$0xff]
      %v399 = vld [vmem:[#allocation2 + $0x60] sm:$0x1f]
      %v400 = vld [vmem:[#allocation2 + $0x68] sm:$0x1f]
      %v401 = vld [vmem:[#allocation2 + $0x70] sm:$0x1f]
      %vm402 = vcmask 302080
      %v404 = vsel %vm402, %v240, 0
      %v407 = vsel %vm402, %v241, 0
      %v410 = vsel %vm402, %v242, 0
      %v413 = vsel %vm402, %v243, 0
      %v416 = vsel %vm402, %v244, 0
      %vm418 = vcmask 1044480
      %v420 = vsel %vm418, %v399, 0
      %v423 = vsel %vm418, %v400, 0
      %v426 = vsel %vm418, %v401, 0
      %428 = vmatprep.subr.mxu0 %v388
      %429 = vmatpush1.msra.mxu0 %v387
      %430 = vmatprep.subr.mxu0 %v391
      %431 = vmatpush1.msra.mxu0 %v390
      %432 = vmatprep.subr.mxu0 %v394
      %433 = vmatpush1.msra.mxu0 %v393
      %434 = vmatprep.subr.mxu0 %v397
      %435 = vmatpush1.msra.mxu0 %v396
      %436 = vmatprep.subr.mxu0 %v423
      %437 = vmatpush1.msra.mxu0 %v420
      %438 = vmatprep.subr.mxu0 0.0
      %439 = vmatpush1.msra.mxu0 0.0
      %440 = vmatprep.subr.mxu0 0.0
      %441 = vmatpush1.msra.mxu0 0.0
      %442 = vmatprep.subr.mxu0 0.0
      %443 = vmatpush1.msra.mxu0 0.0
      %444 = vmatprep.subr.mxu0 0.0
      %445 = vmatpush1.msra.mxu0 0.0
      %446 = vmatprep.subr.mxu0 0.0
      %447 = vmatpush1.msra.mxu0 0.0
      %448 = vmatprep.subr.mxu0 0.0
      %449 = vmatpush1.msra.mxu0 0.0
      %450 = vmatprep.subr.mxu0 0.0
      %451 = vmatpush1.msra.mxu0 0.0
      %452 = vmatprep.subr.mxu0 0.0
      %453 = vmatpush1.msra.mxu0 0.0
      %454 = vmatprep.subr.mxu0 0.0
      %455 = vmatpush1.msra.mxu0 0.0
      %456 = vmatprep.subr.mxu0 0.0
      %457 = vmatpush1.msra.mxu0 0.0
      %458 = vmatprep.subr.mxu0 0.0
      %459 = vmatpush1.msra.mxu0 0.0
      %460 = vmatprep.subr.mxu0 0.0
      %461 = vmatpush1.msra.mxu0 0.0
      %462 = vmatprep.subr.mxu0 0.0
      %463 = vmatpush1.msra.mxu0 0.0
      %464 = vmatprep.subr.mxu0 0.0
      %465 = vmatpush1.msra.mxu0 0.0
      %466 = vmatprep.subr.mxu0 0.0
      %467 = vmatpush1.msra.mxu0 0.0
      %468 = vmatprep.subr.mxu0 0.0
      %469 = vmatpush1.msra.mxu0 0.0
      %470 = vmatprep.subr.mxu0 0.0
      %471 = vmatpush1.msra.mxu0 0.0
      %472 = vmatprep.subr.mxu0 0.0
      %473 = vmatpush1.msra.mxu0 0.0
      %474 = vmatprep.subr.mxu0 0.0
      %475 = vmatpush1.msra.mxu0 0.0
      %476 = vmatprep.subr.mxu0 0.0
      %477 = vmatpush1.msra.mxu0 0.0
      %478 = vmatprep.subr.mxu0 0.0
      %479 = vmatpush1.msra.mxu0 0.0
      %480 = vmatprep.subr.mxu0 0.0
      %481 = vmatpush1.msra.mxu0 0.0
      %482 = vmatprep.subr.mxu0 0.0
      %483 = vmatpush1.msra.mxu0 0.0
      %484 = vmatprep.subr.mxu0 0.0
      %485 = vmatpush1.msra.mxu0 0.0
      %486 = vmatprep.subr.mxu0 0.0
      %487 = vmatpush1.msra.mxu0 0.0
      %488 = vmatprep.subr.mxu0 0.0
      %489 = vmatpush1.msra.mxu0 0.0
      %490 = vmatprep.subr.mxu0 0.0
      %491 = vmatpush1.msra.mxu0 0.0
      %492 = vmatprep.mubr.f32.mxu0 0.0
      %493 = vmatmul.mubr.f32.gmra.mrb[0].mxu0 %v404
      %v494 = vpop.f32.mrb[0].mxu0
      %v495 = vadd.f32 0.0, %v494
      %v496 = vpop.f32.mrb[0].mxu0
      %v497 = vadd.f32 0.0, %v496
      %498 = vmatprep.mubr.f32.mxu0 0.0
      %499 = vmatmul.mubr.f32.gmra.mrb[0].mxu0 %v407
      %v500 = vpop.f32.mrb[0].mxu0
      %v501 = vadd.f32 0.0, %v500
      %v502 = vpop.f32.mrb[0].mxu0
      %v503 = vadd.f32 0.0, %v502
      %504 = vmatprep.mubr.f32.mxu0 0.0
      %505 = vmatmul.mubr.f32.gmra.mrb[0].mxu0 %v410
      %v506 = vpop.f32.mrb[0].mxu0
      %v507 = vadd.f32 0.0, %v506
      %v508 = vpop.f32.mrb[0].mxu0
      %v509 = vadd.f32 0.0, %v508
      %510 = vmatprep.mubr.f32.mxu0 0.0
      %511 = vmatmul.mubr.f32.gmra.mrb[0].mxu0 %v413
      %v512 = vpop.f32.mrb[0].mxu0
      %v513 = vadd.f32 0.0, %v512
      %v514 = vpop.f32.mrb[0].mxu0
      %v515 = vadd.f32 0.0, %v514
      %516 = vmatprep.mubr.f32.mxu0 0.0
      %517 = vmatmul.mubr.f32.gmra.mrb[0].mxu0 %v416
      %v518 = vpop.f32.mrb[0].mxu0
      %v519 = vadd.f32 0.0, %v518
      %v520 = vpop.f32.mrb[0].mxu0
      %v521 = vadd.f32 0.0, %v520
      %522 = vdwg.mxu0
      %523 = vmatprep.subr.mxu0 0.0
      %524 = vmatpush1.msra.mxu0 %v389
      %525 = vmatprep.subr.mxu0 0.0
      %526 = vmatpush1.msra.mxu0 %v392
      %527 = vmatprep.subr.mxu0 0.0
      %528 = vmatpush1.msra.mxu0 %v395
      %529 = vmatprep.subr.mxu0 0.0
      %530 = vmatpush1.msra.mxu0 %v398
      %531 = vmatprep.subr.mxu0 0.0
      %532 = vmatpush1.msra.mxu0 %v426
      %533 = vmatprep.subr.mxu0 0.0
      %534 = vmatpush1.msra.mxu0 0.0
      %535 = vmatprep.subr.mxu0 0.0
      %536 = vmatpush1.msra.mxu0 0.0
      %537 = vmatprep.subr.mxu0 0.0
      %538 = vmatpush1.msra.mxu0 0.0
      %539 = vmatprep.subr.mxu0 0.0
      %540 = vmatpush1.msra.mxu0 0.0
      %541 = vmatprep.subr.mxu0 0.0
      %542 = vmatpush1.msra.mxu0 0.0
      %543 = vmatprep.subr.mxu0 0.0
      %544 = vmatpush1.msra.mxu0 0.0
      %545 = vmatprep.subr.mxu0 0.0
      %546 = vmatpush1.msra.mxu0 0.0
      %547 = vmatprep.subr.mxu0 0.0
      %548 = vmatpush1.msra.mxu0 0.0
      %549 = vmatprep.subr.mxu0 0.0
      %550 = vmatpush1.msra.mxu0 0.0
      %551 = vmatprep.subr.mxu0 0.0
      %552 = vmatpush1.msra.mxu0 0.0
      %553 = vmatprep.subr.mxu0 0.0
      %554 = vmatpush1.msra.mxu0 0.0
      %555 = vmatprep.subr.mxu0 0.0
      %556 = vmatpush1.msra.mxu0 0.0
      %557 = vmatprep.subr.mxu0 0.0
      %558 = vmatpush1.msra.mxu0 0.0
      %559 = vmatprep.subr.mxu0 0.0
      %560 = vmatpush1.msra.mxu0 0.0
      %561 = vmatprep.subr.mxu0 0.0
      %562 = vmatpush1.msra.mxu0 0.0
      %563 = vmatprep.subr.mxu0 0.0
      %564 = vmatpush1.msra.mxu0 0.0
      %565 = vmatprep.subr.mxu0 0.0
      %566 = vmatpush1.msra.mxu0 0.0
      %567 = vmatprep.subr.mxu0 0.0
      %568 = vmatpush1.msra.mxu0 0.0
      %569 = vmatprep.subr.mxu0 0.0
      %570 = vmatpush1.msra.mxu0 0.0
      %571 = vmatprep.subr.mxu0 0.0
      %572 = vmatpush1.msra.mxu0 0.0
      %573 = vmatprep.subr.mxu0 0.0
      %574 = vmatpush1.msra.mxu0 0.0
      %575 = vmatprep.subr.mxu0 0.0
      %576 = vmatpush1.msra.mxu0 0.0
      %577 = vmatprep.subr.mxu0 0.0
      %578 = vmatpush1.msra.mxu0 0.0
      %579 = vmatprep.subr.mxu0 0.0
      %580 = vmatpush1.msra.mxu0 0.0
      %581 = vmatprep.subr.mxu0 0.0
      %582 = vmatpush1.msra.mxu0 0.0
      %583 = vmatprep.subr.mxu0 0.0
      %584 = vmatpush1.msra.mxu0 0.0
      %585 = vmatprep.subr.mxu0 0.0
      %586 = vmatpush1.msra.mxu0 0.0
      %587 = vmatprep.mubr.f32.mxu0 0.0
      %588 = vmatmul.mubr.f32.gmra.mrb[0].mxu0 %v404
      %v589 = vpop.f32.mrb[0].mxu0
      %v590 = vadd.f32 0.0, %v589
      %v591 = vpop.f32.mrb[0].mxu0
      %592 = vmatprep.mubr.f32.mxu0 0.0
      %593 = vmatmul.mubr.f32.gmra.mrb[0].mxu0 %v407
      %v594 = vpop.f32.mrb[0].mxu0
      %v595 = vadd.f32 0.0, %v594
      %v596 = vpop.f32.mrb[0].mxu0
      %597 = vmatprep.mubr.f32.mxu0 0.0
      %598 = vmatmul.mubr.f32.gmra.mrb[0].mxu0 %v410
      %v599 = vpop.f32.mrb[0].mxu0
      %v600 = vadd.f32 0.0, %v599
      %v601 = vpop.f32.mrb[0].mxu0
      %602 = vmatprep.mubr.f32.mxu0 0.0
      %603 = vmatmul.mubr.f32.gmra.mrb[0].mxu0 %v413
      %v604 = vpop.f32.mrb[0].mxu0
      %v605 = vadd.f32 0.0, %v604
      %v606 = vpop.f32.mrb[0].mxu0
      %607 = vmatprep.mubr.f32.mxu0 0.0
      %608 = vmatmul.mubr.f32.gmra.mrb[0].mxu0 %v416
      %v609 = vpop.f32.mrb[0].mxu0
      %v610 = vadd.f32 0.0, %v609
      %v611 = vpop.f32.mrb[0].mxu0
      %612 = vdwg.mxu0
      %v613 = vmax.f32 %v495, 0.0
      %v614 = vmax.f32 %v497, 0.0
      %v615 = vmax.f32 %v590, 0.0
      %v616 = vmax.f32 %v501, 0.0
      %v617 = vmax.f32 %v503, 0.0
      %v618 = vmax.f32 %v595, 0.0
      %v619 = vmax.f32 %v507, 0.0
      %v620 = vmax.f32 %v509, 0.0
      %v621 = vmax.f32 %v600, 0.0
      %v622 = vmax.f32 %v513, 0.0
      %v623 = vmax.f32 %v515, 0.0
      %v624 = vmax.f32 %v605, 0.0
      %v625 = vmax.f32 %v519, 0.0
      %v626 = vmax.f32 %v521, 0.0
      %v627 = vmax.f32 %v610, 0.0
      %vm628 = vcmask 269312
      %v630 = vsel %vm628, %v245, 0
      %vm632 = vcmask 1040384
      %v634 = vsel %vm632, %v625, 0
      %v637 = vsel %vm632, %v626, 0
      %v640 = vsel %vm632, %v627, 0
      %642 = vmatprep.subr.mxu0 %v614
      %643 = vmatpush1.msra.mxu0 %v613
      %644 = vmatprep.subr.mxu0 %v617
      %645 = vmatpush1.msra.mxu0 %v616
      %646 = vmatprep.subr.mxu0 %v620
      %647 = vmatpush1.msra.mxu0 %v619
      %648 = vmatprep.subr.mxu0 %v623
      %649 = vmatpush1.msra.mxu0 %v622
      %650 = vmatprep.subr.mxu0 %v637
      %651 = vmatpush1.msra.mxu0 %v634
      %652 = vmatprep.subr.mxu0 0.0
      %653 = vmatpush1.msra.mxu0 0.0
      %654 = vmatprep.subr.mxu0 0.0
      %655 = vmatpush1.msra.mxu0 0.0
      %656 = vmatprep.subr.mxu0 0.0
      %657 = vmatpush1.msra.mxu0 0.0
      %658 = vmatprep.subr.mxu0 0.0
      %659 = vmatpush1.msra.mxu0 0.0
      %660 = vmatprep.subr.mxu0 0.0
      %661 = vmatpush1.msra.mxu0 0.0
      %662 = vmatprep.subr.mxu0 0.0
      %663 = vmatpush1.msra.mxu0 0.0
      %664 = vmatprep.subr.mxu0 0.0
      %665 = vmatpush1.msra.mxu0 0.0
      %666 = vmatprep.subr.mxu0 0.0
      %667 = vmatpush1.msra.mxu0 0.0
      %668 = vmatprep.subr.mxu0 0.0
      %669 = vmatpush1.msra.mxu0 0.0
      %670 = vmatprep.subr.mxu0 0.0
      %671 = vmatpush1.msra.mxu0 0.0
      %672 = vmatprep.subr.mxu0 0.0
      %673 = vmatpush1.msra.mxu0 0.0
      %674 = vmatprep.subr.mxu0 0.0
      %675 = vmatpush1.msra.mxu0 0.0
      %676 = vmatprep.subr.mxu0 0.0
      %677 = vmatpush1.msra.mxu0 0.0
      %678 = vmatprep.subr.mxu0 0.0
      %679 = vmatpush1.msra.mxu0 0.0
      %680 = vmatprep.subr.mxu0 0.0
      %681 = vmatpush1.msra.mxu0 0.0
      %682 = vmatprep.subr.mxu0 0.0
      %683 = vmatpush1.msra.mxu0 0.0
      %684 = vmatprep.subr.mxu0 0.0
      %685 = vmatpush1.msra.mxu0 0.0
      %686 = vmatprep.subr.mxu0 0.0
      %687 = vmatpush1.msra.mxu0 0.0
      %688 = vmatprep.subr.mxu0 0.0
      %689 = vmatpush1.msra.mxu0 0.0
      %690 = vmatprep.subr.mxu0 0.0
      %691 = vmatpush1.msra.mxu0 0.0
      %692 = vmatprep.subr.mxu0 0.0
      %693 = vmatpush1.msra.mxu0 0.0
      %694 = vmatprep.subr.mxu0 0.0
      %695 = vmatpush1.msra.mxu0 0.0
      %696 = vmatprep.subr.mxu0 0.0
      %697 = vmatpush1.msra.mxu0 0.0
      %698 = vmatprep.subr.mxu0 0.0
      %699 = vmatpush1.msra.mxu0 0.0
      %700 = vmatprep.subr.mxu0 0.0
      %701 = vmatpush1.msra.mxu0 0.0
      %702 = vmatprep.subr.mxu0 0.0
      %703 = vmatpush1.msra.mxu0 0.0
      %704 = vmatprep.subr.mxu0 0.0
      %705 = vmatpush1.msra.mxu0 0.0
      %706 = vmatprep.mubr.f32.mxu0 0.0
      %707 = vmatmul.mubr.f32.gmra.mrb[0].mxu0 %v630
      %v708 = vpop.f32.mrb[0].mxu0
      %v709 = vadd.f32 0.0, %v708
      %v710 = vpop.f32.mrb[0].mxu0
      %v711 = vadd.f32 0.0, %v710
      %712 = vdwg.mxu0
      %713 = vmatprep.subr.mxu0 0.0
      %714 = vmatpush1.msra.mxu0 %v615
      %715 = vmatprep.subr.mxu0 0.0
      %716 = vmatpush1.msra.mxu0 %v618
      %717 = vmatprep.subr.mxu0 0.0
      %718 = vmatpush1.msra.mxu0 %v621
      %719 = vmatprep.subr.mxu0 0.0
      %720 = vmatpush1.msra.mxu0 %v624
      %721 = vmatprep.subr.mxu0 0.0
      %722 = vmatpush1.msra.mxu0 %v640
      %723 = vmatprep.subr.mxu0 0.0
      %724 = vmatpush1.msra.mxu0 0.0
      %725 = vmatprep.subr.mxu0 0.0
      %726 = vmatpush1.msra.mxu0 0.0
      %727 = vmatprep.subr.mxu0 0.0
      %728 = vmatpush1.msra.mxu0 0.0
      %729 = vmatprep.subr.mxu0 0.0
      %730 = vmatpush1.msra.mxu0 0.0
      %731 = vmatprep.subr.mxu0 0.0
      %732 = vmatpush1.msra.mxu0 0.0
      %733 = vmatprep.subr.mxu0 0.0
      %734 = vmatpush1.msra.mxu0 0.0
      %735 = vmatprep.subr.mxu0 0.0
      %736 = vmatpush1.msra.mxu0 0.0
      %737 = vmatprep.subr.mxu0 0.0
      %738 = vmatpush1.msra.mxu0 0.0
      %739 = vmatprep.subr.mxu0 0.0
      %740 = vmatpush1.msra.mxu0 0.0
      %741 = vmatprep.subr.mxu0 0.0
      %742 = vmatpush1.msra.mxu0 0.0
      %743 = vmatprep.subr.mxu0 0.0
      %744 = vmatpush1.msra.mxu0 0.0
      %745 = vmatprep.subr.mxu0 0.0
      %746 = vmatpush1.msra.mxu0 0.0
      %747 = vmatprep.subr.mxu0 0.0
      %748 = vmatpush1.msra.mxu0 0.0
      %749 = vmatprep.subr.mxu0 0.0
      %750 = vmatpush1.msra.mxu0 0.0
      %751 = vmatprep.subr.mxu0 0.0
      %752 = vmatpush1.msra.mxu0 0.0
      %753 = vmatprep.subr.mxu0 0.0
      %754 = vmatpush1.msra.mxu0 0.0
      %755 = vmatprep.subr.mxu0 0.0
      %756 = vmatpush1.msra.mxu0 0.0
      %757 = vmatprep.subr.mxu0 0.0
      %758 = vmatpush1.msra.mxu0 0.0
      %759 = vmatprep.subr.mxu0 0.0
      %760 = vmatpush1.msra.mxu0 0.0
      %761 = vmatprep.subr.mxu0 0.0
      %762 = vmatpush1.msra.mxu0 0.0
      %763 = vmatprep.subr.mxu0 0.0
      %764 = vmatpush1.msra.mxu0 0.0
      %765 = vmatprep.subr.mxu0 0.0
      %766 = vmatpush1.msra.mxu0 0.0
      %767 = vmatprep.subr.mxu0 0.0
      %768 = vmatpush1.msra.mxu0 0.0
      %769 = vmatprep.subr.mxu0 0.0
      %770 = vmatpush1.msra.mxu0 0.0
      %771 = vmatprep.subr.mxu0 0.0
      %772 = vmatpush1.msra.mxu0 0.0
      %773 = vmatprep.subr.mxu0 0.0
      %774 = vmatpush1.msra.mxu0 0.0
      %775 = vmatprep.subr.mxu0 0.0
      %776 = vmatpush1.msra.mxu0 0.0
      %777 = vmatprep.mubr.f32.mxu0 0.0
      %778 = vmatmul.mubr.f32.gmra.mrb[0].mxu0 %v630
      %v779 = vpop.f32.mrb[0].mxu0
      %v780 = vadd.f32 0.0, %v779
      %v781 = vpop.f32.mrb[0].mxu0
      %782 = vdwg.mxu0
      %vm783 = vcmp.ge.f32.partialorder %v246, 1.0
      %vm784 = vcmp.ge.f32.partialorder %v247, 1.0
      %v787 = vcombine.low %v709, %v711
      %v789 = vsel %vm783, %v787, 0.0
      %v790 = vsel %vm784, %v780, 0.0
      %v791 = vadd.f32 %v248, %v789
      %v792 = vadd.f32 %v249, %v790
      %v795 = vcombine.high %v791, %v791
      %796 = vrot.lane.b32.xlu0 %v791, 19
      %v797 = vpop.permute.xlu0 %796
      %798 = vrot.lane.b32.xlu0 %v795, 19
      %v799 = vpop.permute.xlu0 %798
      %800 = vrot.lane.b32.xlu0 %v792, 19
      %v801 = vpop.permute.xlu0 %800
      %v802 = vsel %vm259, %v797, %v799
      %v803 = vsel %vm259, %v799, %v801
      %807 = vst.msk [vmem:[#allocation2] sm:$0xf] %vm265, %v797
      %808 = vst [vmem:[#allocation2 + $0x8] sm:$0xf] %v802
      %809 = vst [vmem:[#allocation2 + $0x10] sm:$0xf] %v803
      %v810 = vcombine.low %v791, %v791
      %v811 = vcombine.low %v792, %v792
      %812 = vrot.lane.b32.xlu0 %v810, 18
      %v813 = vpop.permute.xlu0 %812
      %814 = vrot.lane.b32.xlu0 %v791, 18
      %v815 = vpop.permute.xlu0 %814
      %816 = vrot.lane.b32.xlu0 %v811, 18
      %v817 = vpop.permute.xlu0 %816
      %v818 = vsel %vm277, %v813, %v815
      %v819 = vsel %vm277, %v815, %v817
      %823 = vst.msk [vmem:[#allocation2] sm:$0xf0] %vm283, %v813
      %824 = vst [vmem:[#allocation2 + $0x8] sm:$0xf0] %v818
      %825 = vst [vmem:[#allocation2 + $0x10] sm:$0xf0] %v819
      %826 = vrot.lane.b32.xlu0 %v791, 17
      %v827 = vpop.permute.xlu0 %826
      %828 = vrot.lane.b32.xlu0 %v795, 17
      %v829 = vpop.permute.xlu0 %828
      %830 = vrot.lane.b32.xlu0 %v792, 17
      %v831 = vpop.permute.xlu0 %830
      %v832 = vsel %vm293, %v827, %v829
      %v833 = vsel %vm293, %v829, %v831
      %837 = vst.msk [vmem:[#allocation2 + $0x18] sm:$0xf] %vm299, %v827
      %838 = vst [vmem:[#allocation2 + $0x20] sm:$0xf] %v832
      %839 = vst [vmem:[#allocation2 + $0x28] sm:$0xf] %v833
      %840 = vrot.lane.b32.xlu0 %v810, 1
      %v841 = vpop.permute.xlu0 %840
      %842 = vrot.lane.b32.xlu0 %v791, 1
      %v843 = vpop.permute.xlu0 %842
      %844 = vrot.lane.b32.xlu0 %v811, 1
      %v845 = vpop.permute.xlu0 %844
      %v846 = vsel %vm309, %v841, %v843
      %v847 = vsel %vm309, %v843, %v845
      %851 = vst.msk [vmem:[#allocation2 + $0x18] sm:$0xf0] %vm315, %v841
      %852 = vst [vmem:[#allocation2 + $0x20] sm:$0xf0] %v846
      %853 = vst [vmem:[#allocation2 + $0x28] sm:$0xf0] %v847
      %855 = vst [vmem:[#allocation2 + $0x30] sm:$0xf] %v791
      %856 = vst [vmem:[#allocation2 + $0x38] sm:$0xf] %v795
      %857 = vst [vmem:[#allocation2 + $0x40] sm:$0xf] %v792
      %858 = vrot.lane.b32.xlu0 %v810, 127
      %v859 = vpop.permute.xlu0 %858
      %860 = vrot.lane.b32.xlu0 %v791, 127
      %v861 = vpop.permute.xlu0 %860
      %862 = vrot.lane.b32.xlu0 %v811, 127
      %v863 = vpop.permute.xlu0 %862
      %v864 = vsel %vm329, %v859, %v861
      %v865 = vsel %vm329, %v861, %v863
      %869 = vst [vmem:[#allocation2 + $0x30] sm:$0xf0] %v864
      %870 = vst [vmem:[#allocation2 + $0x38] sm:$0xf0] %v865
      %871 = vst.msk [vmem:[#allocation2 + $0x40] sm:$0xf0] %vm337, %v863
      %872 = vrot.lane.b32.xlu0 %v791, 111
      %v873 = vpop.permute.xlu0 %872
      %874 = vrot.lane.b32.xlu0 %v795, 111
      %v875 = vpop.permute.xlu0 %874
      %876 = vrot.lane.b32.xlu0 %v792, 111
      %v877 = vpop.permute.xlu0 %876
      %v878 = vsel %vm345, %v873, %v875
      %v879 = vsel %vm345, %v875, %v877
      %883 = vst [vmem:[#allocation2 + $0x48] sm:$0xf] %v878
      %884 = vst [vmem:[#allocation2 + $0x50] sm:$0xf] %v879
      %885 = vst.msk [vmem:[#allocation2 + $0x58] sm:$0xf] %vm353, %v877
      %886 = vrot.lane.b32.xlu0 %v810, 110
      %v887 = vpop.permute.xlu0 %886
      %888 = vrot.lane.b32.xlu0 %v791, 110
      %v889 = vpop.permute.xlu0 %888
      %890 = vrot.lane.b32.xlu0 %v811, 110
      %v891 = vpop.permute.xlu0 %890
      %v892 = vsel %vm361, %v887, %v889
      %v893 = vsel %vm361, %v889, %v891
      %897 = vst [vmem:[#allocation2 + $0x48] sm:$0xf0] %v892
      %898 = vst [vmem:[#allocation2 + $0x50] sm:$0xf0] %v893
      %899 = vst.msk [vmem:[#allocation2 + $0x58] sm:$0xf0] %vm369, %v891
      %900 = vrot.lane.b32.xlu0 %v791, 109
      %v901 = vpop.permute.xlu0 %900
      %902 = vrot.lane.b32.xlu0 %v795, 109
      %v903 = vpop.permute.xlu0 %902
      %904 = vrot.lane.b32.xlu0 %v792, 109
      %v905 = vpop.permute.xlu0 %904
      %v906 = vsel %vm377, %v901, %v903
      %v907 = vsel %vm377, %v903, %v905
      %911 = vst [vmem:[#allocation2 + $0x60] sm:$0xf] %v906
      %912 = vst [vmem:[#allocation2 + $0x68] sm:$0xf] %v907
      %913 = vst.msk [vmem:[#allocation2 + $0x70] sm:$0xf] %vm385, %v905
      %v914 = vld [vmem:[#allocation2] sm:$0xff]
      %v915 = vld [vmem:[#allocation2 + $0x8] sm:$0xff]
      %v916 = vld [vmem:[#allocation2 + $0x10] sm:$0xff]
      %v917 = vld [vmem:[#allocation2 + $0x18] sm:$0xff]
      %v918 = vld [vmem:[#allocation2 + $0x20] sm:$0xff]
      %v919 = vld [vmem:[#allocation2 + $0x28] sm:$0xff]
      %v920 = vld [vmem:[#allocation2 + $0x30] sm:$0xff]
      %v921 = vld [vmem:[#allocation2 + $0x38] sm:$0xff]
      %v922 = vld [vmem:[#allocation2 + $0x40] sm:$0xff]
      %v923 = vld [vmem:[#allocation2 + $0x48] sm:$0xff]
      %v924 = vld [vmem:[#allocation2 + $0x50] sm:$0xff]
      %v925 = vld [vmem:[#allocation2 + $0x58] sm:$0xff]
      %v926 = vld [vmem:[#allocation2 + $0x60] sm:$0x1f]
      %v927 = vld [vmem:[#allocation2 + $0x68] sm:$0x1f]
      %v928 = vld [vmem:[#allocation2 + $0x70] sm:$0x1f]
      %v930 = vsel %vm418, %v926, 0
      %v933 = vsel %vm418, %v927, 0
      %v936 = vsel %vm418, %v928, 0
      %938 = vmatprep.subr.mxu0 %v915
      %939 = vmatpush1.msra.mxu0 %v914
      %940 = vmatprep.subr.mxu0 %v918
      %941 = vmatpush1.msra.mxu0 %v917
      %942 = vmatprep.subr.mxu0 %v921
      %943 = vmatpush1.msra.mxu0 %v920
      %944 = vmatprep.subr.mxu0 %v924
      %945 = vmatpush1.msra.mxu0 %v923
      %946 = vmatprep.subr.mxu0 %v933
      %947 = vmatpush1.msra.mxu0 %v930
      %948 = vmatprep.subr.mxu0 0.0
      %949 = vmatpush1.msra.mxu0 0.0
      %950 = vmatprep.subr.mxu0 0.0
      %951 = vmatpush1.msra.mxu0 0.0
      %952 = vmatprep.subr.mxu0 0.0
      %953 = vmatpush1.msra.mxu0 0.0
      %954 = vmatprep.subr.mxu0 0.0
      %955 = vmatpush1.msra.mxu0 0.0
      %956 = vmatprep.subr.mxu0 0.0
      %957 = vmatpush1.msra.mxu0 0.0
      %958 = vmatprep.subr.mxu0 0.0
      %959 = vmatpush1.msra.mxu0 0.0
      %960 = vmatprep.subr.mxu0 0.0
      %961 = vmatpush1.msra.mxu0 0.0
      %962 = vmatprep.subr.mxu0 0.0
      %963 = vmatpush1.msra.mxu0 0.0
      %964 = vmatprep.subr.mxu0 0.0
      %965 = vmatpush1.msra.mxu0 0.0
      %966 = vmatprep.subr.mxu0 0.0
      %967 = vmatpush1.msra.mxu0 0.0
      %968 = vmatprep.subr.mxu0 0.0
      %969 = vmatpush1.msra.mxu0 0.0
      %970 = vmatprep.subr.mxu0 0.0
      %971 = vmatpush1.msra.mxu0 0.0
      %972 = vmatprep.subr.mxu0 0.0
      %973 = vmatpush1.msra.mxu0 0.0
      %974 = vmatprep.subr.mxu0 0.0
      %975 = vmatpush1.msra.mxu0 0.0
      %976 = vmatprep.subr.mxu0 0.0
      %977 = vmatpush1.msra.mxu0 0.0
      %978 = vmatprep.subr.mxu0 0.0
      %979 = vmatpush1.msra.mxu0 0.0
      %980 = vmatprep.subr.mxu0 0.0
      %981 = vmatpush1.msra.mxu0 0.0
      %982 = vmatprep.subr.mxu0 0.0
      %983 = vmatpush1.msra.mxu0 0.0
      %984 = vmatprep.subr.mxu0 0.0
      %985 = vmatpush1.msra.mxu0 0.0
      %986 = vmatprep.subr.mxu0 0.0
      %987 = vmatpush1.msra.mxu0 0.0
      %988 = vmatprep.subr.mxu0 0.0
      %989 = vmatpush1.msra.mxu0 0.0
      %990 = vmatprep.subr.mxu0 0.0
      %991 = vmatpush1.msra.mxu0 0.0
      %992 = vmatprep.subr.mxu0 0.0
      %993 = vmatpush1.msra.mxu0 0.0
      %994 = vmatprep.subr.mxu0 0.0
      %995 = vmatpush1.msra.mxu0 0.0
      %996 = vmatprep.subr.mxu0 0.0
      %997 = vmatpush1.msra.mxu0 0.0
      %998 = vmatprep.subr.mxu0 0.0
      %999 = vmatpush1.msra.mxu0 0.0
      %1000 = vmatprep.subr.mxu0 0.0
      %1001 = vmatpush1.msra.mxu0 0.0
      %1002 = vmatprep.mubr.f32.mxu0 0.0
      %1003 = vmatmul.mubr.f32.gmra.mrb[0].mxu0 %v404
      %v1004 = vpop.f32.mrb[0].mxu0
      %v1005 = vadd.f32 0.0, %v1004
      %v1006 = vpop.f32.mrb[0].mxu0
      %v1007 = vadd.f32 0.0, %v1006
      %1008 = vmatprep.mubr.f32.mxu0 0.0
      %1009 = vmatmul.mubr.f32.gmra.mrb[0].mxu0 %v407
      %v1010 = vpop.f32.mrb[0].mxu0
      %v1011 = vadd.f32 0.0, %v1010
      %v1012 = vpop.f32.mrb[0].mxu0
      %v1013 = vadd.f32 0.0, %v1012
      %1014 = vmatprep.mubr.f32.mxu0 0.0
      %1015 = vmatmul.mubr.f32.gmra.mrb[0].mxu0 %v410
      %v1016 = vpop.f32.mrb[0].mxu0
      %v1017 = vadd.f32 0.0, %v1016
      %v1018 = vpop.f32.mrb[0].mxu0
      %v1019 = vadd.f32 0.0, %v1018
      %1020 = vmatprep.mubr.f32.mxu0 0.0
      %1021 = vmatmul.mubr.f32.gmra.mrb[0].mxu0 %v413
      %v1022 = vpop.f32.mrb[0].mxu0
      %v1023 = vadd.f32 0.0, %v1022
      %v1024 = vpop.f32.mrb[0].mxu0
      %v1025 = vadd.f32 0.0, %v1024
      %1026 = vmatprep.mubr.f32.mxu0 0.0
      %1027 = vmatmul.mubr.f32.gmra.mrb[0].mxu0 %v416
      %v1028 = vpop.f32.mrb[0].mxu0
      %v1029 = vadd.f32 0.0, %v1028
      %v1030 = vpop.f32.mrb[0].mxu0
      %v1031 = vadd.f32 0.0, %v1030
      %1032 = vdwg.mxu0
      %1033 = vmatprep.subr.mxu0 0.0
      %1034 = vmatpush1.msra.mxu0 %v916
      %1035 = vmatprep.subr.mxu0 0.0
      %1036 = vmatpush1.msra.mxu0 %v919
      %1037 = vmatprep.subr.mxu0 0.0
      %1038 = vmatpush1.msra.mxu0 %v922
      %1039 = vmatprep.subr.mxu0 0.0
      %1040 = vmatpush1.msra.mxu0 %v925
      %1041 = vmatprep.subr.mxu0 0.0
      %1042 = vmatpush1.msra.mxu0 %v936
      %1043 = vmatprep.subr.mxu0 0.0
      %1044 = vmatpush1.msra.mxu0 0.0
      %1045 = vmatprep.subr.mxu0 0.0
      %1046 = vmatpush1.msra.mxu0 0.0
      %1047 = vmatprep.subr.mxu0 0.0
      %1048 = vmatpush1.msra.mxu0 0.0
      %1049 = vmatprep.subr.mxu0 0.0
      %1050 = vmatpush1.msra.mxu0 0.0
      %1051 = vmatprep.subr.mxu0 0.0
      %1052 = vmatpush1.msra.mxu0 0.0
      %1053 = vmatprep.subr.mxu0 0.0
      %1054 = vmatpush1.msra.mxu0 0.0
      %1055 = vmatprep.subr.mxu0 0.0
      %1056 = vmatpush1.msra.mxu0 0.0
      %1057 = vmatprep.subr.mxu0 0.0
      %1058 = vmatpush1.msra.mxu0 0.0
      %1059 = vmatprep.subr.mxu0 0.0
      %1060 = vmatpush1.msra.mxu0 0.0
      %1061 = vmatprep.subr.mxu0 0.0
      %1062 = vmatpush1.msra.mxu0 0.0
      %1063 = vmatprep.subr.mxu0 0.0
      %1064 = vmatpush1.msra.mxu0 0.0
      %1065 = vmatprep.subr.mxu0 0.0
      %1066 = vmatpush1.msra.mxu0 0.0
      %1067 = vmatprep.subr.mxu0 0.0
      %1068 = vmatpush1.msra.mxu0 0.0
      %1069 = vmatprep.subr.mxu0 0.0
      %1070 = vmatpush1.msra.mxu0 0.0
      %1071 = vmatprep.subr.mxu0 0.0
      %1072 = vmatpush1.msra.mxu0 0.0
      %1073 = vmatprep.subr.mxu0 0.0
      %1074 = vmatpush1.msra.mxu0 0.0
      %1075 = vmatprep.subr.mxu0 0.0
      %1076 = vmatpush1.msra.mxu0 0.0
      %1077 = vmatprep.subr.mxu0 0.0
      %1078 = vmatpush1.msra.mxu0 0.0
      %1079 = vmatprep.subr.mxu0 0.0
      %1080 = vmatpush1.msra.mxu0 0.0
      %1081 = vmatprep.subr.mxu0 0.0
      %1082 = vmatpush1.msra.mxu0 0.0
      %1083 = vmatprep.subr.mxu0 0.0
      %1084 = vmatpush1.msra.mxu0 0.0
      %1085 = vmatprep.subr.mxu0 0.0
      %1086 = vmatpush1.msra.mxu0 0.0
      %1087 = vmatprep.subr.mxu0 0.0
      %1088 = vmatpush1.msra.mxu0 0.0
      %1089 = vmatprep.subr.mxu0 0.0
      %1090 = vmatpush1.msra.mxu0 0.0
      %1091 = vmatprep.subr.mxu0 0.0
      %1092 = vmatpush1.msra.mxu0 0.0
      %1093 = vmatprep.subr.mxu0 0.0
      %1094 = vmatpush1.msra.mxu0 0.0
      %1095 = vmatprep.subr.mxu0 0.0
      %1096 = vmatpush1.msra.mxu0 0.0
      %1097 = vmatprep.mubr.f32.mxu0 0.0
      %1098 = vmatmul.mubr.f32.gmra.mrb[0].mxu0 %v404
      %v1099 = vpop.f32.mrb[0].mxu0
      %v1100 = vadd.f32 0.0, %v1099
      %v1101 = vpop.f32.mrb[0].mxu0
      %1102 = vmatprep.mubr.f32.mxu0 0.0
      %1103 = vmatmul.mubr.f32.gmra.mrb[0].mxu0 %v407
      %v1104 = vpop.f32.mrb[0].mxu0
      %v1105 = vadd.f32 0.0, %v1104
      %v1106 = vpop.f32.mrb[0].mxu0
      %1107 = vmatprep.mubr.f32.mxu0 0.0
      %1108 = vmatmul.mubr.f32.gmra.mrb[0].mxu0 %v410
      %v1109 = vpop.f32.mrb[0].mxu0
      %v1110 = vadd.f32 0.0, %v1109
      %v1111 = vpop.f32.mrb[0].mxu0
      %1112 = vmatprep.mubr.f32.mxu0 0.0
      %1113 = vmatmul.mubr.f32.gmra.mrb[0].mxu0 %v413
      %v1114 = vpop.f32.mrb[0].mxu0
      %v1115 = vadd.f32 0.0, %v1114
      %v1116 = vpop.f32.mrb[0].mxu0
      %1117 = vmatprep.mubr.f32.mxu0 0.0
      %1118 = vmatmul.mubr.f32.gmra.mrb[0].mxu0 %v416
      %v1119 = vpop.f32.mrb[0].mxu0
      %v1120 = vadd.f32 0.0, %v1119
      %v1121 = vpop.f32.mrb[0].mxu0
      %1122 = vdwg.mxu0
      %v1123 = vmax.f32 %v1005, 0.0
      %v1124 = vmax.f32 %v1007, 0.0
      %v1125 = vmax.f32 %v1100, 0.0
      %v1126 = vmax.f32 %v1011, 0.0
      %v1127 = vmax.f32 %v1013, 0.0
      %v1128 = vmax.f32 %v1105, 0.0
      %v1129 = vmax.f32 %v1017, 0.0
      %v1130 = vmax.f32 %v1019, 0.0
      %v1131 = vmax.f32 %v1110, 0.0
      %v1132 = vmax.f32 %v1023, 0.0
      %v1133 = vmax.f32 %v1025, 0.0
      %v1134 = vmax.f32 %v1115, 0.0
      %v1135 = vmax.f32 %v1029, 0.0
      %v1136 = vmax.f32 %v1031, 0.0
      %v1137 = vmax.f32 %v1120, 0.0
      %v1139 = vsel %vm632, %v1135, 0
      %v1142 = vsel %vm632, %v1136, 0
      %v1145 = vsel %vm632, %v1137, 0
      %1147 = vmatprep.subr.mxu0 %v1124
      %1148 = vmatpush1.msra.mxu0 %v1123
      %1149 = vmatprep.subr.mxu0 %v1127
      %1150 = vmatpush1.msra.mxu0 %v1126
      %1151 = vmatprep.subr.mxu0 %v1130
      %1152 = vmatpush1.msra.mxu0 %v1129
      %1153 = vmatprep.subr.mxu0 %v1133
      %1154 = vmatpush1.msra.mxu0 %v1132
      %1155 = vmatprep.subr.mxu0 %v1142
      %1156 = vmatpush1.msra.mxu0 %v1139
      %1157 = vmatprep.subr.mxu0 0.0
      %1158 = vmatpush1.msra.mxu0 0.0
      %1159 = vmatprep.subr.mxu0 0.0
      %1160 = vmatpush1.msra.mxu0 0.0
      %1161 = vmatprep.subr.mxu0 0.0
      %1162 = vmatpush1.msra.mxu0 0.0
      %1163 = vmatprep.subr.mxu0 0.0
      %1164 = vmatpush1.msra.mxu0 0.0
      %1165 = vmatprep.subr.mxu0 0.0
      %1166 = vmatpush1.msra.mxu0 0.0
      %1167 = vmatprep.subr.mxu0 0.0
      %1168 = vmatpush1.msra.mxu0 0.0
      %1169 = vmatprep.subr.mxu0 0.0
      %1170 = vmatpush1.msra.mxu0 0.0
      %1171 = vmatprep.subr.mxu0 0.0
      %1172 = vmatpush1.msra.mxu0 0.0
      %1173 = vmatprep.subr.mxu0 0.0
      %1174 = vmatpush1.msra.mxu0 0.0
      %1175 = vmatprep.subr.mxu0 0.0
      %1176 = vmatpush1.msra.mxu0 0.0
      %1177 = vmatprep.subr.mxu0 0.0
      %1178 = vmatpush1.msra.mxu0 0.0
      %1179 = vmatprep.subr.mxu0 0.0
      %1180 = vmatpush1.msra.mxu0 0.0
      %1181 = vmatprep.subr.mxu0 0.0
      %1182 = vmatpush1.msra.mxu0 0.0
      %1183 = vmatprep.subr.mxu0 0.0
      %1184 = vmatpush1.msra.mxu0 0.0
      %1185 = vmatprep.subr.mxu0 0.0
      %1186 = vmatpush1.msra.mxu0 0.0
      %1187 = vmatprep.subr.mxu0 0.0
      %1188 = vmatpush1.msra.mxu0 0.0
      %1189 = vmatprep.subr.mxu0 0.0
      %1190 = vmatpush1.msra.mxu0 0.0
      %1191 = vmatprep.subr.mxu0 0.0
      %1192 = vmatpush1.msra.mxu0 0.0
      %1193 = vmatprep.subr.mxu0 0.0
      %1194 = vmatpush1.msra.mxu0 0.0
      %1195 = vmatprep.subr.mxu0 0.0
      %1196 = vmatpush1.msra.mxu0 0.0
      %1197 = vmatprep.subr.mxu0 0.0
      %1198 = vmatpush1.msra.mxu0 0.0
      %1199 = vmatprep.subr.mxu0 0.0
      %1200 = vmatpush1.msra.mxu0 0.0
      %1201 = vmatprep.subr.mxu0 0.0
      %1202 = vmatpush1.msra.mxu0 0.0
      %1203 = vmatprep.subr.mxu0 0.0
      %1204 = vmatpush1.msra.mxu0 0.0
      %1205 = vmatprep.subr.mxu0 0.0
      %1206 = vmatpush1.msra.mxu0 0.0
      %1207 = vmatprep.subr.mxu0 0.0
      %1208 = vmatpush1.msra.mxu0 0.0
      %1209 = vmatprep.subr.mxu0 0.0
      %1210 = vmatpush1.msra.mxu0 0.0
      %1211 = vmatprep.mubr.f32.mxu0 0.0
      %1212 = vmatmul.mubr.f32.gmra.mrb[0].mxu0 %v630
      %v1213 = vpop.f32.mrb[0].mxu0
      %v1214 = vadd.f32 0.0, %v1213
      %v1215 = vpop.f32.mrb[0].mxu0
      %v1216 = vadd.f32 0.0, %v1215
      %1217 = vdwg.mxu0
      %1218 = vmatprep.subr.mxu0 0.0
      %1219 = vmatpush1.msra.mxu0 %v1125
      %1220 = vmatprep.subr.mxu0 0.0
      %1221 = vmatpush1.msra.mxu0 %v1128
      %1222 = vmatprep.subr.mxu0 0.0
      %1223 = vmatpush1.msra.mxu0 %v1131
      %1224 = vmatprep.subr.mxu0 0.0
      %1225 = vmatpush1.msra.mxu0 %v1134
      %1226 = vmatprep.subr.mxu0 0.0
      %1227 = vmatpush1.msra.mxu0 %v1145
      %1228 = vmatprep.subr.mxu0 0.0
      %1229 = vmatpush1.msra.mxu0 0.0
      %1230 = vmatprep.subr.mxu0 0.0
      %1231 = vmatpush1.msra.mxu0 0.0
      %1232 = vmatprep.subr.mxu0 0.0
      %1233 = vmatpush1.msra.mxu0 0.0
      %1234 = vmatprep.subr.mxu0 0.0
      %1235 = vmatpush1.msra.mxu0 0.0
      %1236 = vmatprep.subr.mxu0 0.0
      %1237 = vmatpush1.msra.mxu0 0.0
      %1238 = vmatprep.subr.mxu0 0.0
      %1239 = vmatpush1.msra.mxu0 0.0
      %1240 = vmatprep.subr.mxu0 0.0
      %1241 = vmatpush1.msra.mxu0 0.0
      %1242 = vmatprep.subr.mxu0 0.0
      %1243 = vmatpush1.msra.mxu0 0.0
      %1244 = vmatprep.subr.mxu0 0.0
      %1245 = vmatpush1.msra.mxu0 0.0
      %1246 = vmatprep.subr.mxu0 0.0
      %1247 = vmatpush1.msra.mxu0 0.0
      %1248 = vmatprep.subr.mxu0 0.0
      %1249 = vmatpush1.msra.mxu0 0.0
      %1250 = vmatprep.subr.mxu0 0.0
      %1251 = vmatpush1.msra.mxu0 0.0
      %1252 = vmatprep.subr.mxu0 0.0
      %1253 = vmatpush1.msra.mxu0 0.0
      %1254 = vmatprep.subr.mxu0 0.0
      %1255 = vmatpush1.msra.mxu0 0.0
      %1256 = vmatprep.subr.mxu0 0.0
      %1257 = vmatpush1.msra.mxu0 0.0
      %1258 = vmatprep.subr.mxu0 0.0
      %1259 = vmatpush1.msra.mxu0 0.0
      %1260 = vmatprep.subr.mxu0 0.0
      %1261 = vmatpush1.msra.mxu0 0.0
      %1262 = vmatprep.subr.mxu0 0.0
      %1263 = vmatpush1.msra.mxu0 0.0
      %1264 = vmatprep.subr.mxu0 0.0
      %1265 = vmatpush1.msra.mxu0 0.0
      %1266 = vmatprep.subr.mxu0 0.0
      %1267 = vmatpush1.msra.mxu0 0.0
      %1268 = vmatprep.subr.mxu0 0.0
      %1269 = vmatpush1.msra.mxu0 0.0
      %1270 = vmatprep.subr.mxu0 0.0
      %1271 = vmatpush1.msra.mxu0 0.0
      %1272 = vmatprep.subr.mxu0 0.0
      %1273 = vmatpush1.msra.mxu0 0.0
      %1274 = vmatprep.subr.mxu0 0.0
      %1275 = vmatpush1.msra.mxu0 0.0
      %1276 = vmatprep.subr.mxu0 0.0
      %1277 = vmatpush1.msra.mxu0 0.0
      %1278 = vmatprep.subr.mxu0 0.0
      %1279 = vmatpush1.msra.mxu0 0.0
      %1280 = vmatprep.subr.mxu0 0.0
      %1281 = vmatpush1.msra.mxu0 0.0
      %1282 = vmatprep.mubr.f32.mxu0 0.0
      %1283 = vmatmul.mubr.f32.gmra.mrb[0].mxu0 %v630
      %v1284 = vpop.f32.mrb[0].mxu0
      %v1285 = vadd.f32 0.0, %v1284
      %v1286 = vpop.f32.mrb[0].mxu0
      %1287 = vdwg.mxu0
      %v1290 = vcombine.low %v1214, %v1216
      %v1292 = vsel %vm783, %v1290, 0.0
      %v1293 = vsel %vm784, %v1285, 0.0
      %v1294 = vadd.f32 %v791, %v1292
      %v1295 = vadd.f32 %v792, %v1293
      %v1298 = vcombine.high %v1294, %v1294
      %1299 = vrot.lane.b32.xlu0 %v1294, 19
      %v1300 = vpop.permute.xlu0 %1299
      %1301 = vrot.lane.b32.xlu0 %v1298, 19
      %v1302 = vpop.permute.xlu0 %1301
      %1303 = vrot.lane.b32.xlu0 %v1295, 19
      %v1304 = vpop.permute.xlu0 %1303
      %v1305 = vsel %vm259, %v1300, %v1302
      %v1306 = vsel %vm259, %v1302, %v1304
      %1310 = vst.msk [vmem:[#allocation2] sm:$0xf] %vm265, %v1300
      %1311 = vst [vmem:[#allocation2 + $0x8] sm:$0xf] %v1305
      %1312 = vst [vmem:[#allocation2 + $0x10] sm:$0xf] %v1306
      %v1313 = vcombine.low %v1294, %v1294
      %v1314 = vcombine.low %v1295, %v1295
      %1315 = vrot.lane.b32.xlu0 %v1313, 18
      %v1316 = vpop.permute.xlu0 %1315
      %1317 = vrot.lane.b32.xlu0 %v1294, 18
      %v1318 = vpop.permute.xlu0 %1317
      %1319 = vrot.lane.b32.xlu0 %v1314, 18
      %v1320 = vpop.permute.xlu0 %1319
      %v1321 = vsel %vm277, %v1316, %v1318
      %v1322 = vsel %vm277, %v1318, %v1320
      %1326 = vst.msk [vmem:[#allocation2] sm:$0xf0] %vm283, %v1316
      %1327 = vst [vmem:[#allocation2 + $0x8] sm:$0xf0] %v1321
      %1328 = vst [vmem:[#allocation2 + $0x10] sm:$0xf0] %v1322
      %1329 = vrot.lane.b32.xlu0 %v1294, 17
      %v1330 = vpop.permute.xlu0 %1329
      %1331 = vrot.lane.b32.xlu0 %v1298, 17
      %v1332 = vpop.permute.xlu0 %1331
      %1333 = vrot.lane.b32.xlu0 %v1295, 17
      %v1334 = vpop.permute.xlu0 %1333
      %v1335 = vsel %vm293, %v1330, %v1332
      %v1336 = vsel %vm293, %v1332, %v1334
      %1340 = vst.msk [vmem:[#allocation2 + $0x18] sm:$0xf] %vm299, %v1330
      %1341 = vst [vmem:[#allocation2 + $0x20] sm:$0xf] %v1335
      %1342 = vst [vmem:[#allocation2 + $0x28] sm:$0xf] %v1336
      %1343 = vrot.lane.b32.xlu0 %v1313, 1
      %v1344 = vpop.permute.xlu0 %1343
      %1345 = vrot.lane.b32.xlu0 %v1294, 1
      %v1346 = vpop.permute.xlu0 %1345
      %1347 = vrot.lane.b32.xlu0 %v1314, 1
      %v1348 = vpop.permute.xlu0 %1347
      %v1349 = vsel %vm309, %v1344, %v1346
      %v1350 = vsel %vm309, %v1346, %v1348
      %1354 = vst.msk [vmem:[#allocation2 + $0x18] sm:$0xf0] %vm315, %v1344
      %1355 = vst [vmem:[#allocation2 + $0x20] sm:$0xf0] %v1349
      %1356 = vst [vmem:[#allocation2 + $0x28] sm:$0xf0] %v1350
      %1358 = vst [vmem:[#allocation2 + $0x30] sm:$0xf] %v1294
      %1359 = vst [vmem:[#allocation2 + $0x38] sm:$0xf] %v1298
      %1360 = vst [vmem:[#allocation2 + $0x40] sm:$0xf] %v1295
      %1361 = vrot.lane.b32.xlu0 %v1313, 127
      %v1362 = vpop.permute.xlu0 %1361
      %1363 = vrot.lane.b32.xlu0 %v1294, 127
      %v1364 = vpop.permute.xlu0 %1363
      %1365 = vrot.lane.b32.xlu0 %v1314, 127
      %v1366 = vpop.permute.xlu0 %1365
      %v1367 = vsel %vm329, %v1362, %v1364
      %v1368 = vsel %vm329, %v1364, %v1366
      %1372 = vst [vmem:[#allocation2 + $0x30] sm:$0xf0] %v1367
      %1373 = vst [vmem:[#allocation2 + $0x38] sm:$0xf0] %v1368
      %1374 = vst.msk [vmem:[#allocation2 + $0x40] sm:$0xf0] %vm337, %v1366
      %1375 = vrot.lane.b32.xlu0 %v1294, 111
      %v1376 = vpop.permute.xlu0 %1375
      %1377 = vrot.lane.b32.xlu0 %v1298, 111
      %v1378 = vpop.permute.xlu0 %1377
      %1379 = vrot.lane.b32.xlu0 %v1295, 111
      %v1380 = vpop.permute.xlu0 %1379
      %v1381 = vsel %vm345, %v1376, %v1378
      %v1382 = vsel %vm345, %v1378, %v1380
      %1386 = vst [vmem:[#allocation2 + $0x48] sm:$0xf] %v1381
      %1387 = vst [vmem:[#allocation2 + $0x50] sm:$0xf] %v1382
      %1388 = vst.msk [vmem:[#allocation2 + $0x58] sm:$0xf] %vm353, %v1380
      %1389 = vrot.lane.b32.xlu0 %v1313, 110
      %v1390 = vpop.permute.xlu0 %1389
      %1391 = vrot.lane.b32.xlu0 %v1294, 110
      %v1392 = vpop.permute.xlu0 %1391
      %1393 = vrot.lane.b32.xlu0 %v1314, 110
      %v1394 = vpop.permute.xlu0 %1393
      %v1395 = vsel %vm361, %v1390, %v1392
      %v1396 = vsel %vm361, %v1392, %v1394
      %1400 = vst [vmem:[#allocation2 + $0x48] sm:$0xf0] %v1395
      %1401 = vst [vmem:[#allocation2 + $0x50] sm:$0xf0] %v1396
      %1402 = vst.msk [vmem:[#allocation2 + $0x58] sm:$0xf0] %vm369, %v1394
      %1403 = vrot.lane.b32.xlu0 %v1294, 109
      %v1404 = vpop.permute.xlu0 %1403
      %1405 = vrot.lane.b32.xlu0 %v1298, 109
      %v1406 = vpop.permute.xlu0 %1405
      %1407 = vrot.lane.b32.xlu0 %v1295, 109
      %v1408 = vpop.permute.xlu0 %1407
      %v1409 = vsel %vm377, %v1404, %v1406
      %v1410 = vsel %vm377, %v1406, %v1408
      %1414 = vst [vmem:[#allocation2 + $0x60] sm:$0xf] %v1409
      %1415 = vst [vmem:[#allocation2 + $0x68] sm:$0xf] %v1410
      %1416 = vst.msk [vmem:[#allocation2 + $0x70] sm:$0xf] %vm385, %v1408
      %v1417 = vld [vmem:[#allocation2] sm:$0xff]
      %v1418 = vld [vmem:[#allocation2 + $0x8] sm:$0xff]
      %v1419 = vld [vmem:[#allocation2 + $0x10] sm:$0xff]
      %v1420 = vld [vmem:[#allocation2 + $0x18] sm:$0xff]
      %v1421 = vld [vmem:[#allocation2 + $0x20] sm:$0xff]
      %v1422 = vld [vmem:[#allocation2 + $0x28] sm:$0xff]
      %v1423 = vld [vmem:[#allocation2 + $0x30] sm:$0xff]
      %v1424 = vld [vmem:[#allocation2 + $0x38] sm:$0xff]
      %v1425 = vld [vmem:[#allocation2 + $0x40] sm:$0xff]
      %v1426 = vld [vmem:[#allocation2 + $0x48] sm:$0xff]
      %v1427 = vld [vmem:[#allocation2 + $0x50] sm:$0xff]
      %v1428 = vld [vmem:[#allocation2 + $0x58] sm:$0xff]
      %v1429 = vld [vmem:[#allocation2 + $0x60] sm:$0x1f]
      %v1430 = vld [vmem:[#allocation2 + $0x68] sm:$0x1f]
      %v1431 = vld [vmem:[#allocation2 + $0x70] sm:$0x1f]
      %v1433 = vsel %vm418, %v1429, 0
      %v1436 = vsel %vm418, %v1430, 0
      %v1439 = vsel %vm418, %v1431, 0
      %1441 = vmatprep.subr.mxu0 %v1418
      %1442 = vmatpush1.msra.mxu0 %v1417
      %1443 = vmatprep.subr.mxu0 %v1421
      %1444 = vmatpush1.msra.mxu0 %v1420
      %1445 = vmatprep.subr.mxu0 %v1424
      %1446 = vmatpush1.msra.mxu0 %v1423
      %1447 = vmatprep.subr.mxu0 %v1427
      %1448 = vmatpush1.msra.mxu0 %v1426
      %1449 = vmatprep.subr.mxu0 %v1436
      %1450 = vmatpush1.msra.mxu0 %v1433
      %1451 = vmatprep.subr.mxu0 0.0
      %1452 = vmatpush1.msra.mxu0 0.0
      %1453 = vmatprep.subr.mxu0 0.0
      %1454 = vmatpush1.msra.mxu0 0.0
      %1455 = vmatprep.subr.mxu0 0.0
      %1456 = vmatpush1.msra.mxu0 0.0
      %1457 = vmatprep.subr.mxu0 0.0
      %1458 = vmatpush1.msra.mxu0 0.0
      %1459 = vmatprep.subr.mxu0 0.0
      %1460 = vmatpush1.msra.mxu0 0.0
      %1461 = vmatprep.subr.mxu0 0.0
      %1462 = vmatpush1.msra.mxu0 0.0
      %1463 = vmatprep.subr.mxu0 0.0
      %1464 = vmatpush1.msra.mxu0 0.0
      %1465 = vmatprep.subr.mxu0 0.0
      %1466 = vmatpush1.msra.mxu0 0.0
      %1467 = vmatprep.subr.mxu0 0.0
      %1468 = vmatpush1.msra.mxu0 0.0
      %1469 = vmatprep.subr.mxu0 0.0
      %1470 = vmatpush1.msra.mxu0 0.0
      %1471 = vmatprep.subr.mxu0 0.0
      %1472 = vmatpush1.msra.mxu0 0.0
      %1473 = vmatprep.subr.mxu0 0.0
      %1474 = vmatpush1.msra.mxu0 0.0
      %1475 = vmatprep.subr.mxu0 0.0
      %1476 = vmatpush1.msra.mxu0 0.0
      %1477 = vmatprep.subr.mxu0 0.0
      %1478 = vmatpush1.msra.mxu0 0.0
      %1479 = vmatprep.subr.mxu0 0.0
      %1480 = vmatpush1.msra.mxu0 0.0
      %1481 = vmatprep.subr.mxu0 0.0
      %1482 = vmatpush1.msra.mxu0 0.0
      %1483 = vmatprep.subr.mxu0 0.0
      %1484 = vmatpush1.msra.mxu0 0.0
      %1485 = vmatprep.subr.mxu0 0.0
      %1486 = vmatpush1.msra.mxu0 0.0
      %1487 = vmatprep.subr.mxu0 0.0
      %1488 = vmatpush1.msra.mxu0 0.0
      %1489 = vmatprep.subr.mxu0 0.0
      %1490 = vmatpush1.msra.mxu0 0.0
      %1491 = vmatprep.subr.mxu0 0.0
      %1492 = vmatpush1.msra.mxu0 0.0
      %1493 = vmatprep.subr.mxu0 0.0
      %1494 = vmatpush1.msra.mxu0 0.0
      %1495 = vmatprep.subr.mxu0 0.0
      %1496 = vmatpush1.msra.mxu0 0.0
      %1497 = vmatprep.subr.mxu0 0.0
      %1498 = vmatpush1.msra.mxu0 0.0
      %1499 = vmatprep.subr.mxu0 0.0
      %1500 = vmatpush1.msra.mxu0 0.0
      %1501 = vmatprep.subr.mxu0 0.0
      %1502 = vmatpush1.msra.mxu0 0.0
      %1503 = vmatprep.subr.mxu0 0.0
      %1504 = vmatpush1.msra.mxu0 0.0
      %1505 = vmatprep.mubr.f32.mxu0 0.0
      %1506 = vmatmul.mubr.f32.gmra.mrb[0].mxu0 %v404
      %v1507 = vpop.f32.mrb[0].mxu0
      %v1508 = vadd.f32 0.0, %v1507
      %v1509 = vpop.f32.mrb[0].mxu0
      %v1510 = vadd.f32 0.0, %v1509
      %1511 = vmatprep.mubr.f32.mxu0 0.0
      %1512 = vmatmul.mubr.f32.gmra.mrb[0].mxu0 %v407
      %v1513 = vpop.f32.mrb[0].mxu0
      %v1514 = vadd.f32 0.0, %v1513
      %v1515 = vpop.f32.mrb[0].mxu0
      %v1516 = vadd.f32 0.0, %v1515
      %1517 = vmatprep.mubr.f32.mxu0 0.0
      %1518 = vmatmul.mubr.f32.gmra.mrb[0].mxu0 %v410
      %v1519 = vpop.f32.mrb[0].mxu0
      %v1520 = vadd.f32 0.0, %v1519
      %v1521 = vpop.f32.mrb[0].mxu0
      %v1522 = vadd.f32 0.0, %v1521
      %1523 = vmatprep.mubr.f32.mxu0 0.0
      %1524 = vmatmul.mubr.f32.gmra.mrb[0].mxu0 %v413
      %v1525 = vpop.f32.mrb[0].mxu0
      %v1526 = vadd.f32 0.0, %v1525
      %v1527 = vpop.f32.mrb[0].mxu0
      %v1528 = vadd.f32 0.0, %v1527
      %1529 = vmatprep.mubr.f32.mxu0 0.0
      %1530 = vmatmul.mubr.f32.gmra.mrb[0].mxu0 %v416
      %v1531 = vpop.f32.mrb[0].mxu0
      %v1532 = vadd.f32 0.0, %v1531
      %v1533 = vpop.f32.mrb[0].mxu0
      %v1534 = vadd.f32 0.0, %v1533
      %1535 = vdwg.mxu0
      %1536 = vmatprep.subr.mxu0 0.0
      %1537 = vmatpush1.msra.mxu0 %v1419
      %1538 = vmatprep.subr.mxu0 0.0
      %1539 = vmatpush1.msra.mxu0 %v1422
      %1540 = vmatprep.subr.mxu0 0.0
      %1541 = vmatpush1.msra.mxu0 %v1425
      %1542 = vmatprep.subr.mxu0 0.0
      %1543 = vmatpush1.msra.mxu0 %v1428
      %1544 = vmatprep.subr.mxu0 0.0
      %1545 = vmatpush1.msra.mxu0 %v1439
      %1546 = vmatprep.subr.mxu0 0.0
      %1547 = vmatpush1.msra.mxu0 0.0
      %1548 = vmatprep.subr.mxu0 0.0
      %1549 = vmatpush1.msra.mxu0 0.0
      %1550 = vmatprep.subr.mxu0 0.0
      %1551 = vmatpush1.msra.mxu0 0.0
      %1552 = vmatprep.subr.mxu0 0.0
      %1553 = vmatpush1.msra.mxu0 0.0
      %1554 = vmatprep.subr.mxu0 0.0
      %1555 = vmatpush1.msra.mxu0 0.0
      %1556 = vmatprep.subr.mxu0 0.0
      %1557 = vmatpush1.msra.mxu0 0.0
      %1558 = vmatprep.subr.mxu0 0.0
      %1559 = vmatpush1.msra.mxu0 0.0
      %1560 = vmatprep.subr.mxu0 0.0
      %1561 = vmatpush1.msra.mxu0 0.0
      %1562 = vmatprep.subr.mxu0 0.0
      %1563 = vmatpush1.msra.mxu0 0.0
      %1564 = vmatprep.subr.mxu0 0.0
      %1565 = vmatpush1.msra.mxu0 0.0
      %1566 = vmatprep.subr.mxu0 0.0
      %1567 = vmatpush1.msra.mxu0 0.0
      %1568 = vmatprep.subr.mxu0 0.0
      %1569 = vmatpush1.msra.mxu0 0.0
      %1570 = vmatprep.subr.mxu0 0.0
      %1571 = vmatpush1.msra.mxu0 0.0
      %1572 = vmatprep.subr.mxu0 0.0
      %1573 = vmatpush1.msra.mxu0 0.0
      %1574 = vmatprep.subr.mxu0 0.0
      %1575 = vmatpush1.msra.mxu0 0.0
      %1576 = vmatprep.subr.mxu0 0.0
      %1577 = vmatpush1.msra.mxu0 0.0
      %1578 = vmatprep.subr.mxu0 0.0
      %1579 = vmatpush1.msra.mxu0 0.0
      %1580 = vmatprep.subr.mxu0 0.0
      %1581 = vmatpush1.msra.mxu0 0.0
      %1582 = vmatprep.subr.mxu0 0.0
      %1583 = vmatpush1.msra.mxu0 0.0
      %1584 = vmatprep.subr.mxu0 0.0
      %1585 = vmatpush1.msra.mxu0 0.0
      %1586 = vmatprep.subr.mxu0 0.0
      %1587 = vmatpush1.msra.mxu0 0.0
      %1588 = vmatprep.subr.mxu0 0.0
      %1589 = vmatpush1.msra.mxu0 0.0
      %1590 = vmatprep.subr.mxu0 0.0
      %1591 = vmatpush1.msra.mxu0 0.0
      %1592 = vmatprep.subr.mxu0 0.0
      %1593 = vmatpush1.msra.mxu0 0.0
      %1594 = vmatprep.subr.mxu0 0.0
      %1595 = vmatpush1.msra.mxu0 0.0
      %1596 = vmatprep.subr.mxu0 0.0
      %1597 = vmatpush1.msra.mxu0 0.0
      %1598 = vmatprep.subr.mxu0 0.0
      %1599 = vmatpush1.msra.mxu0 0.0
      %1600 = vmatprep.mubr.f32.mxu0 0.0
      %1601 = vmatmul.mubr.f32.gmra.mrb[0].mxu0 %v404
      %v1602 = vpop.f32.mrb[0].mxu0
      %v1603 = vadd.f32 0.0, %v1602
      %v1604 = vpop.f32.mrb[0].mxu0
      %1605 = vmatprep.mubr.f32.mxu0 0.0
      %1606 = vmatmul.mubr.f32.gmra.mrb[0].mxu0 %v407
      %v1607 = vpop.f32.mrb[0].mxu0
      %v1608 = vadd.f32 0.0, %v1607
      %v1609 = vpop.f32.mrb[0].mxu0
      %1610 = vmatprep.mubr.f32.mxu0 0.0
      %1611 = vmatmul.mubr.f32.gmra.mrb[0].mxu0 %v410
      %v1612 = vpop.f32.mrb[0].mxu0
      %v1613 = vadd.f32 0.0, %v1612
      %v1614 = vpop.f32.mrb[0].mxu0
      %1615 = vmatprep.mubr.f32.mxu0 0.0
      %1616 = vmatmul.mubr.f32.gmra.mrb[0].mxu0 %v413
      %v1617 = vpop.f32.mrb[0].mxu0
      %v1618 = vadd.f32 0.0, %v1617
      %v1619 = vpop.f32.mrb[0].mxu0
      %1620 = vmatprep.mubr.f32.mxu0 0.0
      %1621 = vmatmul.mubr.f32.gmra.mrb[0].mxu0 %v416
      %v1622 = vpop.f32.mrb[0].mxu0
      %v1623 = vadd.f32 0.0, %v1622
      %v1624 = vpop.f32.mrb[0].mxu0
      %1625 = vdwg.mxu0
      %v1626 = vmax.f32 %v1508, 0.0
      %v1627 = vmax.f32 %v1510, 0.0
      %v1628 = vmax.f32 %v1603, 0.0
      %v1629 = vmax.f32 %v1514, 0.0
      %v1630 = vmax.f32 %v1516, 0.0
      %v1631 = vmax.f32 %v1608, 0.0
      %v1632 = vmax.f32 %v1520, 0.0
      %v1633 = vmax.f32 %v1522, 0.0
      %v1634 = vmax.f32 %v1613, 0.0
      %v1635 = vmax.f32 %v1526, 0.0
      %v1636 = vmax.f32 %v1528, 0.0
      %v1637 = vmax.f32 %v1618, 0.0
      %v1638 = vmax.f32 %v1532, 0.0
      %v1639 = vmax.f32 %v1534, 0.0
      %v1640 = vmax.f32 %v1623, 0.0
      %v1642 = vsel %vm632, %v1638, 0
      %v1645 = vsel %vm632, %v1639, 0
      %v1648 = vsel %vm632, %v1640, 0
      %1650 = vmatprep.subr.mxu0 %v1627
      %1651 = vmatpush1.msra.mxu0 %v1626
      %1652 = vmatprep.subr.mxu0 %v1630
      %1653 = vmatpush1.msra.mxu0 %v1629
      %1654 = vmatprep.subr.mxu0 %v1633
      %1655 = vmatpush1.msra.mxu0 %v1632
      %1656 = vmatprep.subr.mxu0 %v1636
      %1657 = vmatpush1.msra.mxu0 %v1635
      %1658 = vmatprep.subr.mxu0 %v1645
      %1659 = vmatpush1.msra.mxu0 %v1642
      %1660 = vmatprep.subr.mxu0 0.0
      %1661 = vmatpush1.msra.mxu0 0.0
      %1662 = vmatprep.subr.mxu0 0.0
      %1663 = vmatpush1.msra.mxu0 0.0
      %1664 = vmatprep.subr.mxu0 0.0
      %1665 = vmatpush1.msra.mxu0 0.0
      %1666 = vmatprep.subr.mxu0 0.0
      %1667 = vmatpush1.msra.mxu0 0.0
      %1668 = vmatprep.subr.mxu0 0.0
      %1669 = vmatpush1.msra.mxu0 0.0
      %1670 = vmatprep.subr.mxu0 0.0
      %1671 = vmatpush1.msra.mxu0 0.0
      %1672 = vmatprep.subr.mxu0 0.0
      %1673 = vmatpush1.msra.mxu0 0.0
      %1674 = vmatprep.subr.mxu0 0.0
      %1675 = vmatpush1.msra.mxu0 0.0
      %1676 = vmatprep.subr.mxu0 0.0
      %1677 = vmatpush1.msra.mxu0 0.0
      %1678 = vmatprep.subr.mxu0 0.0
      %1679 = vmatpush1.msra.mxu0 0.0
      %1680 = vmatprep.subr.mxu0 0.0
      %1681 = vmatpush1.msra.mxu0 0.0
      %1682 = vmatprep.subr.mxu0 0.0
      %1683 = vmatpush1.msra.mxu0 0.0
      %1684 = vmatprep.subr.mxu0 0.0
      %1685 = vmatpush1.msra.mxu0 0.0
      %1686 = vmatprep.subr.mxu0 0.0
      %1687 = vmatpush1.msra.mxu0 0.0
      %1688 = vmatprep.subr.mxu0 0.0
      %1689 = vmatpush1.msra.mxu0 0.0
      %1690 = vmatprep.subr.mxu0 0.0
      %1691 = vmatpush1.msra.mxu0 0.0
      %1692 = vmatprep.subr.mxu0 0.0
      %1693 = vmatpush1.msra.mxu0 0.0
      %1694 = vmatprep.subr.mxu0 0.0
      %1695 = vmatpush1.msra.mxu0 0.0
      %1696 = vmatprep.subr.mxu0 0.0
      %1697 = vmatpush1.msra.mxu0 0.0
      %1698 = vmatprep.subr.mxu0 0.0
      %1699 = vmatpush1.msra.mxu0 0.0
      %1700 = vmatprep.subr.mxu0 0.0
      %1701 = vmatpush1.msra.mxu0 0.0
      %1702 = vmatprep.subr.mxu0 0.0
      %1703 = vmatpush1.msra.mxu0 0.0
      %1704 = vmatprep.subr.mxu0 0.0
      %1705 = vmatpush1.msra.mxu0 0.0
      %1706 = vmatprep.subr.mxu0 0.0
      %1707 = vmatpush1.msra.mxu0 0.0
      %1708 = vmatprep.subr.mxu0 0.0
      %1709 = vmatpush1.msra.mxu0 0.0
      %1710 = vmatprep.subr.mxu0 0.0
      %1711 = vmatpush1.msra.mxu0 0.0
      %1712 = vmatprep.subr.mxu0 0.0
      %1713 = vmatpush1.msra.mxu0 0.0
      %1714 = vmatprep.mubr.f32.mxu0 0.0
      %1715 = vmatmul.mubr.f32.gmra.mrb[0].mxu0 %v630
      %v1716 = vpop.f32.mrb[0].mxu0
      %v1717 = vadd.f32 0.0, %v1716
      %v1718 = vpop.f32.mrb[0].mxu0
      %v1719 = vadd.f32 0.0, %v1718
      %1720 = vdwg.mxu0
      %1721 = vmatprep.subr.mxu0 0.0
      %1722 = vmatpush1.msra.mxu0 %v1628
      %1723 = vmatprep.subr.mxu0 0.0
      %1724 = vmatpush1.msra.mxu0 %v1631
      %1725 = vmatprep.subr.mxu0 0.0
      %1726 = vmatpush1.msra.mxu0 %v1634
      %1727 = vmatprep.subr.mxu0 0.0
      %1728 = vmatpush1.msra.mxu0 %v1637
      %1729 = vmatprep.subr.mxu0 0.0
      %1730 = vmatpush1.msra.mxu0 %v1648
      %1731 = vmatprep.subr.mxu0 0.0
      %1732 = vmatpush1.msra.mxu0 0.0
      %1733 = vmatprep.subr.mxu0 0.0
      %1734 = vmatpush1.msra.mxu0 0.0
      %1735 = vmatprep.subr.mxu0 0.0
      %1736 = vmatpush1.msra.mxu0 0.0
      %1737 = vmatprep.subr.mxu0 0.0
      %1738 = vmatpush1.msra.mxu0 0.0
      %1739 = vmatprep.subr.mxu0 0.0
      %1740 = vmatpush1.msra.mxu0 0.0
      %1741 = vmatprep.subr.mxu0 0.0
      %1742 = vmatpush1.msra.mxu0 0.0
      %1743 = vmatprep.subr.mxu0 0.0
      %1744 = vmatpush1.msra.mxu0 0.0
      %1745 = vmatprep.subr.mxu0 0.0
      %1746 = vmatpush1.msra.mxu0 0.0
      %1747 = vmatprep.subr.mxu0 0.0
      %1748 = vmatpush1.msra.mxu0 0.0
      %1749 = vmatprep.subr.mxu0 0.0
      %1750 = vmatpush1.msra.mxu0 0.0
      %1751 = vmatprep.subr.mxu0 0.0
      %1752 = vmatpush1.msra.mxu0 0.0
      %1753 = vmatprep.subr.mxu0 0.0
      %1754 = vmatpush1.msra.mxu0 0.0
      %1755 = vmatprep.subr.mxu0 0.0
      %1756 = vmatpush1.msra.mxu0 0.0
      %1757 = vmatprep.subr.mxu0 0.0
      %1758 = vmatpush1.msra.mxu0 0.0
      %1759 = vmatprep.subr.mxu0 0.0
      %1760 = vmatpush1.msra.mxu0 0.0
      %1761 = vmatprep.subr.mxu0 0.0
      %1762 = vmatpush1.msra.mxu0 0.0
      %1763 = vmatprep.subr.mxu0 0.0
      %1764 = vmatpush1.msra.mxu0 0.0
      %1765 = vmatprep.subr.mxu0 0.0
      %1766 = vmatpush1.msra.mxu0 0.0
      %1767 = vmatprep.subr.mxu0 0.0
      %1768 = vmatpush1.msra.mxu0 0.0
      %1769 = vmatprep.subr.mxu0 0.0
      %1770 = vmatpush1.msra.mxu0 0.0
      %1771 = vmatprep.subr.mxu0 0.0
      %1772 = vmatpush1.msra.mxu0 0.0
      %1773 = vmatprep.subr.mxu0 0.0
      %1774 = vmatpush1.msra.mxu0 0.0
      %1775 = vmatprep.subr.mxu0 0.0
      %1776 = vmatpush1.msra.mxu0 0.0
      %1777 = vmatprep.subr.mxu0 0.0
      %1778 = vmatpush1.msra.mxu0 0.0
      %1779 = vmatprep.subr.mxu0 0.0
      %1780 = vmatpush1.msra.mxu0 0.0
      %1781 = vmatprep.subr.mxu0 0.0
      %1782 = vmatpush1.msra.mxu0 0.0
      %1783 = vmatprep.subr.mxu0 0.0
      %1784 = vmatpush1.msra.mxu0 0.0
      %1785 = vmatprep.mubr.f32.mxu0 0.0
      %1786 = vmatmul.mubr.f32.gmra.mrb[0].mxu0 %v630
      %v1787 = vpop.f32.mrb[0].mxu0
      %v1788 = vadd.f32 0.0, %v1787
      %v1789 = vpop.f32.mrb[0].mxu0
      %1790 = vdwg.mxu0
      %vm1791 = vcmp.ge.f32.partialorder %v246, 2.0
      %vm1792 = vcmp.ge.f32.partialorder %v247, 2.0
      %v1795 = vcombine.low %v1717, %v1719
      %v1797 = vsel %vm1791, %v1795, 0.0
      %v1798 = vsel %vm1792, %v1788, 0.0
      %v1799 = vadd.f32 %v1294, %v1797
      %v1800 = vadd.f32 %v1295, %v1798
      %v1803 = vcombine.high %v1799, %v1799
      %1804 = vrot.lane.b32.xlu0 %v1799, 19
      %v1805 = vpop.permute.xlu0 %1804
      %1806 = vrot.lane.b32.xlu0 %v1803, 19
      %v1807 = vpop.permute.xlu0 %1806
      %1808 = vrot.lane.b32.xlu0 %v1800, 19
      %v1809 = vpop.permute.xlu0 %1808
      %v1810 = vsel %vm259, %v1805, %v1807
      %v1811 = vsel %vm259, %v1807, %v1809
      %1815 = vst.msk [vmem:[#allocation2] sm:$0xf] %vm265, %v1805
      %1816 = vst [vmem:[#allocation2 + $0x8] sm:$0xf] %v1810
      %1817 = vst [vmem:[#allocation2 + $0x10] sm:$0xf] %v1811
      %v1818 = vcombine.low %v1799, %v1799
      %v1819 = vcombine.low %v1800, %v1800
      %1820 = vrot.lane.b32.xlu0 %v1818, 18
      %v1821 = vpop.permute.xlu0 %1820
      %1822 = vrot.lane.b32.xlu0 %v1799, 18
      %v1823 = vpop.permute.xlu0 %1822
      %1824 = vrot.lane.b32.xlu0 %v1819, 18
      %v1825 = vpop.permute.xlu0 %1824
      %v1826 = vsel %vm277, %v1821, %v1823
      %v1827 = vsel %vm277, %v1823, %v1825
      %1831 = vst.msk [vmem:[#allocation2] sm:$0xf0] %vm283, %v1821
      %1832 = vst [vmem:[#allocation2 + $0x8] sm:$0xf0] %v1826
      %1833 = vst [vmem:[#allocation2 + $0x10] sm:$0xf0] %v1827
      %1834 = vrot.lane.b32.xlu0 %v1799, 17
      %v1835 = vpop.permute.xlu0 %1834
      %1836 = vrot.lane.b32.xlu0 %v1803, 17
      %v1837 = vpop.permute.xlu0 %1836
      %1838 = vrot.lane.b32.xlu0 %v1800, 17
      %v1839 = vpop.permute.xlu0 %1838
      %v1840 = vsel %vm293, %v1835, %v1837
      %v1841 = vsel %vm293, %v1837, %v1839
      %1845 = vst.msk [vmem:[#allocation2 + $0x18] sm:$0xf] %vm299, %v1835
      %1846 = vst [vmem:[#allocation2 + $0x20] sm:$0xf] %v1840
      %1847 = vst [vmem:[#allocation2 + $0x28] sm:$0xf] %v1841
      %1848 = vrot.lane.b32.xlu0 %v1818, 1
      %v1849 = vpop.permute.xlu0 %1848
      %1850 = vrot.lane.b32.xlu0 %v1799, 1
      %v1851 = vpop.permute.xlu0 %1850
      %1852 = vrot.lane.b32.xlu0 %v1819, 1
      %v1853 = vpop.permute.xlu0 %1852
      %v1854 = vsel %vm309, %v1849, %v1851
      %v1855 = vsel %vm309, %v1851, %v1853
      %1859 = vst.msk [vmem:[#allocation2 + $0x18] sm:$0xf0] %vm315, %v1849
      %1860 = vst [vmem:[#allocation2 + $0x20] sm:$0xf0] %v1854
      %1861 = vst [vmem:[#allocation2 + $0x28] sm:$0xf0] %v1855
      %1863 = vst [vmem:[#allocation2 + $0x30] sm:$0xf] %v1799
      %1864 = vst [vmem:[#allocation2 + $0x38] sm:$0xf] %v1803
      %1865 = vst [vmem:[#allocation2 + $0x40] sm:$0xf] %v1800
      %1866 = vrot.lane.b32.xlu0 %v1818, 127
      %v1867 = vpop.permute.xlu0 %1866
      %1868 = vrot.lane.b32.xlu0 %v1799, 127
      %v1869 = vpop.permute.xlu0 %1868
      %1870 = vrot.lane.b32.xlu0 %v1819, 127
      %v1871 = vpop.permute.xlu0 %1870
      %v1872 = vsel %vm329, %v1867, %v1869
      %v1873 = vsel %vm329, %v1869, %v1871
      %1877 = vst [vmem:[#allocation2 + $0x30] sm:$0xf0] %v1872
      %1878 = vst [vmem:[#allocation2 + $0x38] sm:$0xf0] %v1873
      %1879 = vst.msk [vmem:[#allocation2 + $0x40] sm:$0xf0] %vm337, %v1871
      %1880 = vrot.lane.b32.xlu0 %v1799, 111
      %v1881 = vpop.permute.xlu0 %1880
      %1882 = vrot.lane.b32.xlu0 %v1803, 111
      %v1883 = vpop.permute.xlu0 %1882
      %1884 = vrot.lane.b32.xlu0 %v1800, 111
      %v1885 = vpop.permute.xlu0 %1884
      %v1886 = vsel %vm345, %v1881, %v1883
      %v1887 = vsel %vm345, %v1883, %v1885
      %1891 = vst [vmem:[#allocation2 + $0x48] sm:$0xf] %v1886
      %1892 = vst [vmem:[#allocation2 + $0x50] sm:$0xf] %v1887
      %1893 = vst.msk [vmem:[#allocation2 + $0x58] sm:$0xf] %vm353, %v1885
      %1894 = vrot.lane.b32.xlu0 %v1818, 110
      %v1895 = vpop.permute.xlu0 %1894
      %1896 = vrot.lane.b32.xlu0 %v1799, 110
      %v1897 = vpop.permute.xlu0 %1896
      %1898 = vrot.lane.b32.xlu0 %v1819, 110
      %v1899 = vpop.permute.xlu0 %1898
      %v1900 = vsel %vm361, %v1895, %v1897
      %v1901 = vsel %vm361, %v1897, %v1899
      %1905 = vst [vmem:[#allocation2 + $0x48] sm:$0xf0] %v1900
      %1906 = vst [vmem:[#allocation2 + $0x50] sm:$0xf0] %v1901
      %1907 = vst.msk [vmem:[#allocation2 + $0x58] sm:$0xf0] %vm369, %v1899
      %1908 = vrot.lane.b32.xlu0 %v1799, 109
      %v1909 = vpop.permute.xlu0 %1908
      %1910 = vrot.lane.b32.xlu0 %v1803, 109
      %v1911 = vpop.permute.xlu0 %1910
      %1912 = vrot.lane.b32.xlu0 %v1800, 109
      %v1913 = vpop.permute.xlu0 %1912
      %v1914 = vsel %vm377, %v1909, %v1911
      %v1915 = vsel %vm377, %v1911, %v1913
      %1919 = vst [vmem:[#allocation2 + $0x60] sm:$0xf] %v1914
      %1920 = vst [vmem:[#allocation2 + $0x68] sm:$0xf] %v1915
      %1921 = vst.msk [vmem:[#allocation2 + $0x70] sm:$0xf] %vm385, %v1913
      %v1922 = vld [vmem:[#allocation2] sm:$0xff]
      %v1923 = vld [vmem:[#allocation2 + $0x8] sm:$0xff]
      %v1924 = vld [vmem:[#allocation2 + $0x10] sm:$0xff]
      %v1925 = vld [vmem:[#allocation2 + $0x18] sm:$0xff]
      %v1926 = vld [vmem:[#allocation2 + $0x20] sm:$0xff]
      %v1927 = vld [vmem:[#allocation2 + $0x28] sm:$0xff]
      %v1928 = vld [vmem:[#allocation2 + $0x30] sm:$0xff]
      %v1929 = vld [vmem:[#allocation2 + $0x38] sm:$0xff]
      %v1930 = vld [vmem:[#allocation2 + $0x40] sm:$0xff]
      %v1931 = vld [vmem:[#allocation2 + $0x48] sm:$0xff]
      %v1932 = vld [vmem:[#allocation2 + $0x50] sm:$0xff]
      %v1933 = vld [vmem:[#allocation2 + $0x58] sm:$0xff]
      %v1934 = vld [vmem:[#allocation2 + $0x60] sm:$0x1f]
      %v1935 = vld [vmem:[#allocation2 + $0x68] sm:$0x1f]
      %v1936 = vld [vmem:[#allocation2 + $0x70] sm:$0x1f]
      %v1938 = vsel %vm418, %v1934, 0
      %v1941 = vsel %vm418, %v1935, 0
      %v1944 = vsel %vm418, %v1936, 0
      %1946 = vmatprep.subr.mxu0 %v1923
      %1947 = vmatpush1.msra.mxu0 %v1922
      %1948 = vmatprep.subr.mxu0 %v1926
      %1949 = vmatpush1.msra.mxu0 %v1925
      %1950 = vmatprep.subr.mxu0 %v1929
      %1951 = vmatpush1.msra.mxu0 %v1928
      %1952 = vmatprep.subr.mxu0 %v1932
      %1953 = vmatpush1.msra.mxu0 %v1931
      %1954 = vmatprep.subr.mxu0 %v1941
      %1955 = vmatpush1.msra.mxu0 %v1938
      %1956 = vmatprep.subr.mxu0 0.0
      %1957 = vmatpush1.msra.mxu0 0.0
      %1958 = vmatprep.subr.mxu0 0.0
      %1959 = vmatpush1.msra.mxu0 0.0
      %1960 = vmatprep.subr.mxu0 0.0
      %1961 = vmatpush1.msra.mxu0 0.0
      %1962 = vmatprep.subr.mxu0 0.0
      %1963 = vmatpush1.msra.mxu0 0.0
      %1964 = vmatprep.subr.mxu0 0.0
      %1965 = vmatpush1.msra.mxu0 0.0
      %1966 = vmatprep.subr.mxu0 0.0
      %1967 = vmatpush1.msra.mxu0 0.0
      %1968 = vmatprep.subr.mxu0 0.0
      %1969 = vmatpush1.msra.mxu0 0.0
      %1970 = vmatprep.subr.mxu0 0.0
      %1971 = vmatpush1.msra.mxu0 0.0
      %1972 = vmatprep.subr.mxu0 0.0
      %1973 = vmatpush1.msra.mxu0 0.0
      %1974 = vmatprep.subr.mxu0 0.0
      %1975 = vmatpush1.msra.mxu0 0.0
      %1976 = vmatprep.subr.mxu0 0.0
      %1977 = vmatpush1.msra.mxu0 0.0
      %1978 = vmatprep.subr.mxu0 0.0
      %1979 = vmatpush1.msra.mxu0 0.0
      %1980 = vmatprep.subr.mxu0 0.0
      %1981 = vmatpush1.msra.mxu0 0.0
      %1982 = vmatprep.subr.mxu0 0.0
      %1983 = vmatpush1.msra.mxu0 0.0
      %1984 = vmatprep.subr.mxu0 0.0
      %1985 = vmatpush1.msra.mxu0 0.0
      %1986 = vmatprep.subr.mxu0 0.0
      %1987 = vmatpush1.msra.mxu0 0.0
      %1988 = vmatprep.subr.mxu0 0.0
      %1989 = vmatpush1.msra.mxu0 0.0
      %1990 = vmatprep.subr.mxu0 0.0
      %1991 = vmatpush1.msra.mxu0 0.0
      %1992 = vmatprep.subr.mxu0 0.0
      %1993 = vmatpush1.msra.mxu0 0.0
      %1994 = vmatprep.subr.mxu0 0.0
      %1995 = vmatpush1.msra.mxu0 0.0
      %1996 = vmatprep.subr.mxu0 0.0
      %1997 = vmatpush1.msra.mxu0 0.0
      %1998 = vmatprep.subr.mxu0 0.0
      %1999 = vmatpush1.msra.mxu0 0.0
      %2000 = vmatprep.subr.mxu0 0.0
      %2001 = vmatpush1.msra.mxu0 0.0
      %2002 = vmatprep.subr.mxu0 0.0
      %2003 = vmatpush1.msra.mxu0 0.0
      %2004 = vmatprep.subr.mxu0 0.0
      %2005 = vmatpush1.msra.mxu0 0.0
      %2006 = vmatprep.subr.mxu0 0.0
      %2007 = vmatpush1.msra.mxu0 0.0
      %2008 = vmatprep.subr.mxu0 0.0
      %2009 = vmatpush1.msra.mxu0 0.0
      %2010 = vmatprep.mubr.f32.mxu0 0.0
      %2011 = vmatmul.mubr.f32.gmra.mrb[0].mxu0 %v404
      %v2012 = vpop.f32.mrb[0].mxu0
      %v2013 = vadd.f32 0.0, %v2012
      %v2014 = vpop.f32.mrb[0].mxu0
      %v2015 = vadd.f32 0.0, %v2014
      %2016 = vmatprep.mubr.f32.mxu0 0.0
      %2017 = vmatmul.mubr.f32.gmra.mrb[0].mxu0 %v407
      %v2018 = vpop.f32.mrb[0].mxu0
      %v2019 = vadd.f32 0.0, %v2018
      %v2020 = vpop.f32.mrb[0].mxu0
      %v2021 = vadd.f32 0.0, %v2020
      %2022 = vmatprep.mubr.f32.mxu0 0.0
      %2023 = vmatmul.mubr.f32.gmra.mrb[0].mxu0 %v410
      %v2024 = vpop.f32.mrb[0].mxu0
      %v2025 = vadd.f32 0.0, %v2024
      %v2026 = vpop.f32.mrb[0].mxu0
      %v2027 = vadd.f32 0.0, %v2026
      %2028 = vmatprep.mubr.f32.mxu0 0.0
      %2029 = vmatmul.mubr.f32.gmra.mrb[0].mxu0 %v413
      %v2030 = vpop.f32.mrb[0].mxu0
      %v2031 = vadd.f32 0.0, %v2030
      %v2032 = vpop.f32.mrb[0].mxu0
      %v2033 = vadd.f32 0.0, %v2032
      %2034 = vmatprep.mubr.f32.mxu0 0.0
      %2035 = vmatmul.mubr.f32.gmra.mrb[0].mxu0 %v416
      %v2036 = vpop.f32.mrb[0].mxu0
      %v2037 = vadd.f32 0.0, %v2036
      %v2038 = vpop.f32.mrb[0].mxu0
      %v2039 = vadd.f32 0.0, %v2038
      %2040 = vdwg.mxu0
      %2041 = vmatprep.subr.mxu0 0.0
      %2042 = vmatpush1.msra.mxu0 %v1924
      %2043 = vmatprep.subr.mxu0 0.0
      %2044 = vmatpush1.msra.mxu0 %v1927
      %2045 = vmatprep.subr.mxu0 0.0
      %2046 = vmatpush1.msra.mxu0 %v1930
      %2047 = vmatprep.subr.mxu0 0.0
      %2048 = vmatpush1.msra.mxu0 %v1933
      %2049 = vmatprep.subr.mxu0 0.0
      %2050 = vmatpush1.msra.mxu0 %v1944
      %2051 = vmatprep.subr.mxu0 0.0
      %2052 = vmatpush1.msra.mxu0 0.0
      %2053 = vmatprep.subr.mxu0 0.0
      %2054 = vmatpush1.msra.mxu0 0.0
      %2055 = vmatprep.subr.mxu0 0.0
      %2056 = vmatpush1.msra.mxu0 0.0
      %2057 = vmatprep.subr.mxu0 0.0
      %2058 = vmatpush1.msra.mxu0 0.0
      %2059 = vmatprep.subr.mxu0 0.0
      %2060 = vmatpush1.msra.mxu0 0.0
      %2061 = vmatprep.subr.mxu0 0.0
      %2062 = vmatpush1.msra.mxu0 0.0
      %2063 = vmatprep.subr.mxu0 0.0
      %2064 = vmatpush1.msra.mxu0 0.0
      %2065 = vmatprep.subr.mxu0 0.0
      %2066 = vmatpush1.msra.mxu0 0.0
      %2067 = vmatprep.subr.mxu0 0.0
      %2068 = vmatpush1.msra.mxu0 0.0
      %2069 = vmatprep.subr.mxu0 0.0
      %2070 = vmatpush1.msra.mxu0 0.0
      %2071 = vmatprep.subr.mxu0 0.0
      %2072 = vmatpush1.msra.mxu0 0.0
      %2073 = vmatprep.subr.mxu0 0.0
      %2074 = vmatpush1.msra.mxu0 0.0
      %2075 = vmatprep.subr.mxu0 0.0
      %2076 = vmatpush1.msra.mxu0 0.0
      %2077 = vmatprep.subr.mxu0 0.0
      %2078 = vmatpush1.msra.mxu0 0.0
      %2079 = vmatprep.subr.mxu0 0.0
      %2080 = vmatpush1.msra.mxu0 0.0
      %2081 = vmatprep.subr.mxu0 0.0
      %2082 = vmatpush1.msra.mxu0 0.0
      %2083 = vmatprep.subr.mxu0 0.0
      %2084 = vmatpush1.msra.mxu0 0.0
      %2085 = vmatprep.subr.mxu0 0.0
      %2086 = vmatpush1.msra.mxu0 0.0
      %2087 = vmatprep.subr.mxu0 0.0
      %2088 = vmatpush1.msra.mxu0 0.0
      %2089 = vmatprep.subr.mxu0 0.0
      %2090 = vmatpush1.msra.mxu0 0.0
      %2091 = vmatprep.subr.mxu0 0.0
      %2092 = vmatpush1.msra.mxu0 0.0
      %2093 = vmatprep.subr.mxu0 0.0
      %2094 = vmatpush1.msra.mxu0 0.0
      %2095 = vmatprep.subr.mxu0 0.0
      %2096 = vmatpush1.msra.mxu0 0.0
      %2097 = vmatprep.subr.mxu0 0.0
      %2098 = vmatpush1.msra.mxu0 0.0
      %2099 = vmatprep.subr.mxu0 0.0
      %2100 = vmatpush1.msra.mxu0 0.0
      %2101 = vmatprep.subr.mxu0 0.0
      %2102 = vmatpush1.msra.mxu0 0.0
      %2103 = vmatprep.subr.mxu0 0.0
      %2104 = vmatpush1.msra.mxu0 0.0
      %2105 = vmatprep.mubr.f32.mxu0 0.0
      %2106 = vmatmul.mubr.f32.gmra.mrb[0].mxu0 %v404
      %v2107 = vpop.f32.mrb[0].mxu0
      %v2108 = vadd.f32 0.0, %v2107
      %v2109 = vpop.f32.mrb[0].mxu0
      %2110 = vmatprep.mubr.f32.mxu0 0.0
      %2111 = vmatmul.mubr.f32.gmra.mrb[0].mxu0 %v407
      %v2112 = vpop.f32.mrb[0].mxu0
      %v2113 = vadd.f32 0.0, %v2112
      %v2114 = vpop.f32.mrb[0].mxu0
      %2115 = vmatprep.mubr.f32.mxu0 0.0
      %2116 = vmatmul.mubr.f32.gmra.mrb[0].mxu0 %v410
      %v2117 = vpop.f32.mrb[0].mxu0
      %v2118 = vadd.f32 0.0, %v2117
      %v2119 = vpop.f32.mrb[0].mxu0
      %2120 = vmatprep.mubr.f32.mxu0 0.0
      %2121 = vmatmul.mubr.f32.gmra.mrb[0].mxu0 %v413
      %v2122 = vpop.f32.mrb[0].mxu0
      %v2123 = vadd.f32 0.0, %v2122
      %v2124 = vpop.f32.mrb[0].mxu0
      %2125 = vmatprep.mubr.f32.mxu0 0.0
      %2126 = vmatmul.mubr.f32.gmra.mrb[0].mxu0 %v416
      %v2127 = vpop.f32.mrb[0].mxu0
      %v2128 = vadd.f32 0.0, %v2127
      %v2129 = vpop.f32.mrb[0].mxu0
      %2130 = vdwg.mxu0
      %v2131 = vmax.f32 %v2013, 0.0
      %v2132 = vmax.f32 %v2015, 0.0
      %v2133 = vmax.f32 %v2108, 0.0
      %v2134 = vmax.f32 %v2019, 0.0
      %v2135 = vmax.f32 %v2021, 0.0
      %v2136 = vmax.f32 %v2113, 0.0
      %v2137 = vmax.f32 %v2025, 0.0
      %v2138 = vmax.f32 %v2027, 0.0
      %v2139 = vmax.f32 %v2118, 0.0
      %v2140 = vmax.f32 %v2031, 0.0
      %v2141 = vmax.f32 %v2033, 0.0
      %v2142 = vmax.f32 %v2123, 0.0
      %v2143 = vmax.f32 %v2037, 0.0
      %v2144 = vmax.f32 %v2039, 0.0
      %v2145 = vmax.f32 %v2128, 0.0
      %v2147 = vsel %vm632, %v2143, 0
      %v2150 = vsel %vm632, %v2144, 0
      %v2153 = vsel %vm632, %v2145, 0
      %2155 = vmatprep.subr.mxu0 %v2132
      %2156 = vmatpush1.msra.mxu0 %v2131
      %2157 = vmatprep.subr.mxu0 %v2135
      %2158 = vmatpush1.msra.mxu0 %v2134
      %2159 = vmatprep.subr.mxu0 %v2138
      %2160 = vmatpush1.msra.mxu0 %v2137
      %2161 = vmatprep.subr.mxu0 %v2141
      %2162 = vmatpush1.msra.mxu0 %v2140
      %2163 = vmatprep.subr.mxu0 %v2150
      %2164 = vmatpush1.msra.mxu0 %v2147
      %2165 = vmatprep.subr.mxu0 0.0
      %2166 = vmatpush1.msra.mxu0 0.0
      %2167 = vmatprep.subr.mxu0 0.0
      %2168 = vmatpush1.msra.mxu0 0.0
      %2169 = vmatprep.subr.mxu0 0.0
      %2170 = vmatpush1.msra.mxu0 0.0
      %2171 = vmatprep.subr.mxu0 0.0
      %2172 = vmatpush1.msra.mxu0 0.0
      %2173 = vmatprep.subr.mxu0 0.0
      %2174 = vmatpush1.msra.mxu0 0.0
      %2175 = vmatprep.subr.mxu0 0.0
      %2176 = vmatpush1.msra.mxu0 0.0
      %2177 = vmatprep.subr.mxu0 0.0
      %2178 = vmatpush1.msra.mxu0 0.0
      %2179 = vmatprep.subr.mxu0 0.0
      %2180 = vmatpush1.msra.mxu0 0.0
      %2181 = vmatprep.subr.mxu0 0.0
      %2182 = vmatpush1.msra.mxu0 0.0
      %2183 = vmatprep.subr.mxu0 0.0
      %2184 = vmatpush1.msra.mxu0 0.0
      %2185 = vmatprep.subr.mxu0 0.0
      %2186 = vmatpush1.msra.mxu0 0.0
      %2187 = vmatprep.subr.mxu0 0.0
      %2188 = vmatpush1.msra.mxu0 0.0
      %2189 = vmatprep.subr.mxu0 0.0
      %2190 = vmatpush1.msra.mxu0 0.0
      %2191 = vmatprep.subr.mxu0 0.0
      %2192 = vmatpush1.msra.mxu0 0.0
      %2193 = vmatprep.subr.mxu0 0.0
      %2194 = vmatpush1.msra.mxu0 0.0
      %2195 = vmatprep.subr.mxu0 0.0
      %2196 = vmatpush1.msra.mxu0 0.0
      %2197 = vmatprep.subr.mxu0 0.0
      %2198 = vmatpush1.msra.mxu0 0.0
      %2199 = vmatprep.subr.mxu0 0.0
      %2200 = vmatpush1.msra.mxu0 0.0
      %2201 = vmatprep.subr.mxu0 0.0
      %2202 = vmatpush1.msra.mxu0 0.0
      %2203 = vmatprep.subr.mxu0 0.0
      %2204 = vmatpush1.msra.mxu0 0.0
      %2205 = vmatprep.subr.mxu0 0.0
      %2206 = vmatpush1.msra.mxu0 0.0
      %2207 = vmatprep.subr.mxu0 0.0
      %2208 = vmatpush1.msra.mxu0 0.0
      %2209 = vmatprep.subr.mxu0 0.0
      %2210 = vmatpush1.msra.mxu0 0.0
      %2211 = vmatprep.subr.mxu0 0.0
      %2212 = vmatpush1.msra.mxu0 0.0
      %2213 = vmatprep.subr.mxu0 0.0
      %2214 = vmatpush1.msra.mxu0 0.0
      %2215 = vmatprep.subr.mxu0 0.0
      %2216 = vmatpush1.msra.mxu0 0.0
      %2217 = vmatprep.subr.mxu0 0.0
      %2218 = vmatpush1.msra.mxu0 0.0
      %2219 = vmatprep.mubr.f32.mxu0 0.0
      %2220 = vmatmul.mubr.f32.gmra.mrb[0].mxu0 %v630
      %v2221 = vpop.f32.mrb[0].mxu0
      %v2222 = vadd.f32 0.0, %v2221
      %v2223 = vpop.f32.mrb[0].mxu0
      %v2224 = vadd.f32 0.0, %v2223
      %2225 = vdwg.mxu0
      %2226 = vmatprep.subr.mxu0 0.0
      %2227 = vmatpush1.msra.mxu0 %v2133
      %2228 = vmatprep.subr.mxu0 0.0
      %2229 = vmatpush1.msra.mxu0 %v2136
      %2230 = vmatprep.subr.mxu0 0.0
      %2231 = vmatpush1.msra.mxu0 %v2139
      %2232 = vmatprep.subr.mxu0 0.0
      %2233 = vmatpush1.msra.mxu0 %v2142
      %2234 = vmatprep.subr.mxu0 0.0
      %2235 = vmatpush1.msra.mxu0 %v2153
      %2236 = vmatprep.subr.mxu0 0.0
      %2237 = vmatpush1.msra.mxu0 0.0
      %2238 = vmatprep.subr.mxu0 0.0
      %2239 = vmatpush1.msra.mxu0 0.0
      %2240 = vmatprep.subr.mxu0 0.0
      %2241 = vmatpush1.msra.mxu0 0.0
      %2242 = vmatprep.subr.mxu0 0.0
      %2243 = vmatpush1.msra.mxu0 0.0
      %2244 = vmatprep.subr.mxu0 0.0
      %2245 = vmatpush1.msra.mxu0 0.0
      %2246 = vmatprep.subr.mxu0 0.0
      %2247 = vmatpush1.msra.mxu0 0.0
      %2248 = vmatprep.subr.mxu0 0.0
      %2249 = vmatpush1.msra.mxu0 0.0
      %2250 = vmatprep.subr.mxu0 0.0
      %2251 = vmatpush1.msra.mxu0 0.0
      %2252 = vmatprep.subr.mxu0 0.0
      %2253 = vmatpush1.msra.mxu0 0.0
      %2254 = vmatprep.subr.mxu0 0.0
      %2255 = vmatpush1.msra.mxu0 0.0
      %2256 = vmatprep.subr.mxu0 0.0
      %2257 = vmatpush1.msra.mxu0 0.0
      %2258 = vmatprep.subr.mxu0 0.0
      %2259 = vmatpush1.msra.mxu0 0.0
      %2260 = vmatprep.subr.mxu0 0.0
      %2261 = vmatpush1.msra.mxu0 0.0
      %2262 = vmatprep.subr.mxu0 0.0
      %2263 = vmatpush1.msra.mxu0 0.0
      %2264 = vmatprep.subr.mxu0 0.0
      %2265 = vmatpush1.msra.mxu0 0.0
      %2266 = vmatprep.subr.mxu0 0.0
      %2267 = vmatpush1.msra.mxu0 0.0
      %2268 = vmatprep.subr.mxu0 0.0
      %2269 = vmatpush1.msra.mxu0 0.0
      %2270 = vmatprep.subr.mxu0 0.0
      %2271 = vmatpush1.msra.mxu0 0.0
      %2272 = vmatprep.subr.mxu0 0.0
      %2273 = vmatpush1.msra.mxu0 0.0
      %2274 = vmatprep.subr.mxu0 0.0
      %2275 = vmatpush1.msra.mxu0 0.0
      %2276 = vmatprep.subr.mxu0 0.0
      %2277 = vmatpush1.msra.mxu0 0.0
      %2278 = vmatprep.subr.mxu0 0.0
      %2279 = vmatpush1.msra.mxu0 0.0
      %2280 = vmatprep.subr.mxu0 0.0
      %2281 = vmatpush1.msra.mxu0 0.0
      %2282 = vmatprep.subr.mxu0 0.0
      %2283 = vmatpush1.msra.mxu0 0.0
      %2284 = vmatprep.subr.mxu0 0.0
      %2285 = vmatpush1.msra.mxu0 0.0
      %2286 = vmatprep.subr.mxu0 0.0
      %2287 = vmatpush1.msra.mxu0 0.0
      %2288 = vmatprep.subr.mxu0 0.0
      %2289 = vmatpush1.msra.mxu0 0.0
      %2290 = vmatprep.mubr.f32.mxu0 0.0
      %2291 = vmatmul.mubr.f32.gmra.mrb[0].mxu0 %v630
      %v2292 = vpop.f32.mrb[0].mxu0
      %v2293 = vadd.f32 0.0, %v2292
      %v2294 = vpop.f32.mrb[0].mxu0
      %2295 = vdwg.mxu0
      %vm2296 = vcmp.ge.f32.partialorder %v246, 3.0
      %vm2297 = vcmp.ge.f32.partialorder %v247, 3.0
      %v2300 = vcombine.low %v2222, %v2224
      %v2302 = vsel %vm2296, %v2300, 0.0
      %v2303 = vsel %vm2297, %v2293, 0.0
      %v2304 = vadd.f32 %v1799, %v2302
      %v2305 = vadd.f32 %v1800, %v2303
      %v2308 = vcombine.high %v2304, %v2304
      %2309 = vrot.lane.b32.xlu0 %v2304, 19
      %v2310 = vpop.permute.xlu0 %2309
      %2311 = vrot.lane.b32.xlu0 %v2308, 19
      %v2312 = vpop.permute.xlu0 %2311
      %2313 = vrot.lane.b32.xlu0 %v2305, 19
      %v2314 = vpop.permute.xlu0 %2313
      %v2315 = vsel %vm259, %v2310, %v2312
      %v2316 = vsel %vm259, %v2312, %v2314
      %2320 = vst.msk [vmem:[#allocation2] sm:$0xf] %vm265, %v2310
      %2321 = vst [vmem:[#allocation2 + $0x8] sm:$0xf] %v2315
      %2322 = vst [vmem:[#allocation2 + $0x10] sm:$0xf] %v2316
      %v2323 = vcombine.low %v2304, %v2304
      %v2324 = vcombine.low %v2305, %v2305
      %2325 = vrot.lane.b32.xlu0 %v2323, 18
      %v2326 = vpop.permute.xlu0 %2325
      %2327 = vrot.lane.b32.xlu0 %v2304, 18
      %v2328 = vpop.permute.xlu0 %2327
      %2329 = vrot.lane.b32.xlu0 %v2324, 18
      %v2330 = vpop.permute.xlu0 %2329
      %v2331 = vsel %vm277, %v2326, %v2328
      %v2332 = vsel %vm277, %v2328, %v2330
      %2336 = vst.msk [vmem:[#allocation2] sm:$0xf0] %vm283, %v2326
      %2337 = vst [vmem:[#allocation2 + $0x8] sm:$0xf0] %v2331
      %2338 = vst [vmem:[#allocation2 + $0x10] sm:$0xf0] %v2332
      %2339 = vrot.lane.b32.xlu0 %v2304, 17
      %v2340 = vpop.permute.xlu0 %2339
      %2341 = vrot.lane.b32.xlu0 %v2308, 17
      %v2342 = vpop.permute.xlu0 %2341
      %2343 = vrot.lane.b32.xlu0 %v2305, 17
      %v2344 = vpop.permute.xlu0 %2343
      %v2345 = vsel %vm293, %v2340, %v2342
      %v2346 = vsel %vm293, %v2342, %v2344
      %2350 = vst.msk [vmem:[#allocation2 + $0x18] sm:$0xf] %vm299, %v2340
      %2351 = vst [vmem:[#allocation2 + $0x20] sm:$0xf] %v2345
      %2352 = vst [vmem:[#allocation2 + $0x28] sm:$0xf] %v2346
      %2353 = vrot.lane.b32.xlu0 %v2323, 1
      %v2354 = vpop.permute.xlu0 %2353
      %2355 = vrot.lane.b32.xlu0 %v2304, 1
      %v2356 = vpop.permute.xlu0 %2355
      %2357 = vrot.lane.b32.xlu0 %v2324, 1
      %v2358 = vpop.permute.xlu0 %2357
      %v2359 = vsel %vm309, %v2354, %v2356
      %v2360 = vsel %vm309, %v2356, %v2358
      %2364 = vst.msk [vmem:[#allocation2 + $0x18] sm:$0xf0] %vm315, %v2354
      %2365 = vst [vmem:[#allocation2 + $0x20] sm:$0xf0] %v2359
      %2366 = vst [vmem:[#allocation2 + $0x28] sm:$0xf0] %v2360
      %2368 = vst [vmem:[#allocation2 + $0x30] sm:$0xf] %v2304
      %2369 = vst [vmem:[#allocation2 + $0x38] sm:$0xf] %v2308
      %2370 = vst [vmem:[#allocation2 + $0x40] sm:$0xf] %v2305
      %2371 = vrot.lane.b32.xlu0 %v2323, 127
      %v2372 = vpop.permute.xlu0 %2371
      %2373 = vrot.lane.b32.xlu0 %v2304, 127
      %v2374 = vpop.permute.xlu0 %2373
      %2375 = vrot.lane.b32.xlu0 %v2324, 127
      %v2376 = vpop.permute.xlu0 %2375
      %v2377 = vsel %vm329, %v2372, %v2374
      %v2378 = vsel %vm329, %v2374, %v2376
      %2382 = vst [vmem:[#allocation2 + $0x30] sm:$0xf0] %v2377
      %2383 = vst [vmem:[#allocation2 + $0x38] sm:$0xf0] %v2378
      %2384 = vst.msk [vmem:[#allocation2 + $0x40] sm:$0xf0] %vm337, %v2376
      %2385 = vrot.lane.b32.xlu0 %v2304, 111
      %v2386 = vpop.permute.xlu0 %2385
      %2387 = vrot.lane.b32.xlu0 %v2308, 111
      %v2388 = vpop.permute.xlu0 %2387
      %2389 = vrot.lane.b32.xlu0 %v2305, 111
      %v2390 = vpop.permute.xlu0 %2389
      %v2391 = vsel %vm345, %v2386, %v2388
      %v2392 = vsel %vm345, %v2388, %v2390
      %2396 = vst [vmem:[#allocation2 + $0x48] sm:$0xf] %v2391
      %2397 = vst [vmem:[#allocation2 + $0x50] sm:$0xf] %v2392
      %2398 = vst.msk [vmem:[#allocation2 + $0x58] sm:$0xf] %vm353, %v2390
      %2399 = vrot.lane.b32.xlu0 %v2323, 110
      %v2400 = vpop.permute.xlu0 %2399
      %2401 = vrot.lane.b32.xlu0 %v2304, 110
      %v2402 = vpop.permute.xlu0 %2401
      %2403 = vrot.lane.b32.xlu0 %v2324, 110
      %v2404 = vpop.permute.xlu0 %2403
      %v2405 = vsel %vm361, %v2400, %v2402
      %v2406 = vsel %vm361, %v2402, %v2404
      %2410 = vst [vmem:[#allocation2 + $0x48] sm:$0xf0] %v2405
      %2411 = vst [vmem:[#allocation2 + $0x50] sm:$0xf0] %v2406
      %2412 = vst.msk [vmem:[#allocation2 + $0x58] sm:$0xf0] %vm369, %v2404
      %2413 = vrot.lane.b32.xlu0 %v2304, 109
      %v2414 = vpop.permute.xlu0 %2413
      %2415 = vrot.lane.b32.xlu0 %v2308, 109
      %v2416 = vpop.permute.xlu0 %2415
      %2417 = vrot.lane.b32.xlu0 %v2305, 109
      %v2418 = vpop.permute.xlu0 %2417
      %v2419 = vsel %vm377, %v2414, %v2416
      %v2420 = vsel %vm377, %v2416, %v2418
      %2424 = vst [vmem:[#allocation2 + $0x60] sm:$0xf] %v2419
      %2425 = vst [vmem:[#allocation2 + $0x68] sm:$0xf] %v2420
      %2426 = vst.msk [vmem:[#allocation2 + $0x70] sm:$0xf] %vm385, %v2418
      %v2427 = vld [vmem:[#allocation2] sm:$0xff]
      %v2428 = vld [vmem:[#allocation2 + $0x8] sm:$0xff]
      %v2429 = vld [vmem:[#allocation2 + $0x10] sm:$0xff]
      %v2430 = vld [vmem:[#allocation2 + $0x18] sm:$0xff]
      %v2431 = vld [vmem:[#allocation2 + $0x20] sm:$0xff]
      %v2432 = vld [vmem:[#allocation2 + $0x28] sm:$0xff]
      %v2433 = vld [vmem:[#allocation2 + $0x30] sm:$0xff]
      %v2434 = vld [vmem:[#allocation2 + $0x38] sm:$0xff]
      %v2435 = vld [vmem:[#allocation2 + $0x40] sm:$0xff]
      %v2436 = vld [vmem:[#allocation2 + $0x48] sm:$0xff]
      %v2437 = vld [vmem:[#allocation2 + $0x50] sm:$0xff]
      %v2438 = vld [vmem:[#allocation2 + $0x58] sm:$0xff]
      %v2439 = vld [vmem:[#allocation2 + $0x60] sm:$0x1f]
      %v2440 = vld [vmem:[#allocation2 + $0x68] sm:$0x1f]
      %v2441 = vld [vmem:[#allocation2 + $0x70] sm:$0x1f]
      %v2443 = vsel %vm418, %v2439, 0
      %v2446 = vsel %vm418, %v2440, 0
      %v2449 = vsel %vm418, %v2441, 0
      %2451 = vmatprep.subr.mxu0 %v2428
      %2452 = vmatpush1.msra.mxu0 %v2427
      %2453 = vmatprep.subr.mxu0 %v2431
      %2454 = vmatpush1.msra.mxu0 %v2430
      %2455 = vmatprep.subr.mxu0 %v2434
      %2456 = vmatpush1.msra.mxu0 %v2433
      %2457 = vmatprep.subr.mxu0 %v2437
      %2458 = vmatpush1.msra.mxu0 %v2436
      %2459 = vmatprep.subr.mxu0 %v2446
      %2460 = vmatpush1.msra.mxu0 %v2443
      %2461 = vmatprep.subr.mxu0 0.0
      %2462 = vmatpush1.msra.mxu0 0.0
      %2463 = vmatprep.subr.mxu0 0.0
      %2464 = vmatpush1.msra.mxu0 0.0
      %2465 = vmatprep.subr.mxu0 0.0
      %2466 = vmatpush1.msra.mxu0 0.0
      %2467 = vmatprep.subr.mxu0 0.0
      %2468 = vmatpush1.msra.mxu0 0.0
      %2469 = vmatprep.subr.mxu0 0.0
      %2470 = vmatpush1.msra.mxu0 0.0
      %2471 = vmatprep.subr.mxu0 0.0
      %2472 = vmatpush1.msra.mxu0 0.0
      %2473 = vmatprep.subr.mxu0 0.0
      %2474 = vmatpush1.msra.mxu0 0.0
      %2475 = vmatprep.subr.mxu0 0.0
      %2476 = vmatpush1.msra.mxu0 0.0
      %2477 = vmatprep.subr.mxu0 0.0
      %2478 = vmatpush1.msra.mxu0 0.0
      %2479 = vmatprep.subr.mxu0 0.0
      %2480 = vmatpush1.msra.mxu0 0.0
      %2481 = vmatprep.subr.mxu0 0.0
      %2482 = vmatpush1.msra.mxu0 0.0
      %2483 = vmatprep.subr.mxu0 0.0
      %2484 = vmatpush1.msra.mxu0 0.0
      %2485 = vmatprep.subr.mxu0 0.0
      %2486 = vmatpush1.msra.mxu0 0.0
      %2487 = vmatprep.subr.mxu0 0.0
      %2488 = vmatpush1.msra.mxu0 0.0
      %2489 = vmatprep.subr.mxu0 0.0
      %2490 = vmatpush1.msra.mxu0 0.0
      %2491 = vmatprep.subr.mxu0 0.0
      %2492 = vmatpush1.msra.mxu0 0.0
      %2493 = vmatprep.subr.mxu0 0.0
      %2494 = vmatpush1.msra.mxu0 0.0
      %2495 = vmatprep.subr.mxu0 0.0
      %2496 = vmatpush1.msra.mxu0 0.0
      %2497 = vmatprep.subr.mxu0 0.0
      %2498 = vmatpush1.msra.mxu0 0.0
      %2499 = vmatprep.subr.mxu0 0.0
      %2500 = vmatpush1.msra.mxu0 0.0
      %2501 = vmatprep.subr.mxu0 0.0
      %2502 = vmatpush1.msra.mxu0 0.0
      %2503 = vmatprep.subr.mxu0 0.0
      %2504 = vmatpush1.msra.mxu0 0.0
      %2505 = vmatprep.subr.mxu0 0.0
      %2506 = vmatpush1.msra.mxu0 0.0
      %2507 = vmatprep.subr.mxu0 0.0
      %2508 = vmatpush1.msra.mxu0 0.0
      %2509 = vmatprep.subr.mxu0 0.0
      %2510 = vmatpush1.msra.mxu0 0.0
      %2511 = vmatprep.subr.mxu0 0.0
      %2512 = vmatpush1.msra.mxu0 0.0
      %2513 = vmatprep.subr.mxu0 0.0
      %2514 = vmatpush1.msra.mxu0 0.0
      %2515 = vmatprep.mubr.f32.mxu0 0.0
      %2516 = vmatmul.mubr.f32.gmra.mrb[0].mxu0 %v404
      %v2517 = vpop.f32.mrb[0].mxu0
      %v2518 = vadd.f32 0.0, %v2517
      %v2519 = vpop.f32.mrb[0].mxu0
      %v2520 = vadd.f32 0.0, %v2519
      %2521 = vmatprep.mubr.f32.mxu0 0.0
      %2522 = vmatmul.mubr.f32.gmra.mrb[0].mxu0 %v407
      %v2523 = vpop.f32.mrb[0].mxu0
      %v2524 = vadd.f32 0.0, %v2523
      %v2525 = vpop.f32.mrb[0].mxu0
      %v2526 = vadd.f32 0.0, %v2525
      %2527 = vmatprep.mubr.f32.mxu0 0.0
      %2528 = vmatmul.mubr.f32.gmra.mrb[0].mxu0 %v410
      %v2529 = vpop.f32.mrb[0].mxu0
      %v2530 = vadd.f32 0.0, %v2529
      %v2531 = vpop.f32.mrb[0].mxu0
      %v2532 = vadd.f32 0.0, %v2531
      %2533 = vmatprep.mubr.f32.mxu0 0.0
      %2534 = vmatmul.mubr.f32.gmra.mrb[0].mxu0 %v413
      %v2535 = vpop.f32.mrb[0].mxu0
      %v2536 = vadd.f32 0.0, %v2535
      %v2537 = vpop.f32.mrb[0].mxu0
      %v2538 = vadd.f32 0.0, %v2537
      %2539 = vmatprep.mubr.f32.mxu0 0.0
      %2540 = vmatmul.mubr.f32.gmra.mrb[0].mxu0 %v416
      %v2541 = vpop.f32.mrb[0].mxu0
      %v2542 = vadd.f32 0.0, %v2541
      %v2543 = vpop.f32.mrb[0].mxu0
      %v2544 = vadd.f32 0.0, %v2543
      %2545 = vdwg.mxu0
      %2546 = vmatprep.subr.mxu0 0.0
      %2547 = vmatpush1.msra.mxu0 %v2429
      %2548 = vmatprep.subr.mxu0 0.0
      %2549 = vmatpush1.msra.mxu0 %v2432
      %2550 = vmatprep.subr.mxu0 0.0
      %2551 = vmatpush1.msra.mxu0 %v2435
      %2552 = vmatprep.subr.mxu0 0.0
      %2553 = vmatpush1.msra.mxu0 %v2438
      %2554 = vmatprep.subr.mxu0 0.0
      %2555 = vmatpush1.msra.mxu0 %v2449
      %2556 = vmatprep.subr.mxu0 0.0
      %2557 = vmatpush1.msra.mxu0 0.0
      %2558 = vmatprep.subr.mxu0 0.0
      %2559 = vmatpush1.msra.mxu0 0.0
      %2560 = vmatprep.subr.mxu0 0.0
      %2561 = vmatpush1.msra.mxu0 0.0
      %2562 = vmatprep.subr.mxu0 0.0
      %2563 = vmatpush1.msra.mxu0 0.0
      %2564 = vmatprep.subr.mxu0 0.0
      %2565 = vmatpush1.msra.mxu0 0.0
      %2566 = vmatprep.subr.mxu0 0.0
      %2567 = vmatpush1.msra.mxu0 0.0
      %2568 = vmatprep.subr.mxu0 0.0
      %2569 = vmatpush1.msra.mxu0 0.0
      %2570 = vmatprep.subr.mxu0 0.0
      %2571 = vmatpush1.msra.mxu0 0.0
      %2572 = vmatprep.subr.mxu0 0.0
      %2573 = vmatpush1.msra.mxu0 0.0
      %2574 = vmatprep.subr.mxu0 0.0
      %2575 = vmatpush1.msra.mxu0 0.0
      %2576 = vmatprep.subr.mxu0 0.0
      %2577 = vmatpush1.msra.mxu0 0.0
      %2578 = vmatprep.subr.mxu0 0.0
      %2579 = vmatpush1.msra.mxu0 0.0
      %2580 = vmatprep.subr.mxu0 0.0
      %2581 = vmatpush1.msra.mxu0 0.0
      %2582 = vmatprep.subr.mxu0 0.0
      %2583 = vmatpush1.msra.mxu0 0.0
      %2584 = vmatprep.subr.mxu0 0.0
      %2585 = vmatpush1.msra.mxu0 0.0
      %2586 = vmatprep.subr.mxu0 0.0
      %2587 = vmatpush1.msra.mxu0 0.0
      %2588 = vmatprep.subr.mxu0 0.0
      %2589 = vmatpush1.msra.mxu0 0.0
      %2590 = vmatprep.subr.mxu0 0.0
      %2591 = vmatpush1.msra.mxu0 0.0
      %2592 = vmatprep.subr.mxu0 0.0
      %2593 = vmatpush1.msra.mxu0 0.0
      %2594 = vmatprep.subr.mxu0 0.0
      %2595 = vmatpush1.msra.mxu0 0.0
      %2596 = vmatprep.subr.mxu0 0.0
      %2597 = vmatpush1.msra.mxu0 0.0
      %2598 = vmatprep.subr.mxu0 0.0
      %2599 = vmatpush1.msra.mxu0 0.0
      %2600 = vmatprep.subr.mxu0 0.0
      %2601 = vmatpush1.msra.mxu0 0.0
      %2602 = vmatprep.subr.mxu0 0.0
      %2603 = vmatpush1.msra.mxu0 0.0
      %2604 = vmatprep.subr.mxu0 0.0
      %2605 = vmatpush1.msra.mxu0 0.0
      %2606 = vmatprep.subr.mxu0 0.0
      %2607 = vmatpush1.msra.mxu0 0.0
      %2608 = vmatprep.subr.mxu0 0.0
      %2609 = vmatpush1.msra.mxu0 0.0
      %2610 = vmatprep.mubr.f32.mxu0 0.0
      %2611 = vmatmul.mubr.f32.gmra.mrb[0].mxu0 %v404
      %v2612 = vpop.f32.mrb[0].mxu0
      %v2613 = vadd.f32 0.0, %v2612
      %v2614 = vpop.f32.mrb[0].mxu0
      %2615 = vmatprep.mubr.f32.mxu0 0.0
      %2616 = vmatmul.mubr.f32.gmra.mrb[0].mxu0 %v407
      %v2617 = vpop.f32.mrb[0].mxu0
      %v2618 = vadd.f32 0.0, %v2617
      %v2619 = vpop.f32.mrb[0].mxu0
      %2620 = vmatprep.mubr.f32.mxu0 0.0
      %2621 = vmatmul.mubr.f32.gmra.mrb[0].mxu0 %v410
      %v2622 = vpop.f32.mrb[0].mxu0
      %v2623 = vadd.f32 0.0, %v2622
      %v2624 = vpop.f32.mrb[0].mxu0
      %2625 = vmatprep.mubr.f32.mxu0 0.0
      %2626 = vmatmul.mubr.f32.gmra.mrb[0].mxu0 %v413
      %v2627 = vpop.f32.mrb[0].mxu0
      %v2628 = vadd.f32 0.0, %v2627
      %v2629 = vpop.f32.mrb[0].mxu0
      %2630 = vmatprep.mubr.f32.mxu0 0.0
      %2631 = vmatmul.mubr.f32.gmra.mrb[0].mxu0 %v416
      %v2632 = vpop.f32.mrb[0].mxu0
      %v2633 = vadd.f32 0.0, %v2632
      %v2634 = vpop.f32.mrb[0].mxu0
      %2635 = vdwg.mxu0
      %v2636 = vmax.f32 %v2518, 0.0
      %v2637 = vmax.f32 %v2520, 0.0
      %v2638 = vmax.f32 %v2613, 0.0
      %v2639 = vmax.f32 %v2524, 0.0
      %v2640 = vmax.f32 %v2526, 0.0
      %v2641 = vmax.f32 %v2618, 0.0
      %v2642 = vmax.f32 %v2530, 0.0
      %v2643 = vmax.f32 %v2532, 0.0
      %v2644 = vmax.f32 %v2623, 0.0
      %v2645 = vmax.f32 %v2536, 0.0
      %v2646 = vmax.f32 %v2538, 0.0
      %v2647 = vmax.f32 %v2628, 0.0
      %v2648 = vmax.f32 %v2542, 0.0
      %v2649 = vmax.f32 %v2544, 0.0
      %v2650 = vmax.f32 %v2633, 0.0
      %v2652 = vsel %vm632, %v2648, 0
      %v2655 = vsel %vm632, %v2649, 0
      %v2658 = vsel %vm632, %v2650, 0
      %2660 = vmatprep.subr.mxu0 %v2637
      %2661 = vmatpush1.msra.mxu0 %v2636
      %2662 = vmatprep.subr.mxu0 %v2640
      %2663 = vmatpush1.msra.mxu0 %v2639
      %2664 = vmatprep.subr.mxu0 %v2643
      %2665 = vmatpush1.msra.mxu0 %v2642
      %2666 = vmatprep.subr.mxu0 %v2646
      %2667 = vmatpush1.msra.mxu0 %v2645
      %2668 = vmatprep.subr.mxu0 %v2655
      %2669 = vmatpush1.msra.mxu0 %v2652
      %2670 = vmatprep.subr.mxu0 0.0
      %2671 = vmatpush1.msra.mxu0 0.0
      %2672 = vmatprep.subr.mxu0 0.0
      %2673 = vmatpush1.msra.mxu0 0.0
      %2674 = vmatprep.subr.mxu0 0.0
      %2675 = vmatpush1.msra.mxu0 0.0
      %2676 = vmatprep.subr.mxu0 0.0
      %2677 = vmatpush1.msra.mxu0 0.0
      %2678 = vmatprep.subr.mxu0 0.0
      %2679 = vmatpush1.msra.mxu0 0.0
      %2680 = vmatprep.subr.mxu0 0.0
      %2681 = vmatpush1.msra.mxu0 0.0
      %2682 = vmatprep.subr.mxu0 0.0
      %2683 = vmatpush1.msra.mxu0 0.0
      %2684 = vmatprep.subr.mxu0 0.0
      %2685 = vmatpush1.msra.mxu0 0.0
      %2686 = vmatprep.subr.mxu0 0.0
      %2687 = vmatpush1.msra.mxu0 0.0
      %2688 = vmatprep.subr.mxu0 0.0
      %2689 = vmatpush1.msra.mxu0 0.0
      %2690 = vmatprep.subr.mxu0 0.0
      %2691 = vmatpush1.msra.mxu0 0.0
      %2692 = vmatprep.subr.mxu0 0.0
      %2693 = vmatpush1.msra.mxu0 0.0
      %2694 = vmatprep.subr.mxu0 0.0
      %2695 = vmatpush1.msra.mxu0 0.0
      %2696 = vmatprep.subr.mxu0 0.0
      %2697 = vmatpush1.msra.mxu0 0.0
      %2698 = vmatprep.subr.mxu0 0.0
      %2699 = vmatpush1.msra.mxu0 0.0
      %2700 = vmatprep.subr.mxu0 0.0
      %2701 = vmatpush1.msra.mxu0 0.0
      %2702 = vmatprep.subr.mxu0 0.0
      %2703 = vmatpush1.msra.mxu0 0.0
      %2704 = vmatprep.subr.mxu0 0.0
      %2705 = vmatpush1.msra.mxu0 0.0
      %2706 = vmatprep.subr.mxu0 0.0
      %2707 = vmatpush1.msra.mxu0 0.0
      %2708 = vmatprep.subr.mxu0 0.0
      %2709 = vmatpush1.msra.mxu0 0.0
      %2710 = vmatprep.subr.mxu0 0.0
      %2711 = vmatpush1.msra.mxu0 0.0
      %2712 = vmatprep.subr.mxu0 0.0
      %2713 = vmatpush1.msra.mxu0 0.0
      %2714 = vmatprep.subr.mxu0 0.0
      %2715 = vmatpush1.msra.mxu0 0.0
      %2716 = vmatprep.subr.mxu0 0.0
      %2717 = vmatpush1.msra.mxu0 0.0
      %2718 = vmatprep.subr.mxu0 0.0
      %2719 = vmatpush1.msra.mxu0 0.0
      %2720 = vmatprep.subr.mxu0 0.0
      %2721 = vmatpush1.msra.mxu0 0.0
      %2722 = vmatprep.subr.mxu0 0.0
      %2723 = vmatpush1.msra.mxu0 0.0
      %2724 = vmatprep.mubr.f32.mxu0 0.0
      %2725 = vmatmul.mubr.f32.gmra.mrb[0].mxu0 %v630
      %v2726 = vpop.f32.mrb[0].mxu0
      %v2727 = vadd.f32 0.0, %v2726
      %v2728 = vpop.f32.mrb[0].mxu0
      %v2729 = vadd.f32 0.0, %v2728
      %2730 = vdwg.mxu0
      %2731 = vmatprep.subr.mxu0 0.0
      %2732 = vmatpush1.msra.mxu0 %v2638
      %2733 = vmatprep.subr.mxu0 0.0
      %2734 = vmatpush1.msra.mxu0 %v2641
      %2735 = vmatprep.subr.mxu0 0.0
      %2736 = vmatpush1.msra.mxu0 %v2644
      %2737 = vmatprep.subr.mxu0 0.0
      %2738 = vmatpush1.msra.mxu0 %v2647
      %2739 = vmatprep.subr.mxu0 0.0
      %2740 = vmatpush1.msra.mxu0 %v2658
      %2741 = vmatprep.subr.mxu0 0.0
      %2742 = vmatpush1.msra.mxu0 0.0
      %2743 = vmatprep.subr.mxu0 0.0
      %2744 = vmatpush1.msra.mxu0 0.0
      %2745 = vmatprep.subr.mxu0 0.0
      %2746 = vmatpush1.msra.mxu0 0.0
      %2747 = vmatprep.subr.mxu0 0.0
      %2748 = vmatpush1.msra.mxu0 0.0
      %2749 = vmatprep.subr.mxu0 0.0
      %2750 = vmatpush1.msra.mxu0 0.0
      %2751 = vmatprep.subr.mxu0 0.0
      %2752 = vmatpush1.msra.mxu0 0.0
      %2753 = vmatprep.subr.mxu0 0.0
      %2754 = vmatpush1.msra.mxu0 0.0
      %2755 = vmatprep.subr.mxu0 0.0
      %2756 = vmatpush1.msra.mxu0 0.0
      %2757 = vmatprep.subr.mxu0 0.0
      %2758 = vmatpush1.msra.mxu0 0.0
      %2759 = vmatprep.subr.mxu0 0.0
      %2760 = vmatpush1.msra.mxu0 0.0
      %2761 = vmatprep.subr.mxu0 0.0
      %2762 = vmatpush1.msra.mxu0 0.0
      %2763 = vmatprep.subr.mxu0 0.0
      %2764 = vmatpush1.msra.mxu0 0.0
      %2765 = vmatprep.subr.mxu0 0.0
      %2766 = vmatpush1.msra.mxu0 0.0
      %2767 = vmatprep.subr.mxu0 0.0
      %2768 = vmatpush1.msra.mxu0 0.0
      %2769 = vmatprep.subr.mxu0 0.0
      %2770 = vmatpush1.msra.mxu0 0.0
      %2771 = vmatprep.subr.mxu0 0.0
      %2772 = vmatpush1.msra.mxu0 0.0
      %2773 = vmatprep.subr.mxu0 0.0
      %2774 = vmatpush1.msra.mxu0 0.0
      %2775 = vmatprep.subr.mxu0 0.0
      %2776 = vmatpush1.msra.mxu0 0.0
      %2777 = vmatprep.subr.mxu0 0.0
      %2778 = vmatpush1.msra.mxu0 0.0
      %2779 = vmatprep.subr.mxu0 0.0
      %2780 = vmatpush1.msra.mxu0 0.0
      %2781 = vmatprep.subr.mxu0 0.0
      %2782 = vmatpush1.msra.mxu0 0.0
      %2783 = vmatprep.subr.mxu0 0.0
      %2784 = vmatpush1.msra.mxu0 0.0
      %2785 = vmatprep.subr.mxu0 0.0
      %2786 = vmatpush1.msra.mxu0 0.0
      %2787 = vmatprep.subr.mxu0 0.0
      %2788 = vmatpush1.msra.mxu0 0.0
      %2789 = vmatprep.subr.mxu0 0.0
      %2790 = vmatpush1.msra.mxu0 0.0
      %2791 = vmatprep.subr.mxu0 0.0
      %2792 = vmatpush1.msra.mxu0 0.0
      %2793 = vmatprep.subr.mxu0 0.0
      %2794 = vmatpush1.msra.mxu0 0.0
      %2795 = vmatprep.mubr.f32.mxu0 0.0
      %2796 = vmatmul.mubr.f32.gmra.mrb[0].mxu0 %v630
      %v2797 = vpop.f32.mrb[0].mxu0
      %v2798 = vadd.f32 0.0, %v2797
      %v2799 = vpop.f32.mrb[0].mxu0
      %2800 = vdwg.mxu0
      %vm2801 = vcmp.ge.f32.partialorder %v246, 4.0
      %vm2802 = vcmp.ge.f32.partialorder %v247, 4.0
      %v2805 = vcombine.low %v2727, %v2729
      %v2807 = vsel %vm2801, %v2805, 0.0
      %v2808 = vsel %vm2802, %v2798, 0.0
      %v2809 = vadd.f32 %v2304, %v2807
      %v2810 = vadd.f32 %v2305, %v2808
      %v2813 = vcombine.high %v2809, %v2809
      %2814 = vrot.lane.b32.xlu0 %v2809, 19
      %v2815 = vpop.permute.xlu0 %2814
      %2816 = vrot.lane.b32.xlu0 %v2813, 19
      %v2817 = vpop.permute.xlu0 %2816
      %2818 = vrot.lane.b32.xlu0 %v2810, 19
      %v2819 = vpop.permute.xlu0 %2818
      %v2820 = vsel %vm259, %v2815, %v2817
      %v2821 = vsel %vm259, %v2817, %v2819
      %2825 = vst.msk [vmem:[#allocation2] sm:$0xf] %vm265, %v2815
      %2826 = vst [vmem:[#allocation2 + $0x8] sm:$0xf] %v2820
      %2827 = vst [vmem:[#allocation2 + $0x10] sm:$0xf] %v2821
      %v2828 = vcombine.low %v2809, %v2809
      %v2829 = vcombine.low %v2810, %v2810
      %2830 = vrot.lane.b32.xlu0 %v2828, 18
      %v2831 = vpop.permute.xlu0 %2830
      %2832 = vrot.lane.b32.xlu0 %v2809, 18
      %v2833 = vpop.permute.xlu0 %2832
      %2834 = vrot.lane.b32.xlu0 %v2829, 18
      %v2835 = vpop.permute.xlu0 %2834
      %v2836 = vsel %vm277, %v2831, %v2833
      %v2837 = vsel %vm277, %v2833, %v2835
      %2841 = vst.msk [vmem:[#allocation2] sm:$0xf0] %vm283, %v2831
      %2842 = vst [vmem:[#allocation2 + $0x8] sm:$0xf0] %v2836
      %2843 = vst [vmem:[#allocation2 + $0x10] sm:$0xf0] %v2837
      %2844 = vrot.lane.b32.xlu0 %v2809, 17
      %v2845 = vpop.permute.xlu0 %2844
      %2846 = vrot.lane.b32.xlu0 %v2813, 17
      %v2847 = vpop.permute.xlu0 %2846
      %2848 = vrot.lane.b32.xlu0 %v2810, 17
      %v2849 = vpop.permute.xlu0 %2848
      %v2850 = vsel %vm293, %v2845, %v2847
      %v2851 = vsel %vm293, %v2847, %v2849
      %2855 = vst.msk [vmem:[#allocation2 + $0x18] sm:$0xf] %vm299, %v2845
      %2856 = vst [vmem:[#allocation2 + $0x20] sm:$0xf] %v2850
      %2857 = vst [vmem:[#allocation2 + $0x28] sm:$0xf] %v2851
      %2858 = vrot.lane.b32.xlu0 %v2828, 1
      %v2859 = vpop.permute.xlu0 %2858
      %2860 = vrot.lane.b32.xlu0 %v2809, 1
      %v2861 = vpop.permute.xlu0 %2860
      %2862 = vrot.lane.b32.xlu0 %v2829, 1
      %v2863 = vpop.permute.xlu0 %2862
      %v2864 = vsel %vm309, %v2859, %v2861
      %v2865 = vsel %vm309, %v2861, %v2863
      %2869 = vst.msk [vmem:[#allocation2 + $0x18] sm:$0xf0] %vm315, %v2859
      %2870 = vst [vmem:[#allocation2 + $0x20] sm:$0xf0] %v2864
      %2871 = vst [vmem:[#allocation2 + $0x28] sm:$0xf0] %v2865
      %2873 = vst [vmem:[#allocation2 + $0x30] sm:$0xf] %v2809
      %2874 = vst [vmem:[#allocation2 + $0x38] sm:$0xf] %v2813
      %2875 = vst [vmem:[#allocation2 + $0x40] sm:$0xf] %v2810
      %2876 = vrot.lane.b32.xlu0 %v2828, 127
      %v2877 = vpop.permute.xlu0 %2876
      %2878 = vrot.lane.b32.xlu0 %v2809, 127
      %v2879 = vpop.permute.xlu0 %2878
      %2880 = vrot.lane.b32.xlu0 %v2829, 127
      %v2881 = vpop.permute.xlu0 %2880
      %v2882 = vsel %vm329, %v2877, %v2879
      %v2883 = vsel %vm329, %v2879, %v2881
      %2887 = vst [vmem:[#allocation2 + $0x30] sm:$0xf0] %v2882
      %2888 = vst [vmem:[#allocation2 + $0x38] sm:$0xf0] %v2883
      %2889 = vst.msk [vmem:[#allocation2 + $0x40] sm:$0xf0] %vm337, %v2881
      %2890 = vrot.lane.b32.xlu0 %v2809, 111
      %v2891 = vpop.permute.xlu0 %2890
      %2892 = vrot.lane.b32.xlu0 %v2813, 111
      %v2893 = vpop.permute.xlu0 %2892
      %2894 = vrot.lane.b32.xlu0 %v2810, 111
      %v2895 = vpop.permute.xlu0 %2894
      %v2896 = vsel %vm345, %v2891, %v2893
      %v2897 = vsel %vm345, %v2893, %v2895
      %2901 = vst [vmem:[#allocation2 + $0x48] sm:$0xf] %v2896
      %2902 = vst [vmem:[#allocation2 + $0x50] sm:$0xf] %v2897
      %2903 = vst.msk [vmem:[#allocation2 + $0x58] sm:$0xf] %vm353, %v2895
      %2904 = vrot.lane.b32.xlu0 %v2828, 110
      %v2905 = vpop.permute.xlu0 %2904
      %2906 = vrot.lane.b32.xlu0 %v2809, 110
      %v2907 = vpop.permute.xlu0 %2906
      %2908 = vrot.lane.b32.xlu0 %v2829, 110
      %v2909 = vpop.permute.xlu0 %2908
      %v2910 = vsel %vm361, %v2905, %v2907
      %v2911 = vsel %vm361, %v2907, %v2909
      %2915 = vst [vmem:[#allocation2 + $0x48] sm:$0xf0] %v2910
      %2916 = vst [vmem:[#allocation2 + $0x50] sm:$0xf0] %v2911
      %2917 = vst.msk [vmem:[#allocation2 + $0x58] sm:$0xf0] %vm369, %v2909
      %2918 = vrot.lane.b32.xlu0 %v2809, 109
      %v2919 = vpop.permute.xlu0 %2918
      %2920 = vrot.lane.b32.xlu0 %v2813, 109
      %v2921 = vpop.permute.xlu0 %2920
      %2922 = vrot.lane.b32.xlu0 %v2810, 109
      %v2923 = vpop.permute.xlu0 %2922
      %v2924 = vsel %vm377, %v2919, %v2921
      %v2925 = vsel %vm377, %v2921, %v2923
      %2929 = vst [vmem:[#allocation2 + $0x60] sm:$0xf] %v2924
      %2930 = vst [vmem:[#allocation2 + $0x68] sm:$0xf] %v2925
      %2931 = vst.msk [vmem:[#allocation2 + $0x70] sm:$0xf] %vm385, %v2923
      %v2932 = vld [vmem:[#allocation2] sm:$0xff]
      %v2933 = vld [vmem:[#allocation2 + $0x8] sm:$0xff]
      %v2934 = vld [vmem:[#allocation2 + $0x10] sm:$0xff]
      %v2935 = vld [vmem:[#allocation2 + $0x18] sm:$0xff]
      %v2936 = vld [vmem:[#allocation2 + $0x20] sm:$0xff]
      %v2937 = vld [vmem:[#allocation2 + $0x28] sm:$0xff]
      %v2938 = vld [vmem:[#allocation2 + $0x30] sm:$0xff]
      %v2939 = vld [vmem:[#allocation2 + $0x38] sm:$0xff]
      %v2940 = vld [vmem:[#allocation2 + $0x40] sm:$0xff]
      %v2941 = vld [vmem:[#allocation2 + $0x48] sm:$0xff]
      %v2942 = vld [vmem:[#allocation2 + $0x50] sm:$0xff]
      %v2943 = vld [vmem:[#allocation2 + $0x58] sm:$0xff]
      %v2944 = vld [vmem:[#allocation2 + $0x60] sm:$0x1f]
      %v2945 = vld [vmem:[#allocation2 + $0x68] sm:$0x1f]
      %v2946 = vld [vmem:[#allocation2 + $0x70] sm:$0x1f]
      %v2948 = vsel %vm418, %v2944, 0
      %v2951 = vsel %vm418, %v2945, 0
      %v2954 = vsel %vm418, %v2946, 0
      %2956 = vmatprep.subr.mxu0 %v2933
      %2957 = vmatpush1.msra.mxu0 %v2932
      %2958 = vmatprep.subr.mxu0 %v2936
      %2959 = vmatpush1.msra.mxu0 %v2935
      %2960 = vmatprep.subr.mxu0 %v2939
      %2961 = vmatpush1.msra.mxu0 %v2938
      %2962 = vmatprep.subr.mxu0 %v2942
      %2963 = vmatpush1.msra.mxu0 %v2941
      %2964 = vmatprep.subr.mxu0 %v2951
      %2965 = vmatpush1.msra.mxu0 %v2948
      %2966 = vmatprep.subr.mxu0 0.0
      %2967 = vmatpush1.msra.mxu0 0.0
      %2968 = vmatprep.subr.mxu0 0.0
      %2969 = vmatpush1.msra.mxu0 0.0
      %2970 = vmatprep.subr.mxu0 0.0
      %2971 = vmatpush1.msra.mxu0 0.0
      %2972 = vmatprep.subr.mxu0 0.0
      %2973 = vmatpush1.msra.mxu0 0.0
      %2974 = vmatprep.subr.mxu0 0.0
      %2975 = vmatpush1.msra.mxu0 0.0
      %2976 = vmatprep.subr.mxu0 0.0
      %2977 = vmatpush1.msra.mxu0 0.0
      %2978 = vmatprep.subr.mxu0 0.0
      %2979 = vmatpush1.msra.mxu0 0.0
      %2980 = vmatprep.subr.mxu0 0.0
      %2981 = vmatpush1.msra.mxu0 0.0
      %2982 = vmatprep.subr.mxu0 0.0
      %2983 = vmatpush1.msra.mxu0 0.0
      %2984 = vmatprep.subr.mxu0 0.0
      %2985 = vmatpush1.msra.mxu0 0.0
      %2986 = vmatprep.subr.mxu0 0.0
      %2987 = vmatpush1.msra.mxu0 0.0
      %2988 = vmatprep.subr.mxu0 0.0
      %2989 = vmatpush1.msra.mxu0 0.0
      %2990 = vmatprep.subr.mxu0 0.0
      %2991 = vmatpush1.msra.mxu0 0.0
      %2992 = vmatprep.subr.mxu0 0.0
      %2993 = vmatpush1.msra.mxu0 0.0
      %2994 = vmatprep.subr.mxu0 0.0
      %2995 = vmatpush1.msra.mxu0 0.0
      %2996 = vmatprep.subr.mxu0 0.0
      %2997 = vmatpush1.msra.mxu0 0.0
      %2998 = vmatprep.subr.mxu0 0.0
      %2999 = vmatpush1.msra.mxu0 0.0
      %3000 = vmatprep.subr.mxu0 0.0
      %3001 = vmatpush1.msra.mxu0 0.0
      %3002 = vmatprep.subr.mxu0 0.0
      %3003 = vmatpush1.msra.mxu0 0.0
      %3004 = vmatprep.subr.mxu0 0.0
      %3005 = vmatpush1.msra.mxu0 0.0
      %3006 = vmatprep.subr.mxu0 0.0
      %3007 = vmatpush1.msra.mxu0 0.0
      %3008 = vmatprep.subr.mxu0 0.0
      %3009 = vmatpush1.msra.mxu0 0.0
      %3010 = vmatprep.subr.mxu0 0.0
      %3011 = vmatpush1.msra.mxu0 0.0
      %3012 = vmatprep.subr.mxu0 0.0
      %3013 = vmatpush1.msra.mxu0 0.0
      %3014 = vmatprep.subr.mxu0 0.0
      %3015 = vmatpush1.msra.mxu0 0.0
      %3016 = vmatprep.subr.mxu0 0.0
      %3017 = vmatpush1.msra.mxu0 0.0
      %3018 = vmatprep.subr.mxu0 0.0
      %3019 = vmatpush1.msra.mxu0 0.0
      %3020 = vmatprep.mubr.f32.mxu0 0.0
      %3021 = vmatmul.mubr.f32.gmra.mrb[0].mxu0 %v404
      %v3022 = vpop.f32.mrb[0].mxu0
      %v3023 = vadd.f32 0.0, %v3022
      %v3024 = vpop.f32.mrb[0].mxu0
      %v3025 = vadd.f32 0.0, %v3024
      %3026 = vmatprep.mubr.f32.mxu0 0.0
      %3027 = vmatmul.mubr.f32.gmra.mrb[0].mxu0 %v407
      %v3028 = vpop.f32.mrb[0].mxu0
      %v3029 = vadd.f32 0.0, %v3028
      %v3030 = vpop.f32.mrb[0].mxu0
      %v3031 = vadd.f32 0.0, %v3030
      %3032 = vmatprep.mubr.f32.mxu0 0.0
      %3033 = vmatmul.mubr.f32.gmra.mrb[0].mxu0 %v410
      %v3034 = vpop.f32.mrb[0].mxu0
      %v3035 = vadd.f32 0.0, %v3034
      %v3036 = vpop.f32.mrb[0].mxu0
      %v3037 = vadd.f32 0.0, %v3036
      %3038 = vmatprep.mubr.f32.mxu0 0.0
      %3039 = vmatmul.mubr.f32.gmra.mrb[0].mxu0 %v413
      %v3040 = vpop.f32.mrb[0].mxu0
      %v3041 = vadd.f32 0.0, %v3040
      %v3042 = vpop.f32.mrb[0].mxu0
      %v3043 = vadd.f32 0.0, %v3042
      %3044 = vmatprep.mubr.f32.mxu0 0.0
      %3045 = vmatmul.mubr.f32.gmra.mrb[0].mxu0 %v416
      %v3046 = vpop.f32.mrb[0].mxu0
      %v3047 = vadd.f32 0.0, %v3046
      %v3048 = vpop.f32.mrb[0].mxu0
      %v3049 = vadd.f32 0.0, %v3048
      %3050 = vdwg.mxu0
      %3051 = vmatprep.subr.mxu0 0.0
      %3052 = vmatpush1.msra.mxu0 %v2934
      %3053 = vmatprep.subr.mxu0 0.0
      %3054 = vmatpush1.msra.mxu0 %v2937
      %3055 = vmatprep.subr.mxu0 0.0
      %3056 = vmatpush1.msra.mxu0 %v2940
      %3057 = vmatprep.subr.mxu0 0.0
      %3058 = vmatpush1.msra.mxu0 %v2943
      %3059 = vmatprep.subr.mxu0 0.0
      %3060 = vmatpush1.msra.mxu0 %v2954
      %3061 = vmatprep.subr.mxu0 0.0
      %3062 = vmatpush1.msra.mxu0 0.0
      %3063 = vmatprep.subr.mxu0 0.0
      %3064 = vmatpush1.msra.mxu0 0.0
      %3065 = vmatprep.subr.mxu0 0.0
      %3066 = vmatpush1.msra.mxu0 0.0
      %3067 = vmatprep.subr.mxu0 0.0
      %3068 = vmatpush1.msra.mxu0 0.0
      %3069 = vmatprep.subr.mxu0 0.0
      %3070 = vmatpush1.msra.mxu0 0.0
      %3071 = vmatprep.subr.mxu0 0.0
      %3072 = vmatpush1.msra.mxu0 0.0
      %3073 = vmatprep.subr.mxu0 0.0
      %3074 = vmatpush1.msra.mxu0 0.0
      %3075 = vmatprep.subr.mxu0 0.0
      %3076 = vmatpush1.msra.mxu0 0.0
      %3077 = vmatprep.subr.mxu0 0.0
      %3078 = vmatpush1.msra.mxu0 0.0
      %3079 = vmatprep.subr.mxu0 0.0
      %3080 = vmatpush1.msra.mxu0 0.0
      %3081 = vmatprep.subr.mxu0 0.0
      %3082 = vmatpush1.msra.mxu0 0.0
      %3083 = vmatprep.subr.mxu0 0.0
      %3084 = vmatpush1.msra.mxu0 0.0
      %3085 = vmatprep.subr.mxu0 0.0
      %3086 = vmatpush1.msra.mxu0 0.0
      %3087 = vmatprep.subr.mxu0 0.0
      %3088 = vmatpush1.msra.mxu0 0.0
      %3089 = vmatprep.subr.mxu0 0.0
      %3090 = vmatpush1.msra.mxu0 0.0
      %3091 = vmatprep.subr.mxu0 0.0
      %3092 = vmatpush1.msra.mxu0 0.0
      %3093 = vmatprep.subr.mxu0 0.0
      %3094 = vmatpush1.msra.mxu0 0.0
      %3095 = vmatprep.subr.mxu0 0.0
      %3096 = vmatpush1.msra.mxu0 0.0
      %3097 = vmatprep.subr.mxu0 0.0
      %3098 = vmatpush1.msra.mxu0 0.0
      %3099 = vmatprep.subr.mxu0 0.0
      %3100 = vmatpush1.msra.mxu0 0.0
      %3101 = vmatprep.subr.mxu0 0.0
      %3102 = vmatpush1.msra.mxu0 0.0
      %3103 = vmatprep.subr.mxu0 0.0
      %3104 = vmatpush1.msra.mxu0 0.0
      %3105 = vmatprep.subr.mxu0 0.0
      %3106 = vmatpush1.msra.mxu0 0.0
      %3107 = vmatprep.subr.mxu0 0.0
      %3108 = vmatpush1.msra.mxu0 0.0
      %3109 = vmatprep.subr.mxu0 0.0
      %3110 = vmatpush1.msra.mxu0 0.0
      %3111 = vmatprep.subr.mxu0 0.0
      %3112 = vmatpush1.msra.mxu0 0.0
      %3113 = vmatprep.subr.mxu0 0.0
      %3114 = vmatpush1.msra.mxu0 0.0
      %3115 = vmatprep.mubr.f32.mxu0 0.0
      %3116 = vmatmul.mubr.f32.gmra.mrb[0].mxu0 %v404
      %v3117 = vpop.f32.mrb[0].mxu0
      %v3118 = vadd.f32 0.0, %v3117
      %v3119 = vpop.f32.mrb[0].mxu0
      %3120 = vmatprep.mubr.f32.mxu0 0.0
      %3121 = vmatmul.mubr.f32.gmra.mrb[0].mxu0 %v407
      %v3122 = vpop.f32.mrb[0].mxu0
      %v3123 = vadd.f32 0.0, %v3122
      %v3124 = vpop.f32.mrb[0].mxu0
      %3125 = vmatprep.mubr.f32.mxu0 0.0
      %3126 = vmatmul.mubr.f32.gmra.mrb[0].mxu0 %v410
      %v3127 = vpop.f32.mrb[0].mxu0
      %v3128 = vadd.f32 0.0, %v3127
      %v3129 = vpop.f32.mrb[0].mxu0
      %3130 = vmatprep.mubr.f32.mxu0 0.0
      %3131 = vmatmul.mubr.f32.gmra.mrb[0].mxu0 %v413
      %v3132 = vpop.f32.mrb[0].mxu0
      %v3133 = vadd.f32 0.0, %v3132
      %v3134 = vpop.f32.mrb[0].mxu0
      %3135 = vmatprep.mubr.f32.mxu0 0.0
      %3136 = vmatmul.mubr.f32.gmra.mrb[0].mxu0 %v416
      %v3137 = vpop.f32.mrb[0].mxu0
      %v3138 = vadd.f32 0.0, %v3137
      %v3139 = vpop.f32.mrb[0].mxu0
      %3140 = vdwg.mxu0
      %v3141 = vmax.f32 %v3023, 0.0
      %v3142 = vmax.f32 %v3025, 0.0
      %v3143 = vmax.f32 %v3118, 0.0
      %v3144 = vmax.f32 %v3029, 0.0
      %v3145 = vmax.f32 %v3031, 0.0
      %v3146 = vmax.f32 %v3123, 0.0
      %v3147 = vmax.f32 %v3035, 0.0
      %v3148 = vmax.f32 %v3037, 0.0
      %v3149 = vmax.f32 %v3128, 0.0
      %v3150 = vmax.f32 %v3041, 0.0
      %v3151 = vmax.f32 %v3043, 0.0
      %v3152 = vmax.f32 %v3133, 0.0
      %v3153 = vmax.f32 %v3047, 0.0
      %v3154 = vmax.f32 %v3049, 0.0
      %v3155 = vmax.f32 %v3138, 0.0
      %v3157 = vsel %vm632, %v3153, 0
      %v3160 = vsel %vm632, %v3154, 0
      %v3163 = vsel %vm632, %v3155, 0
      %3165 = vmatprep.subr.mxu0 %v3142
      %3166 = vmatpush1.msra.mxu0 %v3141
      %3167 = vmatprep.subr.mxu0 %v3145
      %3168 = vmatpush1.msra.mxu0 %v3144
      %3169 = vmatprep.subr.mxu0 %v3148
      %3170 = vmatpush1.msra.mxu0 %v3147
      %3171 = vmatprep.subr.mxu0 %v3151
      %3172 = vmatpush1.msra.mxu0 %v3150
      %3173 = vmatprep.subr.mxu0 %v3160
      %3174 = vmatpush1.msra.mxu0 %v3157
      %3175 = vmatprep.subr.mxu0 0.0
      %3176 = vmatpush1.msra.mxu0 0.0
      %3177 = vmatprep.subr.mxu0 0.0
      %3178 = vmatpush1.msra.mxu0 0.0
      %3179 = vmatprep.subr.mxu0 0.0
      %3180 = vmatpush1.msra.mxu0 0.0
      %3181 = vmatprep.subr.mxu0 0.0
      %3182 = vmatpush1.msra.mxu0 0.0
      %3183 = vmatprep.subr.mxu0 0.0
      %3184 = vmatpush1.msra.mxu0 0.0
      %3185 = vmatprep.subr.mxu0 0.0
      %3186 = vmatpush1.msra.mxu0 0.0
      %3187 = vmatprep.subr.mxu0 0.0
      %3188 = vmatpush1.msra.mxu0 0.0
      %3189 = vmatprep.subr.mxu0 0.0
      %3190 = vmatpush1.msra.mxu0 0.0
      %3191 = vmatprep.subr.mxu0 0.0
      %3192 = vmatpush1.msra.mxu0 0.0
      %3193 = vmatprep.subr.mxu0 0.0
      %3194 = vmatpush1.msra.mxu0 0.0
      %3195 = vmatprep.subr.mxu0 0.0
      %3196 = vmatpush1.msra.mxu0 0.0
      %3197 = vmatprep.subr.mxu0 0.0
      %3198 = vmatpush1.msra.mxu0 0.0
      %3199 = vmatprep.subr.mxu0 0.0
      %3200 = vmatpush1.msra.mxu0 0.0
      %3201 = vmatprep.subr.mxu0 0.0
      %3202 = vmatpush1.msra.mxu0 0.0
      %3203 = vmatprep.subr.mxu0 0.0
      %3204 = vmatpush1.msra.mxu0 0.0
      %3205 = vmatprep.subr.mxu0 0.0
      %3206 = vmatpush1.msra.mxu0 0.0
      %3207 = vmatprep.subr.mxu0 0.0
      %3208 = vmatpush1.msra.mxu0 0.0
      %3209 = vmatprep.subr.mxu0 0.0
      %3210 = vmatpush1.msra.mxu0 0.0
      %3211 = vmatprep.subr.mxu0 0.0
      %3212 = vmatpush1.msra.mxu0 0.0
      %3213 = vmatprep.subr.mxu0 0.0
      %3214 = vmatpush1.msra.mxu0 0.0
      %3215 = vmatprep.subr.mxu0 0.0
      %3216 = vmatpush1.msra.mxu0 0.0
      %3217 = vmatprep.subr.mxu0 0.0
      %3218 = vmatpush1.msra.mxu0 0.0
      %3219 = vmatprep.subr.mxu0 0.0
      %3220 = vmatpush1.msra.mxu0 0.0
      %3221 = vmatprep.subr.mxu0 0.0
      %3222 = vmatpush1.msra.mxu0 0.0
      %3223 = vmatprep.subr.mxu0 0.0
      %3224 = vmatpush1.msra.mxu0 0.0
      %3225 = vmatprep.subr.mxu0 0.0
      %3226 = vmatpush1.msra.mxu0 0.0
      %3227 = vmatprep.subr.mxu0 0.0
      %3228 = vmatpush1.msra.mxu0 0.0
      %3229 = vmatprep.mubr.f32.mxu0 0.0
      %3230 = vmatmul.mubr.f32.gmra.mrb[0].mxu0 %v630
      %v3231 = vpop.f32.mrb[0].mxu0
      %v3232 = vadd.f32 0.0, %v3231
      %v3233 = vpop.f32.mrb[0].mxu0
      %v3234 = vadd.f32 0.0, %v3233
      %3235 = vdwg.mxu0
      %3236 = vmatprep.subr.mxu0 0.0
      %3237 = vmatpush1.msra.mxu0 %v3143
      %3238 = vmatprep.subr.mxu0 0.0
      %3239 = vmatpush1.msra.mxu0 %v3146
      %3240 = vmatprep.subr.mxu0 0.0
      %3241 = vmatpush1.msra.mxu0 %v3149
      %3242 = vmatprep.subr.mxu0 0.0
      %3243 = vmatpush1.msra.mxu0 %v3152
      %3244 = vmatprep.subr.mxu0 0.0
      %3245 = vmatpush1.msra.mxu0 %v3163
      %3246 = vmatprep.subr.mxu0 0.0
      %3247 = vmatpush1.msra.mxu0 0.0
      %3248 = vmatprep.subr.mxu0 0.0
      %3249 = vmatpush1.msra.mxu0 0.0
      %3250 = vmatprep.subr.mxu0 0.0
      %3251 = vmatpush1.msra.mxu0 0.0
      %3252 = vmatprep.subr.mxu0 0.0
      %3253 = vmatpush1.msra.mxu0 0.0
      %3254 = vmatprep.subr.mxu0 0.0
      %3255 = vmatpush1.msra.mxu0 0.0
      %3256 = vmatprep.subr.mxu0 0.0
      %3257 = vmatpush1.msra.mxu0 0.0
      %3258 = vmatprep.subr.mxu0 0.0
      %3259 = vmatpush1.msra.mxu0 0.0
      %3260 = vmatprep.subr.mxu0 0.0
      %3261 = vmatpush1.msra.mxu0 0.0
      %3262 = vmatprep.subr.mxu0 0.0
      %3263 = vmatpush1.msra.mxu0 0.0
      %3264 = vmatprep.subr.mxu0 0.0
      %3265 = vmatpush1.msra.mxu0 0.0
      %3266 = vmatprep.subr.mxu0 0.0
      %3267 = vmatpush1.msra.mxu0 0.0
      %3268 = vmatprep.subr.mxu0 0.0
      %3269 = vmatpush1.msra.mxu0 0.0
      %3270 = vmatprep.subr.mxu0 0.0
      %3271 = vmatpush1.msra.mxu0 0.0
      %3272 = vmatprep.subr.mxu0 0.0
      %3273 = vmatpush1.msra.mxu0 0.0
      %3274 = vmatprep.subr.mxu0 0.0
      %3275 = vmatpush1.msra.mxu0 0.0
      %3276 = vmatprep.subr.mxu0 0.0
      %3277 = vmatpush1.msra.mxu0 0.0
      %3278 = vmatprep.subr.mxu0 0.0
      %3279 = vmatpush1.msra.mxu0 0.0
      %3280 = vmatprep.subr.mxu0 0.0
      %3281 = vmatpush1.msra.mxu0 0.0
      %3282 = vmatprep.subr.mxu0 0.0
      %3283 = vmatpush1.msra.mxu0 0.0
      %3284 = vmatprep.subr.mxu0 0.0
      %3285 = vmatpush1.msra.mxu0 0.0
      %3286 = vmatprep.subr.mxu0 0.0
      %3287 = vmatpush1.msra.mxu0 0.0
      %3288 = vmatprep.subr.mxu0 0.0
      %3289 = vmatpush1.msra.mxu0 0.0
      %3290 = vmatprep.subr.mxu0 0.0
      %3291 = vmatpush1.msra.mxu0 0.0
      %3292 = vmatprep.subr.mxu0 0.0
      %3293 = vmatpush1.msra.mxu0 0.0
      %3294 = vmatprep.subr.mxu0 0.0
      %3295 = vmatpush1.msra.mxu0 0.0
      %3296 = vmatprep.subr.mxu0 0.0
      %3297 = vmatpush1.msra.mxu0 0.0
      %3298 = vmatprep.subr.mxu0 0.0
      %3299 = vmatpush1.msra.mxu0 0.0
      %3300 = vmatprep.mubr.f32.mxu0 0.0
      %3301 = vmatmul.mubr.f32.gmra.mrb[0].mxu0 %v630
      %v3302 = vpop.f32.mrb[0].mxu0
      %v3303 = vadd.f32 0.0, %v3302
      %v3304 = vpop.f32.mrb[0].mxu0
      %3305 = vdwg.mxu0
      %vm3306 = vcmp.ge.f32.partialorder %v246, 5.0
      %vm3307 = vcmp.ge.f32.partialorder %v247, 5.0
      %v3310 = vcombine.low %v3232, %v3234
      %v3312 = vsel %vm3306, %v3310, 0.0
      %v3313 = vsel %vm3307, %v3303, 0.0
      %v3314 = vadd.f32 %v2809, %v3312
      %v3315 = vadd.f32 %v2810, %v3313
      %v3318 = vcombine.high %v3314, %v3314
      %3319 = vrot.lane.b32.xlu0 %v3314, 19
      %v3320 = vpop.permute.xlu0 %3319
      %3321 = vrot.lane.b32.xlu0 %v3318, 19
      %v3322 = vpop.permute.xlu0 %3321
      %3323 = vrot.lane.b32.xlu0 %v3315, 19
      %v3324 = vpop.permute.xlu0 %3323
      %v3325 = vsel %vm259, %v3320, %v3322
      %v3326 = vsel %vm259, %v3322, %v3324
      %3330 = vst.msk [vmem:[#allocation2] sm:$0xf] %vm265, %v3320
      %3331 = vst [vmem:[#allocation2 + $0x8] sm:$0xf] %v3325
      %3332 = vst [vmem:[#allocation2 + $0x10] sm:$0xf] %v3326
      %v3333 = vcombine.low %v3314, %v3314
      %v3334 = vcombine.low %v3315, %v3315
      %3335 = vrot.lane.b32.xlu0 %v3333, 18
      %v3336 = vpop.permute.xlu0 %3335
      %3337 = vrot.lane.b32.xlu0 %v3314, 18
      %v3338 = vpop.permute.xlu0 %3337
      %3339 = vrot.lane.b32.xlu0 %v3334, 18
      %v3340 = vpop.permute.xlu0 %3339
      %v3341 = vsel %vm277, %v3336, %v3338
      %v3342 = vsel %vm277, %v3338, %v3340
      %3346 = vst.msk [vmem:[#allocation2] sm:$0xf0] %vm283, %v3336
      %3347 = vst [vmem:[#allocation2 + $0x8] sm:$0xf0] %v3341
      %3348 = vst [vmem:[#allocation2 + $0x10] sm:$0xf0] %v3342
      %3349 = vrot.lane.b32.xlu0 %v3314, 17
      %v3350 = vpop.permute.xlu0 %3349
      %3351 = vrot.lane.b32.xlu0 %v3318, 17
      %v3352 = vpop.permute.xlu0 %3351
      %3353 = vrot.lane.b32.xlu0 %v3315, 17
      %v3354 = vpop.permute.xlu0 %3353
      %v3355 = vsel %vm293, %v3350, %v3352
      %v3356 = vsel %vm293, %v3352, %v3354
      %3360 = vst.msk [vmem:[#allocation2 + $0x18] sm:$0xf] %vm299, %v3350
      %3361 = vst [vmem:[#allocation2 + $0x20] sm:$0xf] %v3355
      %3362 = vst [vmem:[#allocation2 + $0x28] sm:$0xf] %v3356
      %3363 = vrot.lane.b32.xlu0 %v3333, 1
      %v3364 = vpop.permute.xlu0 %3363
      %3365 = vrot.lane.b32.xlu0 %v3314, 1
      %v3366 = vpop.permute.xlu0 %3365
      %3367 = vrot.lane.b32.xlu0 %v3334, 1
      %v3368 = vpop.permute.xlu0 %3367
      %v3369 = vsel %vm309, %v3364, %v3366
      %v3370 = vsel %vm309, %v3366, %v3368
      %3374 = vst.msk [vmem:[#allocation2 + $0x18] sm:$0xf0] %vm315, %v3364
      %3375 = vst [vmem:[#allocation2 + $0x20] sm:$0xf0] %v3369
      %3376 = vst [vmem:[#allocation2 + $0x28] sm:$0xf0] %v3370
      %3378 = vst [vmem:[#allocation2 + $0x30] sm:$0xf] %v3314
      %3379 = vst [vmem:[#allocation2 + $0x38] sm:$0xf] %v3318
      %3380 = vst [vmem:[#allocation2 + $0x40] sm:$0xf] %v3315
      %3381 = vrot.lane.b32.xlu0 %v3333, 127
      %v3382 = vpop.permute.xlu0 %3381
      %3383 = vrot.lane.b32.xlu0 %v3314, 127
      %v3384 = vpop.permute.xlu0 %3383
      %3385 = vrot.lane.b32.xlu0 %v3334, 127
      %v3386 = vpop.permute.xlu0 %3385
      %v3387 = vsel %vm329, %v3382, %v3384
      %v3388 = vsel %vm329, %v3384, %v3386
      %3392 = vst [vmem:[#allocation2 + $0x30] sm:$0xf0] %v3387
      %3393 = vst [vmem:[#allocation2 + $0x38] sm:$0xf0] %v3388
      %3394 = vst.msk [vmem:[#allocation2 + $0x40] sm:$0xf0] %vm337, %v3386
      %3395 = vrot.lane.b32.xlu0 %v3314, 111
      %v3396 = vpop.permute.xlu0 %3395
      %3397 = vrot.lane.b32.xlu0 %v3318, 111
      %v3398 = vpop.permute.xlu0 %3397
      %3399 = vrot.lane.b32.xlu0 %v3315, 111
      %v3400 = vpop.permute.xlu0 %3399
      %v3401 = vsel %vm345, %v3396, %v3398
      %v3402 = vsel %vm345, %v3398, %v3400
      %3406 = vst [vmem:[#allocation2 + $0x48] sm:$0xf] %v3401
      %3407 = vst [vmem:[#allocation2 + $0x50] sm:$0xf] %v3402
      %3408 = vst.msk [vmem:[#allocation2 + $0x58] sm:$0xf] %vm353, %v3400
      %3409 = vrot.lane.b32.xlu0 %v3333, 110
      %v3410 = vpop.permute.xlu0 %3409
      %3411 = vrot.lane.b32.xlu0 %v3314, 110
      %v3412 = vpop.permute.xlu0 %3411
      %3413 = vrot.lane.b32.xlu0 %v3334, 110
      %v3414 = vpop.permute.xlu0 %3413
      %v3415 = vsel %vm361, %v3410, %v3412
      %v3416 = vsel %vm361, %v3412, %v3414
      %3420 = vst [vmem:[#allocation2 + $0x48] sm:$0xf0] %v3415
      %3421 = vst [vmem:[#allocation2 + $0x50] sm:$0xf0] %v3416
      %3422 = vst.msk [vmem:[#allocation2 + $0x58] sm:$0xf0] %vm369, %v3414
      %3423 = vrot.lane.b32.xlu0 %v3314, 109
      %v3424 = vpop.permute.xlu0 %3423
      %3425 = vrot.lane.b32.xlu0 %v3318, 109
      %v3426 = vpop.permute.xlu0 %3425
      %3427 = vrot.lane.b32.xlu0 %v3315, 109
      %v3428 = vpop.permute.xlu0 %3427
      %v3429 = vsel %vm377, %v3424, %v3426
      %v3430 = vsel %vm377, %v3426, %v3428
      %3434 = vst [vmem:[#allocation2 + $0x60] sm:$0xf] %v3429
      %3435 = vst [vmem:[#allocation2 + $0x68] sm:$0xf] %v3430
      %3436 = vst.msk [vmem:[#allocation2 + $0x70] sm:$0xf] %vm385, %v3428
      %v3437 = vld [vmem:[#allocation2] sm:$0xff]
      %v3438 = vld [vmem:[#allocation2 + $0x8] sm:$0xff]
      %v3439 = vld [vmem:[#allocation2 + $0x10] sm:$0xff]
      %v3440 = vld [vmem:[#allocation2 + $0x18] sm:$0xff]
      %v3441 = vld [vmem:[#allocation2 + $0x20] sm:$0xff]
      %v3442 = vld [vmem:[#allocation2 + $0x28] sm:$0xff]
      %v3443 = vld [vmem:[#allocation2 + $0x30] sm:$0xff]
      %v3444 = vld [vmem:[#allocation2 + $0x38] sm:$0xff]
      %v3445 = vld [vmem:[#allocation2 + $0x40] sm:$0xff]
      %v3446 = vld [vmem:[#allocation2 + $0x48] sm:$0xff]
      %v3447 = vld [vmem:[#allocation2 + $0x50] sm:$0xff]
      %v3448 = vld [vmem:[#allocation2 + $0x58] sm:$0xff]
      %v3449 = vld [vmem:[#allocation2 + $0x60] sm:$0x1f]
      %v3450 = vld [vmem:[#allocation2 + $0x68] sm:$0x1f]
      %v3451 = vld [vmem:[#allocation2 + $0x70] sm:$0x1f]
      %v3453 = vsel %vm418, %v3449, 0
      %v3456 = vsel %vm418, %v3450, 0
      %v3459 = vsel %vm418, %v3451, 0
      %3461 = vmatprep.subr.mxu0 %v3438
      %3462 = vmatpush1.msra.mxu0 %v3437
      %3463 = vmatprep.subr.mxu0 %v3441
      %3464 = vmatpush1.msra.mxu0 %v3440
      %3465 = vmatprep.subr.mxu0 %v3444
      %3466 = vmatpush1.msra.mxu0 %v3443
      %3467 = vmatprep.subr.mxu0 %v3447
      %3468 = vmatpush1.msra.mxu0 %v3446
      %3469 = vmatprep.subr.mxu0 %v3456
      %3470 = vmatpush1.msra.mxu0 %v3453
      %3471 = vmatprep.subr.mxu0 0.0
      %3472 = vmatpush1.msra.mxu0 0.0
      %3473 = vmatprep.subr.mxu0 0.0
      %3474 = vmatpush1.msra.mxu0 0.0
      %3475 = vmatprep.subr.mxu0 0.0
      %3476 = vmatpush1.msra.mxu0 0.0
      %3477 = vmatprep.subr.mxu0 0.0
      %3478 = vmatpush1.msra.mxu0 0.0
      %3479 = vmatprep.subr.mxu0 0.0
      %3480 = vmatpush1.msra.mxu0 0.0
      %3481 = vmatprep.subr.mxu0 0.0
      %3482 = vmatpush1.msra.mxu0 0.0
      %3483 = vmatprep.subr.mxu0 0.0
      %3484 = vmatpush1.msra.mxu0 0.0
      %3485 = vmatprep.subr.mxu0 0.0
      %3486 = vmatpush1.msra.mxu0 0.0
      %3487 = vmatprep.subr.mxu0 0.0
      %3488 = vmatpush1.msra.mxu0 0.0
      %3489 = vmatprep.subr.mxu0 0.0
      %3490 = vmatpush1.msra.mxu0 0.0
      %3491 = vmatprep.subr.mxu0 0.0
      %3492 = vmatpush1.msra.mxu0 0.0
      %3493 = vmatprep.subr.mxu0 0.0
      %3494 = vmatpush1.msra.mxu0 0.0
      %3495 = vmatprep.subr.mxu0 0.0
      %3496 = vmatpush1.msra.mxu0 0.0
      %3497 = vmatprep.subr.mxu0 0.0
      %3498 = vmatpush1.msra.mxu0 0.0
      %3499 = vmatprep.subr.mxu0 0.0
      %3500 = vmatpush1.msra.mxu0 0.0
      %3501 = vmatprep.subr.mxu0 0.0
      %3502 = vmatpush1.msra.mxu0 0.0
      %3503 = vmatprep.subr.mxu0 0.0
      %3504 = vmatpush1.msra.mxu0 0.0
      %3505 = vmatprep.subr.mxu0 0.0
      %3506 = vmatpush1.msra.mxu0 0.0
      %3507 = vmatprep.subr.mxu0 0.0
      %3508 = vmatpush1.msra.mxu0 0.0
      %3509 = vmatprep.subr.mxu0 0.0
      %3510 = vmatpush1.msra.mxu0 0.0
      %3511 = vmatprep.subr.mxu0 0.0
      %3512 = vmatpush1.msra.mxu0 0.0
      %3513 = vmatprep.subr.mxu0 0.0
      %3514 = vmatpush1.msra.mxu0 0.0
      %3515 = vmatprep.subr.mxu0 0.0
      %3516 = vmatpush1.msra.mxu0 0.0
      %3517 = vmatprep.subr.mxu0 0.0
      %3518 = vmatpush1.msra.mxu0 0.0
      %3519 = vmatprep.subr.mxu0 0.0
      %3520 = vmatpush1.msra.mxu0 0.0
      %3521 = vmatprep.subr.mxu0 0.0
      %3522 = vmatpush1.msra.mxu0 0.0
      %3523 = vmatprep.subr.mxu0 0.0
      %3524 = vmatpush1.msra.mxu0 0.0
      %3525 = vmatprep.mubr.f32.mxu0 0.0
      %3526 = vmatmul.mubr.f32.gmra.mrb[0].mxu0 %v404
      %v3527 = vpop.f32.mrb[0].mxu0
      %v3528 = vadd.f32 0.0, %v3527
      %v3529 = vpop.f32.mrb[0].mxu0
      %v3530 = vadd.f32 0.0, %v3529
      %3531 = vmatprep.mubr.f32.mxu0 0.0
      %3532 = vmatmul.mubr.f32.gmra.mrb[0].mxu0 %v407
      %v3533 = vpop.f32.mrb[0].mxu0
      %v3534 = vadd.f32 0.0, %v3533
      %v3535 = vpop.f32.mrb[0].mxu0
      %v3536 = vadd.f32 0.0, %v3535
      %3537 = vmatprep.mubr.f32.mxu0 0.0
      %3538 = vmatmul.mubr.f32.gmra.mrb[0].mxu0 %v410
      %v3539 = vpop.f32.mrb[0].mxu0
      %v3540 = vadd.f32 0.0, %v3539
      %v3541 = vpop.f32.mrb[0].mxu0
      %v3542 = vadd.f32 0.0, %v3541
      %3543 = vmatprep.mubr.f32.mxu0 0.0
      %3544 = vmatmul.mubr.f32.gmra.mrb[0].mxu0 %v413
      %v3545 = vpop.f32.mrb[0].mxu0
      %v3546 = vadd.f32 0.0, %v3545
      %v3547 = vpop.f32.mrb[0].mxu0
      %v3548 = vadd.f32 0.0, %v3547
      %3549 = vmatprep.mubr.f32.mxu0 0.0
      %3550 = vmatmul.mubr.f32.gmra.mrb[0].mxu0 %v416
      %v3551 = vpop.f32.mrb[0].mxu0
      %v3552 = vadd.f32 0.0, %v3551
      %v3553 = vpop.f32.mrb[0].mxu0
      %v3554 = vadd.f32 0.0, %v3553
      %3555 = vdwg.mxu0
      %3556 = vmatprep.subr.mxu0 0.0
      %3557 = vmatpush1.msra.mxu0 %v3439
      %3558 = vmatprep.subr.mxu0 0.0
      %3559 = vmatpush1.msra.mxu0 %v3442
      %3560 = vmatprep.subr.mxu0 0.0
      %3561 = vmatpush1.msra.mxu0 %v3445
      %3562 = vmatprep.subr.mxu0 0.0
      %3563 = vmatpush1.msra.mxu0 %v3448
      %3564 = vmatprep.subr.mxu0 0.0
      %3565 = vmatpush1.msra.mxu0 %v3459
      %3566 = vmatprep.subr.mxu0 0.0
      %3567 = vmatpush1.msra.mxu0 0.0
      %3568 = vmatprep.subr.mxu0 0.0
      %3569 = vmatpush1.msra.mxu0 0.0
      %3570 = vmatprep.subr.mxu0 0.0
      %3571 = vmatpush1.msra.mxu0 0.0
      %3572 = vmatprep.subr.mxu0 0.0
      %3573 = vmatpush1.msra.mxu0 0.0
      %3574 = vmatprep.subr.mxu0 0.0
      %3575 = vmatpush1.msra.mxu0 0.0
      %3576 = vmatprep.subr.mxu0 0.0
      %3577 = vmatpush1.msra.mxu0 0.0
      %3578 = vmatprep.subr.mxu0 0.0
      %3579 = vmatpush1.msra.mxu0 0.0
      %3580 = vmatprep.subr.mxu0 0.0
      %3581 = vmatpush1.msra.mxu0 0.0
      %3582 = vmatprep.subr.mxu0 0.0
      %3583 = vmatpush1.msra.mxu0 0.0
      %3584 = vmatprep.subr.mxu0 0.0
      %3585 = vmatpush1.msra.mxu0 0.0
      %3586 = vmatprep.subr.mxu0 0.0
      %3587 = vmatpush1.msra.mxu0 0.0
      %3588 = vmatprep.subr.mxu0 0.0
      %3589 = vmatpush1.msra.mxu0 0.0
      %3590 = vmatprep.subr.mxu0 0.0
      %3591 = vmatpush1.msra.mxu0 0.0
      %3592 = vmatprep.subr.mxu0 0.0
      %3593 = vmatpush1.msra.mxu0 0.0
      %3594 = vmatprep.subr.mxu0 0.0
      %3595 = vmatpush1.msra.mxu0 0.0
      %3596 = vmatprep.subr.mxu0 0.0
      %3597 = vmatpush1.msra.mxu0 0.0
      %3598 = vmatprep.subr.mxu0 0.0
      %3599 = vmatpush1.msra.mxu0 0.0
      %3600 = vmatprep.subr.mxu0 0.0
      %3601 = vmatpush1.msra.mxu0 0.0
      %3602 = vmatprep.subr.mxu0 0.0
      %3603 = vmatpush1.msra.mxu0 0.0
      %3604 = vmatprep.subr.mxu0 0.0
      %3605 = vmatpush1.msra.mxu0 0.0
      %3606 = vmatprep.subr.mxu0 0.0
      %3607 = vmatpush1.msra.mxu0 0.0
      %3608 = vmatprep.subr.mxu0 0.0
      %3609 = vmatpush1.msra.mxu0 0.0
      %3610 = vmatprep.subr.mxu0 0.0
      %3611 = vmatpush1.msra.mxu0 0.0
      %3612 = vmatprep.subr.mxu0 0.0
      %3613 = vmatpush1.msra.mxu0 0.0
      %3614 = vmatprep.subr.mxu0 0.0
      %3615 = vmatpush1.msra.mxu0 0.0
      %3616 = vmatprep.subr.mxu0 0.0
      %3617 = vmatpush1.msra.mxu0 0.0
      %3618 = vmatprep.subr.mxu0 0.0
      %3619 = vmatpush1.msra.mxu0 0.0
      %3620 = vmatprep.mubr.f32.mxu0 0.0
      %3621 = vmatmul.mubr.f32.gmra.mrb[0].mxu0 %v404
      %v3622 = vpop.f32.mrb[0].mxu0
      %v3623 = vadd.f32 0.0, %v3622
      %v3624 = vpop.f32.mrb[0].mxu0
      %3625 = vmatprep.mubr.f32.mxu0 0.0
      %3626 = vmatmul.mubr.f32.gmra.mrb[0].mxu0 %v407
      %v3627 = vpop.f32.mrb[0].mxu0
      %v3628 = vadd.f32 0.0, %v3627
      %v3629 = vpop.f32.mrb[0].mxu0
      %3630 = vmatprep.mubr.f32.mxu0 0.0
      %3631 = vmatmul.mubr.f32.gmra.mrb[0].mxu0 %v410
      %v3632 = vpop.f32.mrb[0].mxu0
      %v3633 = vadd.f32 0.0, %v3632
      %v3634 = vpop.f32.mrb[0].mxu0
      %3635 = vmatprep.mubr.f32.mxu0 0.0
      %3636 = vmatmul.mubr.f32.gmra.mrb[0].mxu0 %v413
      %v3637 = vpop.f32.mrb[0].mxu0
      %v3638 = vadd.f32 0.0, %v3637
      %v3639 = vpop.f32.mrb[0].mxu0
      %3640 = vmatprep.mubr.f32.mxu0 0.0
      %3641 = vmatmul.mubr.f32.gmra.mrb[0].mxu0 %v416
      %v3642 = vpop.f32.mrb[0].mxu0
      %v3643 = vadd.f32 0.0, %v3642
      %v3644 = vpop.f32.mrb[0].mxu0
      %3645 = vdwg.mxu0
      %v3646 = vmax.f32 %v3528, 0.0
      %v3647 = vmax.f32 %v3530, 0.0
      %v3648 = vmax.f32 %v3623, 0.0
      %v3649 = vmax.f32 %v3534, 0.0
      %v3650 = vmax.f32 %v3536, 0.0
      %v3651 = vmax.f32 %v3628, 0.0
      %v3652 = vmax.f32 %v3540, 0.0
      %v3653 = vmax.f32 %v3542, 0.0
      %v3654 = vmax.f32 %v3633, 0.0
      %v3655 = vmax.f32 %v3546, 0.0
      %v3656 = vmax.f32 %v3548, 0.0
      %v3657 = vmax.f32 %v3638, 0.0
      %v3658 = vmax.f32 %v3552, 0.0
      %v3659 = vmax.f32 %v3554, 0.0
      %v3660 = vmax.f32 %v3643, 0.0
      %v3662 = vsel %vm632, %v3658, 0
      %v3665 = vsel %vm632, %v3659, 0
      %v3668 = vsel %vm632, %v3660, 0
      %3670 = vmatprep.subr.mxu0 %v3647
      %3671 = vmatpush1.msra.mxu0 %v3646
      %3672 = vmatprep.subr.mxu0 %v3650
      %3673 = vmatpush1.msra.mxu0 %v3649
      %3674 = vmatprep.subr.mxu0 %v3653
      %3675 = vmatpush1.msra.mxu0 %v3652
      %3676 = vmatprep.subr.mxu0 %v3656
      %3677 = vmatpush1.msra.mxu0 %v3655
      %3678 = vmatprep.subr.mxu0 %v3665
      %3679 = vmatpush1.msra.mxu0 %v3662
      %3680 = vmatprep.subr.mxu0 0.0
      %3681 = vmatpush1.msra.mxu0 0.0
      %3682 = vmatprep.subr.mxu0 0.0
      %3683 = vmatpush1.msra.mxu0 0.0
      %3684 = vmatprep.subr.mxu0 0.0
      %3685 = vmatpush1.msra.mxu0 0.0
      %3686 = vmatprep.subr.mxu0 0.0
      %3687 = vmatpush1.msra.mxu0 0.0
      %3688 = vmatprep.subr.mxu0 0.0
      %3689 = vmatpush1.msra.mxu0 0.0
      %3690 = vmatprep.subr.mxu0 0.0
      %3691 = vmatpush1.msra.mxu0 0.0
      %3692 = vmatprep.subr.mxu0 0.0
      %3693 = vmatpush1.msra.mxu0 0.0
      %3694 = vmatprep.subr.mxu0 0.0
      %3695 = vmatpush1.msra.mxu0 0.0
      %3696 = vmatprep.subr.mxu0 0.0
      %3697 = vmatpush1.msra.mxu0 0.0
      %3698 = vmatprep.subr.mxu0 0.0
      %3699 = vmatpush1.msra.mxu0 0.0
      %3700 = vmatprep.subr.mxu0 0.0
      %3701 = vmatpush1.msra.mxu0 0.0
      %3702 = vmatprep.subr.mxu0 0.0
      %3703 = vmatpush1.msra.mxu0 0.0
      %3704 = vmatprep.subr.mxu0 0.0
      %3705 = vmatpush1.msra.mxu0 0.0
      %3706 = vmatprep.subr.mxu0 0.0
      %3707 = vmatpush1.msra.mxu0 0.0
      %3708 = vmatprep.subr.mxu0 0.0
      %3709 = vmatpush1.msra.mxu0 0.0
      %3710 = vmatprep.subr.mxu0 0.0
      %3711 = vmatpush1.msra.mxu0 0.0
      %3712 = vmatprep.subr.mxu0 0.0
      %3713 = vmatpush1.msra.mxu0 0.0
      %3714 = vmatprep.subr.mxu0 0.0
      %3715 = vmatpush1.msra.mxu0 0.0
      %3716 = vmatprep.subr.mxu0 0.0
      %3717 = vmatpush1.msra.mxu0 0.0
      %3718 = vmatprep.subr.mxu0 0.0
      %3719 = vmatpush1.msra.mxu0 0.0
      %3720 = vmatprep.subr.mxu0 0.0
      %3721 = vmatpush1.msra.mxu0 0.0
      %3722 = vmatprep.subr.mxu0 0.0
      %3723 = vmatpush1.msra.mxu0 0.0
      %3724 = vmatprep.subr.mxu0 0.0
      %3725 = vmatpush1.msra.mxu0 0.0
      %3726 = vmatprep.subr.mxu0 0.0
      %3727 = vmatpush1.msra.mxu0 0.0
      %3728 = vmatprep.subr.mxu0 0.0
      %3729 = vmatpush1.msra.mxu0 0.0
      %3730 = vmatprep.subr.mxu0 0.0
      %3731 = vmatpush1.msra.mxu0 0.0
      %3732 = vmatprep.subr.mxu0 0.0
      %3733 = vmatpush1.msra.mxu0 0.0
      %3734 = vmatprep.mubr.f32.mxu0 0.0
      %3735 = vmatmul.mubr.f32.gmra.mrb[0].mxu0 %v630
      %v3736 = vpop.f32.mrb[0].mxu0
      %v3737 = vadd.f32 0.0, %v3736
      %v3738 = vpop.f32.mrb[0].mxu0
      %v3739 = vadd.f32 0.0, %v3738
      %3740 = vdwg.mxu0
      %3741 = vmatprep.subr.mxu0 0.0
      %3742 = vmatpush1.msra.mxu0 %v3648
      %3743 = vmatprep.subr.mxu0 0.0
      %3744 = vmatpush1.msra.mxu0 %v3651
      %3745 = vmatprep.subr.mxu0 0.0
      %3746 = vmatpush1.msra.mxu0 %v3654
      %3747 = vmatprep.subr.mxu0 0.0
      %3748 = vmatpush1.msra.mxu0 %v3657
      %3749 = vmatprep.subr.mxu0 0.0
      %3750 = vmatpush1.msra.mxu0 %v3668
      %3751 = vmatprep.subr.mxu0 0.0
      %3752 = vmatpush1.msra.mxu0 0.0
      %3753 = vmatprep.subr.mxu0 0.0
      %3754 = vmatpush1.msra.mxu0 0.0
      %3755 = vmatprep.subr.mxu0 0.0
      %3756 = vmatpush1.msra.mxu0 0.0
      %3757 = vmatprep.subr.mxu0 0.0
      %3758 = vmatpush1.msra.mxu0 0.0
      %3759 = vmatprep.subr.mxu0 0.0
      %3760 = vmatpush1.msra.mxu0 0.0
      %3761 = vmatprep.subr.mxu0 0.0
      %3762 = vmatpush1.msra.mxu0 0.0
      %3763 = vmatprep.subr.mxu0 0.0
      %3764 = vmatpush1.msra.mxu0 0.0
      %3765 = vmatprep.subr.mxu0 0.0
      %3766 = vmatpush1.msra.mxu0 0.0
      %3767 = vmatprep.subr.mxu0 0.0
      %3768 = vmatpush1.msra.mxu0 0.0
      %3769 = vmatprep.subr.mxu0 0.0
      %3770 = vmatpush1.msra.mxu0 0.0
      %3771 = vmatprep.subr.mxu0 0.0
      %3772 = vmatpush1.msra.mxu0 0.0
      %3773 = vmatprep.subr.mxu0 0.0
      %3774 = vmatpush1.msra.mxu0 0.0
      %3775 = vmatprep.subr.mxu0 0.0
      %3776 = vmatpush1.msra.mxu0 0.0
      %3777 = vmatprep.subr.mxu0 0.0
      %3778 = vmatpush1.msra.mxu0 0.0
      %3779 = vmatprep.subr.mxu0 0.0
      %3780 = vmatpush1.msra.mxu0 0.0
      %3781 = vmatprep.subr.mxu0 0.0
      %3782 = vmatpush1.msra.mxu0 0.0
      %3783 = vmatprep.subr.mxu0 0.0
      %3784 = vmatpush1.msra.mxu0 0.0
      %3785 = vmatprep.subr.mxu0 0.0
      %3786 = vmatpush1.msra.mxu0 0.0
      %3787 = vmatprep.subr.mxu0 0.0
      %3788 = vmatpush1.msra.mxu0 0.0
      %3789 = vmatprep.subr.mxu0 0.0
      %3790 = vmatpush1.msra.mxu0 0.0
      %3791 = vmatprep.subr.mxu0 0.0
      %3792 = vmatpush1.msra.mxu0 0.0
      %3793 = vmatprep.subr.mxu0 0.0
      %3794 = vmatpush1.msra.mxu0 0.0
      %3795 = vmatprep.subr.mxu0 0.0
      %3796 = vmatpush1.msra.mxu0 0.0
      %3797 = vmatprep.subr.mxu0 0.0
      %3798 = vmatpush1.msra.mxu0 0.0
      %3799 = vmatprep.subr.mxu0 0.0
      %3800 = vmatpush1.msra.mxu0 0.0
      %3801 = vmatprep.subr.mxu0 0.0
      %3802 = vmatpush1.msra.mxu0 0.0
      %3803 = vmatprep.subr.mxu0 0.0
      %3804 = vmatpush1.msra.mxu0 0.0
      %3805 = vmatprep.mubr.f32.mxu0 0.0
      %3806 = vmatmul.mubr.f32.gmra.mrb[0].mxu0 %v630
      %v3807 = vpop.f32.mrb[0].mxu0
      %v3808 = vadd.f32 0.0, %v3807
      %v3809 = vpop.f32.mrb[0].mxu0
      %3810 = vdwg.mxu0
      %vm3811 = vcmp.ge.f32.partialorder %v246, 6.0
      %vm3812 = vcmp.ge.f32.partialorder %v247, 6.0
      %v3815 = vcombine.low %v3737, %v3739
      %v3817 = vsel %vm3811, %v3815, 0.0
      %v3818 = vsel %vm3812, %v3808, 0.0
      %v3819 = vadd.f32 %v3314, %v3817
      %v3820 = vadd.f32 %v3315, %v3818
      %3821 = vst [vmem:[%s217] sm:$0xff] %v3819
      %3822 = vst [vmem:[%s217 + $0x8] sm:$0xf] %v3820
      %p3823 = scmp.lt.s32.totalorder %s15, 1
      %s3824 = scalar_select %p3823, %s15, 1
      %s3825 = smul.addr %s3824, 3
      %s3826 = smul.addr %s3825, 4
      %s3827 = scalar_lea.vmem %s4, %s3826
      // Predicated region
      $region37: #{cellular_automata_forward.1} parent=35 // pred_check
        %p3828 = pneg %p127
      $region38: #{cellular_automata_forward.1} parent=35 // pred_check_branch
        %3830 = sbr.rel (%p3828) target = $region40
      $region39: #{cellular_automata_forward.1} parent=35 // pred_region
        _
      $region40: #{cellular_automata_forward.1} parent=35 // pred_fallthru
        _
    $region36: #{cellular_automata_forward.1} parent=5 // pred_fallthru
      _
    %p3831 = scmp.le.s32.totalorder 2, %s10
    // Predicated region
    $region41: #{cellular_automata_forward.1} parent=5 // pred_check
      %p3832 = pneg %p3831
    $region42: #{cellular_automata_forward.1} parent=5 // pred_check_branch
      %3834 = sbr.rel (%p3832) target = $region44
    $region43: #{cellular_automata_forward.1} parent=5 // pred_region
      %s3835 = ssub.s32 %s10, 2
      // Predicated region
      $region45: #{cellular_automata_forward.1} parent=43 // pred_check
        %p3836 = pneg %p133
      $region46: #{cellular_automata_forward.1} parent=43 // pred_check_branch
        %3838 = sbr.rel (%p3836) target = $region48
      $region47: #{cellular_automata_forward.1} parent=43 // pred_region
        %p3839 = scmp.lt.s32.totalorder %s16, 1
        %s3840 = scalar_select %p3839, %s16, 1
        %s3841 = smul.addr %s3840, 3
        %s3842 = smul.addr %s3841, 4
        %s3843 = scalar_lea.vmem %s4, %s3842
      $region48: #{cellular_automata_forward.1} parent=43 // pred_fallthru
        _
    $region44: #{cellular_automata_forward.1} parent=5 // pred_fallthru
      _
  $region6: #{cellular_automata_forward.1} parent=0 // loop_footer
    %s14 = sadd.s32 1, %s10
  $region7: #{cellular_automata_forward.1} parent=0 // loop_footer_branch
    %9 = sbr.rel target = $region3
  $region8: #{cellular_automata_forward.1} parent=0 // loop_exit
    _

</llo_original>
